<compile_context>
chip_gen: v6e
topology: v6e:2x2x1
jax: 0.10.0
libtpu: 0.0.40
codegen_flags: <defaults>
</compile_context>

<pallas_src>
import numpy as np
import jax
import jax.numpy as jnp
from jax.experimental import pallas as pl
from jax.experimental.pallas import tpu as pltpu

_LANE = 128


def _round_up(x, m):
    return (x + m - 1) // m * m


# ----------------------------------------------------------------------------
# Kernel
# ----------------------------------------------------------------------------
def siren_kernel(x_ref, w_ref, b_ref, o_ref):
    # x_ref: (tm, K)  w_ref: (K, Np)  b_ref: (1, Np)  o_ref: (tm, Np)
    # omega_0 is already folded into w/b, so this is just sin(x @ W' + b').
    z = jnp.dot(x_ref[...], w_ref[...], preferred_element_type=jnp.float32)
    z = z + b_ref[...]                       # broadcast (1, Np) over rows, f32
    o_ref[...] = jnp.sin(z).astype(o_ref.dtype)


# ----------------------------------------------------------------------------
# Parameter preparation (one-time, outside the per-call path)
# ----------------------------------------------------------------------------
def prepare_siren_params(weight, bias, omega_0=30.0, *, operand_dtype=jnp.float32):
    """Transform PyTorch-layout params into the kernel layout (do this ONCE).

    - folds omega_0 into W and b (exact rewrite of the forward),
    - transposes W to (in_features, out_features) so the kernel runs a plain
      row-major MXU matmul,
    - zero-pads out_features to a multiple of 128 for lane-dense stores.
    Returns (w_t, b_row, out_features).
    """
    out_features, in_features = weight.shape
    n_pad = _round_up(out_features, _LANE)
    w_t = (omega_0 * weight).T.astype(operand_dtype)            # (K, Nout)
    b_row = (omega_0 * bias).astype(jnp.float32).reshape(1, out_features)
    if n_pad != out_features:
        w_t = jnp.pad(w_t, ((0, 0), (0, n_pad - out_features)))
        b_row = jnp.pad(b_row, ((0, 0), (0, n_pad - out_features)))
    return w_t, b_row, out_features


# ----------------------------------------------------------------------------
# Tile sizing against per-generation VMEM
# ----------------------------------------------------------------------------
def _vmem_capacity_bytes():
    try:
        return int(pltpu.get_tpu_info().vmem_capacity_bytes)
    except Exception:
        return 64 * 1024 * 1024  # conservative fallback (v7x per-TensorCore)


def _tile_vmem_bytes(tm, k, n_pad, x_itemsize, w_itemsize):
    # Pallas double-buffers each operand block (weights/bias are grid-invariant
    # but still get 2 buffers); bias block sublane-pads to 8 rows.
    weights = 2 * (k * n_pad * w_itemsize + 8 * n_pad * 4)
    stream = 2 * tm * (k * x_itemsize + n_pad * 4)  # x tile + f32-ish out tile
    return weights + stream


def _pick_row_tile(n_rows, k, n_pad, x_itemsize, w_itemsize):
    cap = _vmem_capacity_bytes()
    budget = cap // 2  # headroom for compiler scratch / spills
    weights = 2 * (k * n_pad * w_itemsize + 8 * n_pad * 4)
    per_row = 2 * (k * x_itemsize + n_pad * 4)
    tm = (budget - weights) // max(per_row, 1)
    tm = int(max(128, min(tm, 2048)))                    # sweep range 128..2048
    tm = min(tm, _round_up(max(n_rows, 8), _LANE))       # no bigger than needed
    tm = max(8, (tm // 8) * 8)                           # sublane granularity
    return tm, cap


# ----------------------------------------------------------------------------
# Forward wrapper
# ----------------------------------------------------------------------------
def siren_forward(x, w_t, b_row, out_features, *, tm=None, operand_dtype=None):
    """y = sin(x @ w_t + b_row)[:, :out_features]; omega_0 already folded in.

    x: [N, in_features] (any N), w_t/b_row from prepare_siren_params.
    """
    n_rows, k = x.shape
    k2, n_pad = w_t.shape
    assert k == k2, "in_features mismatch between x and prepared weights"

    out_dtype = x.dtype
    if operand_dtype is not None and x.dtype != operand_dtype:
        x = x.astype(operand_dtype)  # e.g. bf16 operands on v6e / v7x

    x_isz = jnp.dtype(x.dtype).itemsize
    w_isz = jnp.dtype(w_t.dtype).itemsize
    auto_tm, cap = _pick_row_tile(n_rows, k, n_pad, x_isz, w_isz)
    if tm is None:
        tm = auto_tm
    vmem_limit = int(min(cap, max(32 << 20,
                                  _tile_vmem_bytes(tm, k, n_pad, x_isz, w_isz)
                                  + (4 << 20))))

    grid = (pl.cdiv(n_rows, tm),)

    y_padded = pl.pallas_call(
        siren_kernel,
        out_shape=jax.ShapeDtypeStruct((n_rows, n_pad), out_dtype),
        grid_spec=pltpu.PrefetchScalarGridSpec(
            num_scalar_prefetch=0,
            grid=grid,
            in_specs=[
                pl.BlockSpec((tm, k), lambda i: (i, 0)),      # streaming x tile
                pl.BlockSpec((k, n_pad), lambda i: (0, 0)),   # resident W'
                pl.BlockSpec((1, n_pad), lambda i: (0, 0)),   # resident bias'
            ],
            out_specs=pl.BlockSpec((tm, n_pad), lambda i: (i, 0)),
        ),
        compiler_params=pltpu.CompilerParams(
            dimension_semantics=("parallel",),
            vmem_limit_bytes=vmem_limit,
        ),
    )(x, w_t, b_row)

    if n_pad != out_features:
        y_padded = y_padded[:, :out_features]
    return y_padded


# ----------------------------------------------------------------------------
# Init matching the PyTorch module
# ----------------------------------------------------------------------------
def init_siren_params(key, in_features, out_features, is_first=False, omega_0=30.0):
    """Deterministic SIREN init matching the PyTorch module's init_weights."""
    kw, kb = jax.random.split(key)
    if is_first:
        bound = 1.0 / in_features
    else:
        bound = float(np.sqrt(6.0 / in_features)) / omega_0
    weight = jax.random.uniform(
        kw, (out_features, in_features), minval=-bound, maxval=bound,
        dtype=jnp.float32)
    # nn.Linear default bias init: U(-1/sqrt(in_features), 1/sqrt(in_features))
    b_bound = 1.0 / float(np.sqrt(in_features))
    bias = jax.random.uniform(
        kb, (out_features,), minval=-b_bound, maxval=b_bound, dtype=jnp.float32)
    return weight, bias


if __name__ == "__main__":
    key = jax.random.PRNGKey(0)
    k_x, k_p = jax.random.split(key)

    # Small, deliberately awkward shapes: N not a multiple of the row tile and
    # out_features not a multiple of 128 (exercises cdiv grid + lane padding).
    N, in_features, out_features = 300, 64, 48
    omega_0 = 30.0
    is_first = False

    x = jax.random.normal(k_x, (N, in_features), dtype=jnp.float32)
    weight, bias = init_siren_params(k_p, in_features, out_features,
                                     is_first=is_first, omega_0=omega_0)

    # One-time parameter transform (omega fold + transpose + lane padding).
    w_t, b_row, nout = prepare_siren_params(weight, bias, omega_0)

    y = siren_forward(x, w_t, b_row, nout)
    y = jax.block_until_ready(y)

    # Pure-JAX reference (the PyTorch formula).
    y_ref = jnp.sin(omega_0 * (x @ weight.T + bias))
    assert y.shape == y_ref.shape
    np.testing.assert_allclose(np.asarray(y), np.asarray(y_ref),
                               rtol=5e-5, atol=5e-5)

    print("KERNEL_OK")
</pallas_src>

<mosaic_0001>
module attributes {stable_mosaic.version = 11 : i64} {
  func.func @siren_kernel(%arg0: i32, %arg1: memref<384x64xf32, #tpu.memory_space<vmem>>, %arg2: memref<64x128xf32, #tpu.memory_space<vmem>>, %arg3: memref<1x128xf32, #tpu.memory_space<vmem>>, %arg4: memref<384x128xf32, #tpu.memory_space<vmem>>) attributes {dimension_semantics = [#tpu.dimension_semantics<parallel>], iteration_bounds = array<i64: 1>, scalar_prefetch = 0 : i64, scratch_operands = 0 : i64, tpu.core_type = #tpu.core_type<tc>, window_params = [{transform_indices = @transform_0, window_bounds = array<i64: 384, 64>}, {pipeline_mode = #tpu.pipeline_mode<synchronous>, transform_indices = @transform_1, window_bounds = array<i64: 64, 128>}, {pipeline_mode = #tpu.pipeline_mode<synchronous>, transform_indices = @transform_2, window_bounds = array<i64: 1, 128>}, {transform_indices = @transform_3, window_bounds = array<i64: 384, 128>}]} {
    %c0 = arith.constant 0 : index
    %c0_0 = arith.constant 0 : index
    %0 = vector.load %arg1[%c0, %c0_0] : memref<384x64xf32, #tpu.memory_space<vmem>>, vector<384x64xf32>
    %c0_1 = arith.constant 0 : index
    %c0_2 = arith.constant 0 : index
    %1 = vector.load %arg2[%c0_1, %c0_2] : memref<64x128xf32, #tpu.memory_space<vmem>>, vector<64x128xf32>
    %cst = arith.constant dense<0.000000e+00> : vector<384x128xf32>
    %2 = tpu.matmul %0, %1, %cst {dimension_numbers = #tpu.dot_dimension_numbers<[1], [0], [0], [1], [0, 0, 1, 1], [], []>} : vector<384x64xf32>, vector<64x128xf32>, vector<384x128xf32> -> vector<384x128xf32>
    %c0_3 = arith.constant 0 : index
    %c0_4 = arith.constant 0 : index
    %3 = vector.load %arg3[%c0_3, %c0_4] : memref<1x128xf32, #tpu.memory_space<vmem>>, vector<1x128xf32>
    %4 = vector.broadcast %3 : vector<1x128xf32> to vector<384x128xf32>
    %5 = arith.addf %2, %4 : vector<384x128xf32>
    %6 = math.sin %5 : vector<384x128xf32>
    %c0_5 = arith.constant 0 : index
    %c0_6 = arith.constant 0 : index
    %7 = vector.load %arg4[%c0_5, %c0_6] : memref<384x128xf32, #tpu.memory_space<vmem>>, vector<384x128xf32>
    tpu.vector_store %arg4[%c0_5, %c0_6], %6 {strides = array<i32>} : memref<384x128xf32, #tpu.memory_space<vmem>>, vector<384x128xf32>,
    return
  }
  func.func @transform_0(%arg0: i32) -> (i32, i32) {
    %c0_i32 = arith.constant 0 : i32
    %c0_i32_0 = arith.constant 0 : i32
    return %arg0, %c0_i32 : i32, i32
  }
  func.func @transform_1(%arg0: i32) -> (i32, i32) {
    %c0_i32 = arith.constant 0 : i32
    %c0_i32_0 = arith.constant 0 : i32
    %c0_i32_1 = arith.constant 0 : i32
    return %c0_i32, %c0_i32_0 : i32, i32
  }
  func.func @transform_2(%arg0: i32) -> (i32, i32) {
    %c0_i32 = arith.constant 0 : i32
    %c0_i32_0 = arith.constant 0 : i32
    %c0_i32_1 = arith.constant 0 : i32
    return %c0_i32, %c0_i32_0 : i32, i32
  }
  func.func @transform_3(%arg0: i32) -> (i32, i32) {
    %c0_i32 = arith.constant 0 : i32
    %c0_i32_0 = arith.constant 0 : i32
    return %arg0, %c0_i32 : i32, i32
  }
}

</mosaic_0001>

<llo_original>
// kernel: tpu_custom_call.1
$region0: #{tpu_custom_call.1}
  #allocation0 [shape = 'u32[]', space=smem, size = 0x4, offset = 0x4, fixed_abs, tag = 'smem constant byte address 0x4 - core index']
  #allocation1 [shape = 'u32[144,128]{1,0:T(1,128)}', space=vmem, size = 0x12000, scoped, tag = 'internal scratch']
  %s0 = inlined_call_operand.vmem [shape: f32[300,64], index: 0, kind: input, shape index: {}]
  %s1 = inlined_call_operand.vmem [shape: f32[64,128], index: 1, kind: input, shape index: {}]
  %s2 = inlined_call_operand.vmem [shape: f32[1,128], index: 2, kind: input, shape index: {}]
  %s3 = inlined_call_operand.hbm [shape: f32[300,128], index: 3, kind: output, shape index: {}]
  %s4 = sld [smem:[#allocation0]]
  $region22: #{tpu_custom_call.1} parent=0
    _
  %s6 = ssub.s32 1, %s4
  %s7 = scalar_select 0, %s6, %s4
  $region1: #{tpu_custom_call.1} parent=0
    #allocation2 [shape = 'u8[196608]{0}', space=vmem, size = 0x30000, scoped, tag = 'output window, operand 0, single buffered']
    #allocation3 [shape = 's32[1]{0}', space=sflag, size = 0x4, scoped, tag = 'scoped memory for tpu_custom_call.1']
    %8 = vsyncpa [#allocation3], 0
    // Predicated region
    $region2: #{tpu_custom_call.1} parent=1 // pred_check
      _
    $region3: #{tpu_custom_call.1} parent=1 // pred_check_branch
      %10 = sbr.rel (0) target = $region5
    $region4: #{tpu_custom_call.1} parent=1 // pred_region
      _
    $region5: #{tpu_custom_call.1} parent=1 // pred_fallthru
      _
    // Predicated region
    $region6: #{tpu_custom_call.1} parent=1 // pred_check
      _
    $region7: #{tpu_custom_call.1} parent=1 // pred_check_branch
      %12 = sbr.rel (0) target = $region9
    $region8: #{tpu_custom_call.1} parent=1 // pred_region
      _
    $region9: #{tpu_custom_call.1} parent=1 // pred_fallthru
      _
    // Predicated region
    $region10: #{tpu_custom_call.1} parent=1 // pred_check
      _
    $region11: #{tpu_custom_call.1} parent=1 // pred_check_branch
      %14 = sbr.rel (0) target = $region13
    $region12: #{tpu_custom_call.1} parent=1 // pred_region
      _
    $region13: #{tpu_custom_call.1} parent=1 // pred_fallthru
      _
    %v15 = vld [vmem:[%s0] sm:$0xff]
    %v16 = vld [vmem:[%s0 + $0x8] sm:$0xff]
    %v17 = vld [vmem:[%s0 + $0x10] sm:$0xff]
    %v18 = vld [vmem:[%s0 + $0x18] sm:$0xff]
    %v19 = vld [vmem:[%s0 + $0x20] sm:$0xff]
    %v20 = vld [vmem:[%s0 + $0x28] sm:$0xff]
    %v21 = vld [vmem:[%s0 + $0x30] sm:$0xff]
    %v22 = vld [vmem:[%s0 + $0x38] sm:$0xff]
    %v23 = vld [vmem:[%s0 + $0x40] sm:$0xff]
    %v24 = vld [vmem:[%s0 + $0x48] sm:$0xff]
    %v25 = vld [vmem:[%s0 + $0x50] sm:$0xff]
    %v26 = vld [vmem:[%s0 + $0x58] sm:$0xff]
    %v27 = vld [vmem:[%s0 + $0x60] sm:$0xff]
    %v28 = vld [vmem:[%s0 + $0x68] sm:$0xff]
    %v29 = vld [vmem:[%s0 + $0x70] sm:$0xff]
    %v30 = vld [vmem:[%s0 + $0x78] sm:$0xff]
    %v31 = vld [vmem:[%s0 + $0x80] sm:$0xff]
    %v32 = vld [vmem:[%s0 + $0x88] sm:$0xff]
    %v33 = vld [vmem:[%s0 + $0x90] sm:$0xff]
    %v34 = vld [vmem:[%s0 + $0x98] sm:$0xff]
    %v35 = vld [vmem:[%s0 + $0xa0] sm:$0xff]
    %v36 = vld [vmem:[%s0 + $0xa8] sm:$0xff]
    %v37 = vld [vmem:[%s0 + $0xb0] sm:$0xff]
    %v38 = vld [vmem:[%s0 + $0xb8] sm:$0xff]
    %v39 = vld [vmem:[%s0 + $0xc0] sm:$0xff]
    %v40 = vld [vmem:[%s0 + $0xc8] sm:$0xff]
    %v41 = vld [vmem:[%s0 + $0xd0] sm:$0xff]
    %v42 = vld [vmem:[%s0 + $0xd8] sm:$0xff]
    %v43 = vld [vmem:[%s0 + $0xe0] sm:$0xff]
    %v44 = vld [vmem:[%s0 + $0xe8] sm:$0xff]
    %v45 = vld [vmem:[%s0 + $0xf0] sm:$0xff]
    %v46 = vld [vmem:[%s0 + $0xf8] sm:$0xff]
    %v47 = vld [vmem:[%s0 + $0x100] sm:$0xff]
    %v48 = vld [vmem:[%s0 + $0x108] sm:$0xff]
    %v49 = vld [vmem:[%s0 + $0x110] sm:$0xff]
    %v50 = vld [vmem:[%s0 + $0x118] sm:$0xff]
    %v51 = vld [vmem:[%s0 + $0x120] sm:$0xff]
    %v52 = vld [vmem:[%s0 + $0x128] sm:$0xff]
    %v53 = vld [vmem:[%s0 + $0x130] sm:$0xff]
    %v54 = vld [vmem:[%s0 + $0x138] sm:$0xff]
    %v55 = vld [vmem:[%s0 + $0x140] sm:$0xff]
    %v56 = vld [vmem:[%s0 + $0x148] sm:$0xff]
    %v57 = vld [vmem:[%s0 + $0x150] sm:$0xff]
    %v58 = vld [vmem:[%s0 + $0x158] sm:$0xff]
    %v59 = vld [vmem:[%s0 + $0x160] sm:$0xff]
    %v60 = vld [vmem:[%s0 + $0x168] sm:$0xff]
    %v61 = vld [vmem:[%s0 + $0x170] sm:$0xff]
    %v62 = vld [vmem:[%s0 + $0x178] sm:$0xff]
    %v63 = vld [vmem:[%s1] sm:$0xff]
    %v64 = vld [vmem:[%s1 + $0x8] sm:$0xff]
    %v65 = vld [vmem:[%s1 + $0x10] sm:$0xff]
    %v66 = vld [vmem:[%s1 + $0x18] sm:$0xff]
    %v67 = vld [vmem:[%s1 + $0x20] sm:$0xff]
    %v68 = vld [vmem:[%s1 + $0x28] sm:$0xff]
    %v69 = vld [vmem:[%s1 + $0x30] sm:$0xff]
    %v70 = vld [vmem:[%s1 + $0x38] sm:$0xff]
    %v71 = vld [vmem:[%s2] sm:$0x1]
    %v73 = vlaneseq
    %v74 = vshrl.u32 %v73, 7
    %v75 = vsub.s32 0, %v74
    %v76 = vrot.slane %v71, %v75
    %vm78 = vcmask 523264
    %v80 = vsel %vm78, %v15, 0
    %v83 = vsel %vm78, %v16, 0
    %v86 = vsel %vm78, %v17, 0
    %v89 = vsel %vm78, %v18, 0
    %v92 = vsel %vm78, %v19, 0
    %v95 = vsel %vm78, %v20, 0
    %v98 = vsel %vm78, %v21, 0
    %v101 = vsel %vm78, %v22, 0
    %v104 = vsel %vm78, %v23, 0
    %v107 = vsel %vm78, %v24, 0
    %v110 = vsel %vm78, %v25, 0
    %v113 = vsel %vm78, %v26, 0
    %v116 = vsel %vm78, %v27, 0
    %v119 = vsel %vm78, %v28, 0
    %v122 = vsel %vm78, %v29, 0
    %v125 = vsel %vm78, %v30, 0
    %v128 = vsel %vm78, %v31, 0
    %v131 = vsel %vm78, %v32, 0
    %v134 = vsel %vm78, %v33, 0
    %v137 = vsel %vm78, %v34, 0
    %v140 = vsel %vm78, %v35, 0
    %v143 = vsel %vm78, %v36, 0
    %v146 = vsel %vm78, %v37, 0
    %v149 = vsel %vm78, %v38, 0
    %v152 = vsel %vm78, %v39, 0
    %v155 = vsel %vm78, %v40, 0
    %v158 = vsel %vm78, %v41, 0
    %v161 = vsel %vm78, %v42, 0
    %v164 = vsel %vm78, %v43, 0
    %v167 = vsel %vm78, %v44, 0
    %v170 = vsel %vm78, %v45, 0
    %v173 = vsel %vm78, %v46, 0
    %v176 = vsel %vm78, %v47, 0
    %v179 = vsel %vm78, %v48, 0
    %v182 = vsel %vm78, %v49, 0
    %v185 = vsel %vm78, %v50, 0
    %v188 = vsel %vm78, %v51, 0
    %v191 = vsel %vm78, %v52, 0
    %v194 = vsel %vm78, %v53, 0
    %v197 = vsel %vm78, %v54, 0
    %v200 = vsel %vm78, %v55, 0
    %v203 = vsel %vm78, %v56, 0
    %v206 = vsel %vm78, %v57, 0
    %v209 = vsel %vm78, %v58, 0
    %v212 = vsel %vm78, %v59, 0
    %v215 = vsel %vm78, %v60, 0
    %v218 = vsel %vm78, %v61, 0
    %v221 = vsel %vm78, %v62, 0
    %223 = vmatprep.subr.mxu0 0.0
    %224 = vmatpush1.msra.mxu0 0.0
    %225 = vmatprep.subr.mxu0 0.0
    %226 = vmatpush1.msra.mxu0 0.0
    %227 = vmatprep.subr.mxu0 0.0
    %228 = vmatpush1.msra.mxu0 0.0
    %229 = vmatprep.subr.mxu0 0.0
    %230 = vmatpush1.msra.mxu0 0.0
    %231 = vmatprep.subr.mxu0 0.0
    %232 = vmatpush1.msra.mxu0 0.0
    %233 = vmatprep.subr.mxu0 0.0
    %234 = vmatpush1.msra.mxu0 0.0
    %235 = vmatprep.subr.mxu0 0.0
    %236 = vmatpush1.msra.mxu0 0.0
    %237 = vmatprep.subr.mxu0 0.0
    %238 = vmatpush1.msra.mxu0 0.0
    %239 = vmatprep.subr.mxu0 0.0
    %240 = vmatpush1.msra.mxu0 %v70
    %241 = vmatprep.subr.mxu0 0.0
    %242 = vmatpush1.msra.mxu0 %v69
    %243 = vmatprep.subr.mxu0 0.0
    %244 = vmatpush1.msra.mxu0 %v68
    %245 = vmatprep.subr.mxu0 0.0
    %246 = vmatpush1.msra.mxu0 %v67
    %247 = vmatprep.subr.mxu0 0.0
    %248 = vmatpush1.msra.mxu0 %v66
    %249 = vmatprep.subr.mxu0 0.0
    %250 = vmatpush1.msra.mxu0 %v65
    %251 = vmatprep.subr.mxu0 0.0
    %252 = vmatpush1.msra.mxu0 %v64
    %253 = vmatprep.subr.mxu0 0.0
    %254 = vmatpush1.msra.mxu0 %v63
    %255 = vmatprep.subr.mxu0 0.0
    %256 = vmatpush2.msra.mxu0 0.0
    %257 = vmatprep.subr.mxu0 0.0
    %258 = vmatpush2.msra.mxu0 0.0
    %259 = vmatprep.subr.mxu0 0.0
    %260 = vmatpush2.msra.mxu0 0.0
    %261 = vmatprep.subr.mxu0 0.0
    %262 = vmatpush2.msra.mxu0 0.0
    %263 = vmatprep.subr.mxu0 0.0
    %264 = vmatpush2.msra.mxu0 0.0
    %265 = vmatprep.subr.mxu0 0.0
    %266 = vmatpush2.msra.mxu0 0.0
    %267 = vmatprep.subr.mxu0 0.0
    %268 = vmatpush2.msra.mxu0 0.0
    %269 = vmatprep.subr.mxu0 0.0
    %270 = vmatpush2.msra.mxu0 0.0
    %271 = vmatprep.subr.mxu0 0.0
    %272 = vmatpush2.msra.mxu0 0.0
    %273 = vmatprep.subr.mxu0 0.0
    %274 = vmatpush2.msra.mxu0 0.0
    %275 = vmatprep.subr.mxu0 0.0
    %276 = vmatpush2.msra.mxu0 0.0
    %277 = vmatprep.subr.mxu0 0.0
    %278 = vmatpush2.msra.mxu0 0.0
    %279 = vmatprep.subr.mxu0 0.0
    %280 = vmatpush2.msra.mxu0 0.0
    %281 = vmatprep.subr.mxu0 0.0
    %282 = vmatpush2.msra.mxu0 0.0
    %283 = vmatprep.subr.mxu0 0.0
    %284 = vmatpush2.msra.mxu0 0.0
    %285 = vmatprep.subr.mxu0 0.0
    %286 = vmatpush2.msra.mxu0 0.0
    %287 = vmatprep.mubr.f32.mxu0 0.0
    %288 = vmatmul.mubr.f32.gmra.mxu0 %v80
    %v289 = vpop.f32.mrf.mxu0
    %v290 = vadd.f32 %v76, %v289
    %v291 = vpop.f32.mrf.mxu0
    %292 = vmatprep.mubr.f32.mxu0 0.0
    %293 = vmatmul.mubr.f32.gmra.mxu0 %v83
    %v294 = vpop.f32.mrf.mxu0
    %v295 = vadd.f32 %v76, %v294
    %v296 = vpop.f32.mrf.mxu0
    %297 = vmatprep.mubr.f32.mxu0 0.0
    %298 = vmatmul.mubr.f32.gmra.mxu0 %v86
    %v299 = vpop.f32.mrf.mxu0
    %v300 = vadd.f32 %v76, %v299
    %v301 = vpop.f32.mrf.mxu0
    %302 = vmatprep.mubr.f32.mxu0 0.0
    %303 = vmatmul.mubr.f32.gmra.mxu0 %v89
    %v304 = vpop.f32.mrf.mxu0
    %v305 = vadd.f32 %v76, %v304
    %v306 = vpop.f32.mrf.mxu0
    %307 = vmatprep.mubr.f32.mxu0 0.0
    %308 = vmatmul.mubr.f32.gmra.mxu0 %v92
    %v309 = vpop.f32.mrf.mxu0
    %v310 = vadd.f32 %v76, %v309
    %v311 = vpop.f32.mrf.mxu0
    %312 = vmatprep.mubr.f32.mxu0 0.0
    %313 = vmatmul.mubr.f32.gmra.mxu0 %v95
    %v314 = vpop.f32.mrf.mxu0
    %v315 = vadd.f32 %v76, %v314
    %v316 = vpop.f32.mrf.mxu0
    %317 = vmatprep.mubr.f32.mxu0 0.0
    %318 = vmatmul.mubr.f32.gmra.mxu0 %v98
    %v319 = vpop.f32.mrf.mxu0
    %v320 = vadd.f32 %v76, %v319
    %v321 = vpop.f32.mrf.mxu0
    %322 = vmatprep.mubr.f32.mxu0 0.0
    %323 = vmatmul.mubr.f32.gmra.mxu0 %v101
    %v324 = vpop.f32.mrf.mxu0
    %v325 = vadd.f32 %v76, %v324
    %v326 = vpop.f32.mrf.mxu0
    %327 = vmatprep.mubr.f32.mxu0 0.0
    %328 = vmatmul.mubr.f32.gmra.mxu0 %v104
    %v329 = vpop.f32.mrf.mxu0
    %v330 = vadd.f32 %v76, %v329
    %v331 = vpop.f32.mrf.mxu0
    %332 = vmatprep.mubr.f32.mxu0 0.0
    %333 = vmatmul.mubr.f32.gmra.mxu0 %v107
    %v334 = vpop.f32.mrf.mxu0
    %v335 = vadd.f32 %v76, %v334
    %v336 = vpop.f32.mrf.mxu0
    %337 = vmatprep.mubr.f32.mxu0 0.0
    %338 = vmatmul.mubr.f32.gmra.mxu0 %v110
    %v339 = vpop.f32.mrf.mxu0
    %v340 = vadd.f32 %v76, %v339
    %v341 = vpop.f32.mrf.mxu0
    %342 = vmatprep.mubr.f32.mxu0 0.0
    %343 = vmatmul.mubr.f32.gmra.mxu0 %v113
    %v344 = vpop.f32.mrf.mxu0
    %v345 = vadd.f32 %v76, %v344
    %v346 = vpop.f32.mrf.mxu0
    %347 = vmatprep.mubr.f32.mxu0 0.0
    %348 = vmatmul.mubr.f32.gmra.mxu0 %v116
    %v349 = vpop.f32.mrf.mxu0
    %v350 = vadd.f32 %v76, %v349
    %v351 = vpop.f32.mrf.mxu0
    %352 = vmatprep.mubr.f32.mxu0 0.0
    %353 = vmatmul.mubr.f32.gmra.mxu0 %v119
    %v354 = vpop.f32.mrf.mxu0
    %v355 = vadd.f32 %v76, %v354
    %v356 = vpop.f32.mrf.mxu0
    %357 = vmatprep.mubr.f32.mxu0 0.0
    %358 = vmatmul.mubr.f32.gmra.mxu0 %v122
    %v359 = vpop.f32.mrf.mxu0
    %v360 = vadd.f32 %v76, %v359
    %v361 = vpop.f32.mrf.mxu0
    %362 = vmatprep.mubr.f32.mxu0 0.0
    %363 = vmatmul.mubr.f32.gmra.mxu0 %v125
    %v364 = vpop.f32.mrf.mxu0
    %v365 = vadd.f32 %v76, %v364
    %v366 = vpop.f32.mrf.mxu0
    %367 = vmatprep.mubr.f32.mxu0 0.0
    %368 = vmatmul.mubr.f32.gmra.mxu0 %v128
    %v369 = vpop.f32.mrf.mxu0
    %v370 = vadd.f32 %v76, %v369
    %v371 = vpop.f32.mrf.mxu0
    %372 = vmatprep.mubr.f32.mxu0 0.0
    %373 = vmatmul.mubr.f32.gmra.mxu0 %v131
    %v374 = vpop.f32.mrf.mxu0
    %v375 = vadd.f32 %v76, %v374
    %v376 = vpop.f32.mrf.mxu0
    %377 = vmatprep.mubr.f32.mxu0 0.0
    %378 = vmatmul.mubr.f32.gmra.mxu0 %v134
    %v379 = vpop.f32.mrf.mxu0
    %v380 = vadd.f32 %v76, %v379
    %v381 = vpop.f32.mrf.mxu0
    %382 = vmatprep.mubr.f32.mxu0 0.0
    %383 = vmatmul.mubr.f32.gmra.mxu0 %v137
    %v384 = vpop.f32.mrf.mxu0
    %v385 = vadd.f32 %v76, %v384
    %v386 = vpop.f32.mrf.mxu0
    %387 = vmatprep.mubr.f32.mxu0 0.0
    %388 = vmatmul.mubr.f32.gmra.mxu0 %v140
    %v389 = vpop.f32.mrf.mxu0
    %v390 = vadd.f32 %v76, %v389
    %v391 = vpop.f32.mrf.mxu0
    %392 = vmatprep.mubr.f32.mxu0 0.0
    %393 = vmatmul.mubr.f32.gmra.mxu0 %v143
    %v394 = vpop.f32.mrf.mxu0
    %v395 = vadd.f32 %v76, %v394
    %v396 = vpop.f32.mrf.mxu0
    %397 = vmatprep.mubr.f32.mxu0 0.0
    %398 = vmatmul.mubr.f32.gmra.mxu0 %v146
    %v399 = vpop.f32.mrf.mxu0
    %v400 = vadd.f32 %v76, %v399
    %v401 = vpop.f32.mrf.mxu0
    %402 = vmatprep.mubr.f32.mxu0 0.0
    %403 = vmatmul.mubr.f32.gmra.mxu0 %v149
    %v404 = vpop.f32.mrf.mxu0
    %v405 = vadd.f32 %v76, %v404
    %v406 = vpop.f32.mrf.mxu0
    %407 = vmatprep.mubr.f32.mxu0 0.0
    %408 = vmatmul.mubr.f32.gmra.mxu0 %v152
    %v409 = vpop.f32.mrf.mxu0
    %v410 = vadd.f32 %v76, %v409
    %v411 = vpop.f32.mrf.mxu0
    %412 = vmatprep.mubr.f32.mxu0 0.0
    %413 = vmatmul.mubr.f32.gmra.mxu0 %v155
    %v414 = vpop.f32.mrf.mxu0
    %v415 = vadd.f32 %v76, %v414
    %v416 = vpop.f32.mrf.mxu0
    %417 = vmatprep.mubr.f32.mxu0 0.0
    %418 = vmatmul.mubr.f32.gmra.mxu0 %v158
    %v419 = vpop.f32.mrf.mxu0
    %v420 = vadd.f32 %v76, %v419
    %v421 = vpop.f32.mrf.mxu0
    %422 = vmatprep.mubr.f32.mxu0 0.0
    %423 = vmatmul.mubr.f32.gmra.mxu0 %v161
    %v424 = vpop.f32.mrf.mxu0
    %v425 = vadd.f32 %v76, %v424
    %v426 = vpop.f32.mrf.mxu0
    %427 = vmatprep.mubr.f32.mxu0 0.0
    %428 = vmatmul.mubr.f32.gmra.mxu0 %v164
    %v429 = vpop.f32.mrf.mxu0
    %v430 = vadd.f32 %v76, %v429
    %v431 = vpop.f32.mrf.mxu0
    %432 = vmatprep.mubr.f32.mxu0 0.0
    %433 = vmatmul.mubr.f32.gmra.mxu0 %v167
    %v434 = vpop.f32.mrf.mxu0
    %v435 = vadd.f32 %v76, %v434
    %v436 = vpop.f32.mrf.mxu0
    %437 = vmatprep.mubr.f32.mxu0 0.0
    %438 = vmatmul.mubr.f32.gmra.mxu0 %v170
    %v439 = vpop.f32.mrf.mxu0
    %v440 = vadd.f32 %v76, %v439
    %v441 = vpop.f32.mrf.mxu0
    %442 = vmatprep.mubr.f32.mxu0 0.0
    %443 = vmatmul.mubr.f32.gmra.mxu0 %v173
    %v444 = vpop.f32.mrf.mxu0
    %v445 = vadd.f32 %v76, %v444
    %v446 = vpop.f32.mrf.mxu0
    %447 = vmatprep.mubr.f32.mxu0 0.0
    %448 = vmatmul.mubr.f32.gmra.mxu0 %v176
    %v449 = vpop.f32.mrf.mxu0
    %v450 = vadd.f32 %v76, %v449
    %v451 = vpop.f32.mrf.mxu0
    %452 = vmatprep.mubr.f32.mxu0 0.0
    %453 = vmatmul.mubr.f32.gmra.mxu0 %v179
    %v454 = vpop.f32.mrf.mxu0
    %v455 = vadd.f32 %v76, %v454
    %v456 = vpop.f32.mrf.mxu0
    %457 = vmatprep.mubr.f32.mxu0 0.0
    %458 = vmatmul.mubr.f32.gmra.mxu0 %v182
    %v459 = vpop.f32.mrf.mxu0
    %v460 = vadd.f32 %v76, %v459
    %v461 = vpop.f32.mrf.mxu0
    %462 = vmatprep.mubr.f32.mxu0 0.0
    %463 = vmatmul.mubr.f32.gmra.mxu0 %v185
    %v464 = vpop.f32.mrf.mxu0
    %v465 = vadd.f32 %v76, %v464
    %v466 = vpop.f32.mrf.mxu0
    %467 = vmatprep.mubr.f32.mxu0 0.0
    %468 = vmatmul.mubr.f32.gmra.mxu0 %v188
    %v469 = vpop.f32.mrf.mxu0
    %v470 = vadd.f32 %v76, %v469
    %v471 = vpop.f32.mrf.mxu0
    %472 = vmatprep.mubr.f32.mxu0 0.0
    %473 = vmatmul.mubr.f32.gmra.mxu0 %v191
    %v474 = vpop.f32.mrf.mxu0
    %v475 = vadd.f32 %v76, %v474
    %v476 = vpop.f32.mrf.mxu0
    %477 = vmatprep.mubr.f32.mxu0 0.0
    %478 = vmatmul.mubr.f32.gmra.mxu0 %v194
    %v479 = vpop.f32.mrf.mxu0
    %v480 = vadd.f32 %v76, %v479
    %v481 = vpop.f32.mrf.mxu0
    %482 = vmatprep.mubr.f32.mxu0 0.0
    %483 = vmatmul.mubr.f32.gmra.mxu0 %v197
    %v484 = vpop.f32.mrf.mxu0
    %v485 = vadd.f32 %v76, %v484
    %v486 = vpop.f32.mrf.mxu0
    %487 = vmatprep.mubr.f32.mxu0 0.0
    %488 = vmatmul.mubr.f32.gmra.mxu0 %v200
    %v489 = vpop.f32.mrf.mxu0
    %v490 = vadd.f32 %v76, %v489
    %v491 = vpop.f32.mrf.mxu0
    %492 = vmatprep.mubr.f32.mxu0 0.0
    %493 = vmatmul.mubr.f32.gmra.mxu0 %v203
    %v494 = vpop.f32.mrf.mxu0
    %v495 = vadd.f32 %v76, %v494
    %v496 = vpop.f32.mrf.mxu0
    %497 = vmatprep.mubr.f32.mxu0 0.0
    %498 = vmatmul.mubr.f32.gmra.mxu0 %v206
    %v499 = vpop.f32.mrf.mxu0
    %v500 = vadd.f32 %v76, %v499
    %v501 = vpop.f32.mrf.mxu0
    %502 = vmatprep.mubr.f32.mxu0 0.0
    %503 = vmatmul.mubr.f32.gmra.mxu0 %v209
    %v504 = vpop.f32.mrf.mxu0
    %v505 = vadd.f32 %v76, %v504
    %v506 = vpop.f32.mrf.mxu0
    %507 = vmatprep.mubr.f32.mxu0 0.0
    %508 = vmatmul.mubr.f32.gmra.mxu0 %v212
    %v509 = vpop.f32.mrf.mxu0
    %v510 = vadd.f32 %v76, %v509
    %v511 = vpop.f32.mrf.mxu0
    %512 = vmatprep.mubr.f32.mxu0 0.0
    %513 = vmatmul.mubr.f32.gmra.mxu0 %v215
    %v514 = vpop.f32.mrf.mxu0
    %v515 = vadd.f32 %v76, %v514
    %v516 = vpop.f32.mrf.mxu0
    %517 = vmatprep.mubr.f32.mxu0 0.0
    %518 = vmatmul.mubr.f32.gmra.mxu0 %v218
    %v519 = vpop.f32.mrf.mxu0
    %v520 = vadd.f32 %v76, %v519
    %v521 = vpop.f32.mrf.mxu0
    %522 = vmatprep.mubr.f32.mxu0 0.0
    %523 = vmatmul.mubr.f32.gmra.mxu0 %v221
    %v524 = vpop.f32.mrf.mxu0
    %v525 = vadd.f32 %v76, %v524
    %v526 = vpop.f32.mrf.mxu0
    %527 = vdwg.mxu0
    %v528 = vand.u32 2147483647, %v290
    %vm529 = vcmp.le.f32.partialorder %v528, 0.7853982
    %vm530 = vcmp.lt.s32.totalorder %v290, 0
    %v531 = vand.u32 %v290, 2139095040
    %v532 = vshrl.u32 %v531, 23
    %v533 = vsub.s32 %v532, 127
    %v534 = vand.u32 2147483647, %v290
    %v535 = vand.u32 %v534, 8388607
    %v536 = vor.u32 %v535, 8388608
    %v537 = vsub.s32 0, %v536
    %v538 = vadd.s32 %v533, 1
    %vm539 = vcmp.gt.s32.totalorder %v538, 0
    %v540 = vsel %vm539, %v538, 0
    %v541 = vshrl.u32 %v540, 5
    %v542 = vand.u32 %v540, 31
    %v543 = vsub.s32 32, %v542
    %v544 = vshrl.u32 683565275, %v543
    %v545 = vshll.u32 683565275, %v542
    %v546 = vshrl.u32 2475754826, %v543
    %v547 = vor.u32 %v545, %v546
    %v548 = vshll.u32 2475754826, %v542
    %v549 = vshrl.u32 2131351028, %v543
    %v550 = vor.u32 %v548, %v549
    %v551 = vshll.u32 2131351028, %v542
    %v552 = vshrl.u32 2102212464, %v543
    %v553 = vor.u32 %v551, %v552
    %v554 = vshll.u32 2102212464, %v542
    %v555 = vshrl.u32 920167782, %v543
    %v556 = vor.u32 %v554, %v555
    %v557 = vshll.u32 920167782, %v542
    %v558 = vshrl.u32 1326507024, %v543
    %v559 = vor.u32 %v557, %v558
    %vm560 = vcmp.lt.s32.totalorder %v541, 1
    %vm561 = vcmp.lt.s32.totalorder %v541, 2
    %vm562 = vcmp.lt.s32.totalorder %v541, 3
    %vm563 = vcmp.lt.s32.totalorder %v541, 4
    %v564 = vsel %vm560, %v544, %v547
    %v565 = vsel %vm563, %v553, 2102212464
    %v566 = vsel %vm562, %v550, %v565
    %v567 = vsel %vm561, %v564, %v566
    %v568 = vsel %vm560, %v547, %v550
    %v569 = vsel %vm563, %v556, 920167782
    %v570 = vsel %vm562, %v553, %v569
    %v571 = vsel %vm561, %v568, %v570
    %v572 = vsel %vm560, %v550, %v553
    %v573 = vsel %vm563, %v559, 1326507024
    %v574 = vsel %vm562, %v556, %v573
    %v575 = vsel %vm561, %v572, %v574
    %v576 = vshll.u32 %v536, 8
    %v577 = vmul.u32.u64.compose %v576, %v575
    %v578 = vextract.low.u32 %v577
    %v579 = vextract.high.u32 %v577
    %v580 = vmul.u32.u64.compose %v576, %v571
    %v581 = vextract.low.u32 %v580
    %v582 = vextract.high.u32 %v580
    %v583 = vmul.u32 %v576, %v567
    %v584 = vadd.s32 %v579, %v581
    %vm585 = vc.u32 %v579, %v581
    %v586 = vadd.s32 %v582, 1
    %v587 = vsel %vm585, %v586, %v582
    %v588 = vadd.s32 %v583, %v587
    %v589 = vadd.s32 %v588, 536870912
    %v590 = vshrl.u32 %v589, 30
    %v591 = vshll.u32 %v590, 30
    %v592 = vsub.s32 %v588, %v591
    %vm593 = vcmp.lt.s32.totalorder %v592, 0
    %v594 = vsub.s32 0, %v592
    %v595 = vsel %vm593, %v594, %v592
    %v596 = vclz %v595
    %v597 = vsub.s32 %v596, 2
    %vm598 = vcmp.gt.s32.totalorder 0, %v597
    %v599 = vsel %vm598, 0, %v597
    %v600 = vsub.s32 32, %v599
    %v601 = vshll.u32 %v592, %v599
    %v602 = vshrl.u32 %v584, %v600
    %v603 = vor.u32 %v601, %v602
    %v604 = vsub.s32 4294967266, %v599
    %v605 = vadd.s32 %v604, 127
    %v606 = vshll.u32 %v605, 23
    %v607 = vor.u32 4788187, %v606
    %v608 = vand.u32 2147483647, %v607
    %v610 = vcvt.s32.f32 %v603
    %v611 = vmul.f32 %v610, %v608
    %v612 = vxor.u32 %v611, 2147483648
    %v613 = vsel %vm530, %v612, %v611
    %v614 = vsub.s32 4, %v590
    %v615 = vsel %vm530, %v614, %v590
    %v616 = vsel %vm529, %v290, %v613
    %v617 = vsel %vm529, 0, %v615
    %v618 = vcosq.f32.pop %v616
    %v619 = vsinq.f32.pop %v616
    %vm620 = vweird.f32 %v290
    %v621 = vadd.s32 %v617, 3
    %v622 = vand.u32 %v621, 3
    %vm623 = vcmp.lt.s32.totalorder %v622, 2
    %vm624 = vcmp.eq.s32.totalorder %v622, 0
    %v625 = vxor.u32 %v619, 2147483648
    %v626 = vsel %vm624, %v618, %v625
    %vm627 = vcmp.eq.s32.totalorder %v622, 2
    %v628 = vxor.u32 %v618, 2147483648
    %v629 = vsel %vm627, %v628, %v619
    %v630 = vsel %vm623, %v626, %v629
    %v631 = vsel %vm620, nan, %v630
    %v632 = vand.u32 2147483647, %v295
    %vm633 = vcmp.le.f32.partialorder %v632, 0.7853982
    %vm634 = vcmp.lt.s32.totalorder %v295, 0
    %v635 = vand.u32 %v295, 2139095040
    %v636 = vshrl.u32 %v635, 23
    %v637 = vsub.s32 %v636, 127
    %v638 = vand.u32 2147483647, %v295
    %v639 = vand.u32 %v638, 8388607
    %v640 = vor.u32 %v639, 8388608
    %v641 = vsub.s32 0, %v640
    %v642 = vadd.s32 %v637, 1
    %vm643 = vcmp.gt.s32.totalorder %v642, 0
    %v644 = vsel %vm643, %v642, 0
    %v645 = vshrl.u32 %v644, 5
    %v646 = vand.u32 %v644, 31
    %v647 = vsub.s32 32, %v646
    %v648 = vshrl.u32 683565275, %v647
    %v649 = vshll.u32 683565275, %v646
    %v650 = vshrl.u32 2475754826, %v647
    %v651 = vor.u32 %v649, %v650
    %v652 = vshll.u32 2475754826, %v646
    %v653 = vshrl.u32 2131351028, %v647
    %v654 = vor.u32 %v652, %v653
    %v655 = vshll.u32 2131351028, %v646
    %v656 = vshrl.u32 2102212464, %v647
    %v657 = vor.u32 %v655, %v656
    %v658 = vshll.u32 2102212464, %v646
    %v659 = vshrl.u32 920167782, %v647
    %v660 = vor.u32 %v658, %v659
    %v661 = vshll.u32 920167782, %v646
    %v662 = vshrl.u32 1326507024, %v647
    %v663 = vor.u32 %v661, %v662
    %vm664 = vcmp.lt.s32.totalorder %v645, 1
    %vm665 = vcmp.lt.s32.totalorder %v645, 2
    %vm666 = vcmp.lt.s32.totalorder %v645, 3
    %vm667 = vcmp.lt.s32.totalorder %v645, 4
    %v668 = vsel %vm664, %v648, %v651
    %v669 = vsel %vm667, %v657, 2102212464
    %v670 = vsel %vm666, %v654, %v669
    %v671 = vsel %vm665, %v668, %v670
    %v672 = vsel %vm664, %v651, %v654
    %v673 = vsel %vm667, %v660, 920167782
    %v674 = vsel %vm666, %v657, %v673
    %v675 = vsel %vm665, %v672, %v674
    %v676 = vsel %vm664, %v654, %v657
    %v677 = vsel %vm667, %v663, 1326507024
    %v678 = vsel %vm666, %v660, %v677
    %v679 = vsel %vm665, %v676, %v678
    %v680 = vshll.u32 %v640, 8
    %v681 = vmul.u32.u64.compose %v680, %v679
    %v682 = vextract.low.u32 %v681
    %v683 = vextract.high.u32 %v681
    %v684 = vmul.u32.u64.compose %v680, %v675
    %v685 = vextract.low.u32 %v684
    %v686 = vextract.high.u32 %v684
    %v687 = vmul.u32 %v680, %v671
    %v688 = vadd.s32 %v683, %v685
    %vm689 = vc.u32 %v683, %v685
    %v690 = vadd.s32 %v686, 1
    %v691 = vsel %vm689, %v690, %v686
    %v692 = vadd.s32 %v687, %v691
    %v693 = vadd.s32 %v692, 536870912
    %v694 = vshrl.u32 %v693, 30
    %v695 = vshll.u32 %v694, 30
    %v696 = vsub.s32 %v692, %v695
    %vm697 = vcmp.lt.s32.totalorder %v696, 0
    %v698 = vsub.s32 0, %v696
    %v699 = vsel %vm697, %v698, %v696
    %v700 = vclz %v699
    %v701 = vsub.s32 %v700, 2
    %vm702 = vcmp.gt.s32.totalorder 0, %v701
    %v703 = vsel %vm702, 0, %v701
    %v704 = vsub.s32 32, %v703
    %v705 = vshll.u32 %v696, %v703
    %v706 = vshrl.u32 %v688, %v704
    %v707 = vor.u32 %v705, %v706
    %v708 = vsub.s32 4294967266, %v703
    %v709 = vadd.s32 %v708, 127
    %v710 = vshll.u32 %v709, 23
    %v711 = vor.u32 4788187, %v710
    %v712 = vand.u32 2147483647, %v711
    %v714 = vcvt.s32.f32 %v707
    %v715 = vmul.f32 %v714, %v712
    %v716 = vxor.u32 %v715, 2147483648
    %v717 = vsel %vm634, %v716, %v715
    %v718 = vsub.s32 4, %v694
    %v719 = vsel %vm634, %v718, %v694
    %v720 = vsel %vm633, %v295, %v717
    %v721 = vsel %vm633, 0, %v719
    %v722 = vcosq.f32.pop %v720
    %v723 = vsinq.f32.pop %v720
    %vm724 = vweird.f32 %v295
    %v725 = vadd.s32 %v721, 3
    %v726 = vand.u32 %v725, 3
    %vm727 = vcmp.lt.s32.totalorder %v726, 2
    %vm728 = vcmp.eq.s32.totalorder %v726, 0
    %v729 = vxor.u32 %v723, 2147483648
    %v730 = vsel %vm728, %v722, %v729
    %vm731 = vcmp.eq.s32.totalorder %v726, 2
    %v732 = vxor.u32 %v722, 2147483648
    %v733 = vsel %vm731, %v732, %v723
    %v734 = vsel %vm727, %v730, %v733
    %v735 = vsel %vm724, nan, %v734
    %v736 = vand.u32 2147483647, %v300
    %vm737 = vcmp.le.f32.partialorder %v736, 0.7853982
    %vm738 = vcmp.lt.s32.totalorder %v300, 0
    %v739 = vand.u32 %v300, 2139095040
    %v740 = vshrl.u32 %v739, 23
    %v741 = vsub.s32 %v740, 127
    %v742 = vand.u32 2147483647, %v300
    %v743 = vand.u32 %v742, 8388607
    %v744 = vor.u32 %v743, 8388608
    %v745 = vsub.s32 0, %v744
    %v746 = vadd.s32 %v741, 1
    %vm747 = vcmp.gt.s32.totalorder %v746, 0
    %v748 = vsel %vm747, %v746, 0
    %v749 = vshrl.u32 %v748, 5
    %v750 = vand.u32 %v748, 31
    %v751 = vsub.s32 32, %v750
    %v752 = vshrl.u32 683565275, %v751
    %v753 = vshll.u32 683565275, %v750
    %v754 = vshrl.u32 2475754826, %v751
    %v755 = vor.u32 %v753, %v754
    %v756 = vshll.u32 2475754826, %v750
    %v757 = vshrl.u32 2131351028, %v751
    %v758 = vor.u32 %v756, %v757
    %v759 = vshll.u32 2131351028, %v750
    %v760 = vshrl.u32 2102212464, %v751
    %v761 = vor.u32 %v759, %v760
    %v762 = vshll.u32 2102212464, %v750
    %v763 = vshrl.u32 920167782, %v751
    %v764 = vor.u32 %v762, %v763
    %v765 = vshll.u32 920167782, %v750
    %v766 = vshrl.u32 1326507024, %v751
    %v767 = vor.u32 %v765, %v766
    %vm768 = vcmp.lt.s32.totalorder %v749, 1
    %vm769 = vcmp.lt.s32.totalorder %v749, 2
    %vm770 = vcmp.lt.s32.totalorder %v749, 3
    %vm771 = vcmp.lt.s32.totalorder %v749, 4
    %v772 = vsel %vm768, %v752, %v755
    %v773 = vsel %vm771, %v761, 2102212464
    %v774 = vsel %vm770, %v758, %v773
    %v775 = vsel %vm769, %v772, %v774
    %v776 = vsel %vm768, %v755, %v758
    %v777 = vsel %vm771, %v764, 920167782
    %v778 = vsel %vm770, %v761, %v777
    %v779 = vsel %vm769, %v776, %v778
    %v780 = vsel %vm768, %v758, %v761
    %v781 = vsel %vm771, %v767, 1326507024
    %v782 = vsel %vm770, %v764, %v781
    %v783 = vsel %vm769, %v780, %v782
    %v784 = vshll.u32 %v744, 8
    %v785 = vmul.u32.u64.compose %v784, %v783
    %v786 = vextract.low.u32 %v785
    %v787 = vextract.high.u32 %v785
    %v788 = vmul.u32.u64.compose %v784, %v779
    %v789 = vextract.low.u32 %v788
    %v790 = vextract.high.u32 %v788
    %v791 = vmul.u32 %v784, %v775
    %v792 = vadd.s32 %v787, %v789
    %vm793 = vc.u32 %v787, %v789
    %v794 = vadd.s32 %v790, 1
    %v795 = vsel %vm793, %v794, %v790
    %v796 = vadd.s32 %v791, %v795
    %v797 = vadd.s32 %v796, 536870912
    %v798 = vshrl.u32 %v797, 30
    %v799 = vshll.u32 %v798, 30
    %v800 = vsub.s32 %v796, %v799
    %vm801 = vcmp.lt.s32.totalorder %v800, 0
    %v802 = vsub.s32 0, %v800
    %v803 = vsel %vm801, %v802, %v800
    %v804 = vclz %v803
    %v805 = vsub.s32 %v804, 2
    %vm806 = vcmp.gt.s32.totalorder 0, %v805
    %v807 = vsel %vm806, 0, %v805
    %v808 = vsub.s32 32, %v807
    %v809 = vshll.u32 %v800, %v807
    %v810 = vshrl.u32 %v792, %v808
    %v811 = vor.u32 %v809, %v810
    %v812 = vsub.s32 4294967266, %v807
    %v813 = vadd.s32 %v812, 127
    %v814 = vshll.u32 %v813, 23
    %v815 = vor.u32 4788187, %v814
    %v816 = vand.u32 2147483647, %v815
    %v818 = vcvt.s32.f32 %v811
    %v819 = vmul.f32 %v818, %v816
    %v820 = vxor.u32 %v819, 2147483648
    %v821 = vsel %vm738, %v820, %v819
    %v822 = vsub.s32 4, %v798
    %v823 = vsel %vm738, %v822, %v798
    %v824 = vsel %vm737, %v300, %v821
    %v825 = vsel %vm737, 0, %v823
    %v826 = vcosq.f32.pop %v824
    %v827 = vsinq.f32.pop %v824
    %vm828 = vweird.f32 %v300
    %v829 = vadd.s32 %v825, 3
    %v830 = vand.u32 %v829, 3
    %vm831 = vcmp.lt.s32.totalorder %v830, 2
    %vm832 = vcmp.eq.s32.totalorder %v830, 0
    %v833 = vxor.u32 %v827, 2147483648
    %v834 = vsel %vm832, %v826, %v833
    %vm835 = vcmp.eq.s32.totalorder %v830, 2
    %v836 = vxor.u32 %v826, 2147483648
    %v837 = vsel %vm835, %v836, %v827
    %v838 = vsel %vm831, %v834, %v837
    %v839 = vsel %vm828, nan, %v838
    %v840 = vand.u32 2147483647, %v305
    %vm841 = vcmp.le.f32.partialorder %v840, 0.7853982
    %vm842 = vcmp.lt.s32.totalorder %v305, 0
    %v843 = vand.u32 %v305, 2139095040
    %v844 = vshrl.u32 %v843, 23
    %v845 = vsub.s32 %v844, 127
    %v846 = vand.u32 2147483647, %v305
    %v847 = vand.u32 %v846, 8388607
    %v848 = vor.u32 %v847, 8388608
    %v849 = vsub.s32 0, %v848
    %v850 = vadd.s32 %v845, 1
    %vm851 = vcmp.gt.s32.totalorder %v850, 0
    %v852 = vsel %vm851, %v850, 0
    %v853 = vshrl.u32 %v852, 5
    %v854 = vand.u32 %v852, 31
    %v855 = vsub.s32 32, %v854
    %v856 = vshrl.u32 683565275, %v855
    %v857 = vshll.u32 683565275, %v854
    %v858 = vshrl.u32 2475754826, %v855
    %v859 = vor.u32 %v857, %v858
    %v860 = vshll.u32 2475754826, %v854
    %v861 = vshrl.u32 2131351028, %v855
    %v862 = vor.u32 %v860, %v861
    %v863 = vshll.u32 2131351028, %v854
    %v864 = vshrl.u32 2102212464, %v855
    %v865 = vor.u32 %v863, %v864
    %v866 = vshll.u32 2102212464, %v854
    %v867 = vshrl.u32 920167782, %v855
    %v868 = vor.u32 %v866, %v867
    %v869 = vshll.u32 920167782, %v854
    %v870 = vshrl.u32 1326507024, %v855
    %v871 = vor.u32 %v869, %v870
    %vm872 = vcmp.lt.s32.totalorder %v853, 1
    %vm873 = vcmp.lt.s32.totalorder %v853, 2
    %vm874 = vcmp.lt.s32.totalorder %v853, 3
    %vm875 = vcmp.lt.s32.totalorder %v853, 4
    %v876 = vsel %vm872, %v856, %v859
    %v877 = vsel %vm875, %v865, 2102212464
    %v878 = vsel %vm874, %v862, %v877
    %v879 = vsel %vm873, %v876, %v878
    %v880 = vsel %vm872, %v859, %v862
    %v881 = vsel %vm875, %v868, 920167782
    %v882 = vsel %vm874, %v865, %v881
    %v883 = vsel %vm873, %v880, %v882
    %v884 = vsel %vm872, %v862, %v865
    %v885 = vsel %vm875, %v871, 1326507024
    %v886 = vsel %vm874, %v868, %v885
    %v887 = vsel %vm873, %v884, %v886
    %v888 = vshll.u32 %v848, 8
    %v889 = vmul.u32.u64.compose %v888, %v887
    %v890 = vextract.low.u32 %v889
    %v891 = vextract.high.u32 %v889
    %v892 = vmul.u32.u64.compose %v888, %v883
    %v893 = vextract.low.u32 %v892
    %v894 = vextract.high.u32 %v892
    %v895 = vmul.u32 %v888, %v879
    %v896 = vadd.s32 %v891, %v893
    %vm897 = vc.u32 %v891, %v893
    %v898 = vadd.s32 %v894, 1
    %v899 = vsel %vm897, %v898, %v894
    %v900 = vadd.s32 %v895, %v899
    %v901 = vadd.s32 %v900, 536870912
    %v902 = vshrl.u32 %v901, 30
    %v903 = vshll.u32 %v902, 30
    %v904 = vsub.s32 %v900, %v903
    %vm905 = vcmp.lt.s32.totalorder %v904, 0
    %v906 = vsub.s32 0, %v904
    %v907 = vsel %vm905, %v906, %v904
    %v908 = vclz %v907
    %v909 = vsub.s32 %v908, 2
    %vm910 = vcmp.gt.s32.totalorder 0, %v909
    %v911 = vsel %vm910, 0, %v909
    %v912 = vsub.s32 32, %v911
    %v913 = vshll.u32 %v904, %v911
    %v914 = vshrl.u32 %v896, %v912
    %v915 = vor.u32 %v913, %v914
    %v916 = vsub.s32 4294967266, %v911
    %v917 = vadd.s32 %v916, 127
    %v918 = vshll.u32 %v917, 23
    %v919 = vor.u32 4788187, %v918
    %v920 = vand.u32 2147483647, %v919
    %v922 = vcvt.s32.f32 %v915
    %v923 = vmul.f32 %v922, %v920
    %v924 = vxor.u32 %v923, 2147483648
    %v925 = vsel %vm842, %v924, %v923
    %v926 = vsub.s32 4, %v902
    %v927 = vsel %vm842, %v926, %v902
    %v928 = vsel %vm841, %v305, %v925
    %v929 = vsel %vm841, 0, %v927
    %v930 = vcosq.f32.pop %v928
    %v931 = vsinq.f32.pop %v928
    %vm932 = vweird.f32 %v305
    %v933 = vadd.s32 %v929, 3
    %v934 = vand.u32 %v933, 3
    %vm935 = vcmp.lt.s32.totalorder %v934, 2
    %vm936 = vcmp.eq.s32.totalorder %v934, 0
    %v937 = vxor.u32 %v931, 2147483648
    %v938 = vsel %vm936, %v930, %v937
    %vm939 = vcmp.eq.s32.totalorder %v934, 2
    %v940 = vxor.u32 %v930, 2147483648
    %v941 = vsel %vm939, %v940, %v931
    %v942 = vsel %vm935, %v938, %v941
    %v943 = vsel %vm932, nan, %v942
    %v944 = vand.u32 2147483647, %v310
    %vm945 = vcmp.le.f32.partialorder %v944, 0.7853982
    %vm946 = vcmp.lt.s32.totalorder %v310, 0
    %v947 = vand.u32 %v310, 2139095040
    %v948 = vshrl.u32 %v947, 23
    %v949 = vsub.s32 %v948, 127
    %v950 = vand.u32 2147483647, %v310
    %v951 = vand.u32 %v950, 8388607
    %v952 = vor.u32 %v951, 8388608
    %v953 = vsub.s32 0, %v952
    %v954 = vadd.s32 %v949, 1
    %vm955 = vcmp.gt.s32.totalorder %v954, 0
    %v956 = vsel %vm955, %v954, 0
    %v957 = vshrl.u32 %v956, 5
    %v958 = vand.u32 %v956, 31
    %v959 = vsub.s32 32, %v958
    %v960 = vshrl.u32 683565275, %v959
    %v961 = vshll.u32 683565275, %v958
    %v962 = vshrl.u32 2475754826, %v959
    %v963 = vor.u32 %v961, %v962
    %v964 = vshll.u32 2475754826, %v958
    %v965 = vshrl.u32 2131351028, %v959
    %v966 = vor.u32 %v964, %v965
    %v967 = vshll.u32 2131351028, %v958
    %v968 = vshrl.u32 2102212464, %v959
    %v969 = vor.u32 %v967, %v968
    %v970 = vshll.u32 2102212464, %v958
    %v971 = vshrl.u32 920167782, %v959
    %v972 = vor.u32 %v970, %v971
    %v973 = vshll.u32 920167782, %v958
    %v974 = vshrl.u32 1326507024, %v959
    %v975 = vor.u32 %v973, %v974
    %vm976 = vcmp.lt.s32.totalorder %v957, 1
    %vm977 = vcmp.lt.s32.totalorder %v957, 2
    %vm978 = vcmp.lt.s32.totalorder %v957, 3
    %vm979 = vcmp.lt.s32.totalorder %v957, 4
    %v980 = vsel %vm976, %v960, %v963
    %v981 = vsel %vm979, %v969, 2102212464
    %v982 = vsel %vm978, %v966, %v981
    %v983 = vsel %vm977, %v980, %v982
    %v984 = vsel %vm976, %v963, %v966
    %v985 = vsel %vm979, %v972, 920167782
    %v986 = vsel %vm978, %v969, %v985
    %v987 = vsel %vm977, %v984, %v986
    %v988 = vsel %vm976, %v966, %v969
    %v989 = vsel %vm979, %v975, 1326507024
    %v990 = vsel %vm978, %v972, %v989
    %v991 = vsel %vm977, %v988, %v990
    %v992 = vshll.u32 %v952, 8
    %v993 = vmul.u32.u64.compose %v992, %v991
    %v994 = vextract.low.u32 %v993
    %v995 = vextract.high.u32 %v993
    %v996 = vmul.u32.u64.compose %v992, %v987
    %v997 = vextract.low.u32 %v996
    %v998 = vextract.high.u32 %v996
    %v999 = vmul.u32 %v992, %v983
    %v1000 = vadd.s32 %v995, %v997
    %vm1001 = vc.u32 %v995, %v997
    %v1002 = vadd.s32 %v998, 1
    %v1003 = vsel %vm1001, %v1002, %v998
    %v1004 = vadd.s32 %v999, %v1003
    %v1005 = vadd.s32 %v1004, 536870912
    %v1006 = vshrl.u32 %v1005, 30
    %v1007 = vshll.u32 %v1006, 30
    %v1008 = vsub.s32 %v1004, %v1007
    %vm1009 = vcmp.lt.s32.totalorder %v1008, 0
    %v1010 = vsub.s32 0, %v1008
    %v1011 = vsel %vm1009, %v1010, %v1008
    %v1012 = vclz %v1011
    %v1013 = vsub.s32 %v1012, 2
    %vm1014 = vcmp.gt.s32.totalorder 0, %v1013
    %v1015 = vsel %vm1014, 0, %v1013
    %v1016 = vsub.s32 32, %v1015
    %v1017 = vshll.u32 %v1008, %v1015
    %v1018 = vshrl.u32 %v1000, %v1016
    %v1019 = vor.u32 %v1017, %v1018
    %v1020 = vsub.s32 4294967266, %v1015
    %v1021 = vadd.s32 %v1020, 127
    %v1022 = vshll.u32 %v1021, 23
    %v1023 = vor.u32 4788187, %v1022
    %v1024 = vand.u32 2147483647, %v1023
    %v1026 = vcvt.s32.f32 %v1019
    %v1027 = vmul.f32 %v1026, %v1024
    %v1028 = vxor.u32 %v1027, 2147483648
    %v1029 = vsel %vm946, %v1028, %v1027
    %v1030 = vsub.s32 4, %v1006
    %v1031 = vsel %vm946, %v1030, %v1006
    %v1032 = vsel %vm945, %v310, %v1029
    %v1033 = vsel %vm945, 0, %v1031
    %v1034 = vcosq.f32.pop %v1032
    %v1035 = vsinq.f32.pop %v1032
    %vm1036 = vweird.f32 %v310
    %v1037 = vadd.s32 %v1033, 3
    %v1038 = vand.u32 %v1037, 3
    %vm1039 = vcmp.lt.s32.totalorder %v1038, 2
    %vm1040 = vcmp.eq.s32.totalorder %v1038, 0
    %v1041 = vxor.u32 %v1035, 2147483648
    %v1042 = vsel %vm1040, %v1034, %v1041
    %vm1043 = vcmp.eq.s32.totalorder %v1038, 2
    %v1044 = vxor.u32 %v1034, 2147483648
    %v1045 = vsel %vm1043, %v1044, %v1035
    %v1046 = vsel %vm1039, %v1042, %v1045
    %v1047 = vsel %vm1036, nan, %v1046
    %v1048 = vand.u32 2147483647, %v315
    %vm1049 = vcmp.le.f32.partialorder %v1048, 0.7853982
    %vm1050 = vcmp.lt.s32.totalorder %v315, 0
    %v1051 = vand.u32 %v315, 2139095040
    %v1052 = vshrl.u32 %v1051, 23
    %v1053 = vsub.s32 %v1052, 127
    %v1054 = vand.u32 2147483647, %v315
    %v1055 = vand.u32 %v1054, 8388607
    %v1056 = vor.u32 %v1055, 8388608
    %v1057 = vsub.s32 0, %v1056
    %v1058 = vadd.s32 %v1053, 1
    %vm1059 = vcmp.gt.s32.totalorder %v1058, 0
    %v1060 = vsel %vm1059, %v1058, 0
    %v1061 = vshrl.u32 %v1060, 5
    %v1062 = vand.u32 %v1060, 31
    %v1063 = vsub.s32 32, %v1062
    %v1064 = vshrl.u32 683565275, %v1063
    %v1065 = vshll.u32 683565275, %v1062
    %v1066 = vshrl.u32 2475754826, %v1063
    %v1067 = vor.u32 %v1065, %v1066
    %v1068 = vshll.u32 2475754826, %v1062
    %v1069 = vshrl.u32 2131351028, %v1063
    %v1070 = vor.u32 %v1068, %v1069
    %v1071 = vshll.u32 2131351028, %v1062
    %v1072 = vshrl.u32 2102212464, %v1063
    %v1073 = vor.u32 %v1071, %v1072
    %v1074 = vshll.u32 2102212464, %v1062
    %v1075 = vshrl.u32 920167782, %v1063
    %v1076 = vor.u32 %v1074, %v1075
    %v1077 = vshll.u32 920167782, %v1062
    %v1078 = vshrl.u32 1326507024, %v1063
    %v1079 = vor.u32 %v1077, %v1078
    %vm1080 = vcmp.lt.s32.totalorder %v1061, 1
    %vm1081 = vcmp.lt.s32.totalorder %v1061, 2
    %vm1082 = vcmp.lt.s32.totalorder %v1061, 3
    %vm1083 = vcmp.lt.s32.totalorder %v1061, 4
    %v1084 = vsel %vm1080, %v1064, %v1067
    %v1085 = vsel %vm1083, %v1073, 2102212464
    %v1086 = vsel %vm1082, %v1070, %v1085
    %v1087 = vsel %vm1081, %v1084, %v1086
    %v1088 = vsel %vm1080, %v1067, %v1070
    %v1089 = vsel %vm1083, %v1076, 920167782
    %v1090 = vsel %vm1082, %v1073, %v1089
    %v1091 = vsel %vm1081, %v1088, %v1090
    %v1092 = vsel %vm1080, %v1070, %v1073
    %v1093 = vsel %vm1083, %v1079, 1326507024
    %v1094 = vsel %vm1082, %v1076, %v1093
    %v1095 = vsel %vm1081, %v1092, %v1094
    %v1096 = vshll.u32 %v1056, 8
    %v1097 = vmul.u32.u64.compose %v1096, %v1095
    %v1098 = vextract.low.u32 %v1097
    %v1099 = vextract.high.u32 %v1097
    %v1100 = vmul.u32.u64.compose %v1096, %v1091
    %v1101 = vextract.low.u32 %v1100
    %v1102 = vextract.high.u32 %v1100
    %v1103 = vmul.u32 %v1096, %v1087
    %v1104 = vadd.s32 %v1099, %v1101
    %vm1105 = vc.u32 %v1099, %v1101
    %v1106 = vadd.s32 %v1102, 1
    %v1107 = vsel %vm1105, %v1106, %v1102
    %v1108 = vadd.s32 %v1103, %v1107
    %v1109 = vadd.s32 %v1108, 536870912
    %v1110 = vshrl.u32 %v1109, 30
    %v1111 = vshll.u32 %v1110, 30
    %v1112 = vsub.s32 %v1108, %v1111
    %vm1113 = vcmp.lt.s32.totalorder %v1112, 0
    %v1114 = vsub.s32 0, %v1112
    %v1115 = vsel %vm1113, %v1114, %v1112
    %v1116 = vclz %v1115
    %v1117 = vsub.s32 %v1116, 2
    %vm1118 = vcmp.gt.s32.totalorder 0, %v1117
    %v1119 = vsel %vm1118, 0, %v1117
    %v1120 = vsub.s32 32, %v1119
    %v1121 = vshll.u32 %v1112, %v1119
    %v1122 = vshrl.u32 %v1104, %v1120
    %v1123 = vor.u32 %v1121, %v1122
    %v1124 = vsub.s32 4294967266, %v1119
    %v1125 = vadd.s32 %v1124, 127
    %v1126 = vshll.u32 %v1125, 23
    %v1127 = vor.u32 4788187, %v1126
    %v1128 = vand.u32 2147483647, %v1127
    %v1130 = vcvt.s32.f32 %v1123
    %v1131 = vmul.f32 %v1130, %v1128
    %v1132 = vxor.u32 %v1131, 2147483648
    %v1133 = vsel %vm1050, %v1132, %v1131
    %v1134 = vsub.s32 4, %v1110
    %v1135 = vsel %vm1050, %v1134, %v1110
    %v1136 = vsel %vm1049, %v315, %v1133
    %v1137 = vsel %vm1049, 0, %v1135
    %v1138 = vcosq.f32.pop %v1136
    %v1139 = vsinq.f32.pop %v1136
    %vm1140 = vweird.f32 %v315
    %v1141 = vadd.s32 %v1137, 3
    %v1142 = vand.u32 %v1141, 3
    %vm1143 = vcmp.lt.s32.totalorder %v1142, 2
    %vm1144 = vcmp.eq.s32.totalorder %v1142, 0
    %v1145 = vxor.u32 %v1139, 2147483648
    %v1146 = vsel %vm1144, %v1138, %v1145
    %vm1147 = vcmp.eq.s32.totalorder %v1142, 2
    %v1148 = vxor.u32 %v1138, 2147483648
    %v1149 = vsel %vm1147, %v1148, %v1139
    %v1150 = vsel %vm1143, %v1146, %v1149
    %v1151 = vsel %vm1140, nan, %v1150
    %v1152 = vand.u32 2147483647, %v320
    %vm1153 = vcmp.le.f32.partialorder %v1152, 0.7853982
    %vm1154 = vcmp.lt.s32.totalorder %v320, 0
    %v1155 = vand.u32 %v320, 2139095040
    %v1156 = vshrl.u32 %v1155, 23
    %v1157 = vsub.s32 %v1156, 127
    %v1158 = vand.u32 2147483647, %v320
    %v1159 = vand.u32 %v1158, 8388607
    %v1160 = vor.u32 %v1159, 8388608
    %v1161 = vsub.s32 0, %v1160
    %v1162 = vadd.s32 %v1157, 1
    %vm1163 = vcmp.gt.s32.totalorder %v1162, 0
    %v1164 = vsel %vm1163, %v1162, 0
    %v1165 = vshrl.u32 %v1164, 5
    %v1166 = vand.u32 %v1164, 31
    %v1167 = vsub.s32 32, %v1166
    %v1168 = vshrl.u32 683565275, %v1167
    %v1169 = vshll.u32 683565275, %v1166
    %v1170 = vshrl.u32 2475754826, %v1167
    %v1171 = vor.u32 %v1169, %v1170
    %v1172 = vshll.u32 2475754826, %v1166
    %v1173 = vshrl.u32 2131351028, %v1167
    %v1174 = vor.u32 %v1172, %v1173
    %v1175 = vshll.u32 2131351028, %v1166
    %v1176 = vshrl.u32 2102212464, %v1167
    %v1177 = vor.u32 %v1175, %v1176
    %v1178 = vshll.u32 2102212464, %v1166
    %v1179 = vshrl.u32 920167782, %v1167
    %v1180 = vor.u32 %v1178, %v1179
    %v1181 = vshll.u32 920167782, %v1166
    %v1182 = vshrl.u32 1326507024, %v1167
    %v1183 = vor.u32 %v1181, %v1182
    %vm1184 = vcmp.lt.s32.totalorder %v1165, 1
    %vm1185 = vcmp.lt.s32.totalorder %v1165, 2
    %vm1186 = vcmp.lt.s32.totalorder %v1165, 3
    %vm1187 = vcmp.lt.s32.totalorder %v1165, 4
    %v1188 = vsel %vm1184, %v1168, %v1171
    %v1189 = vsel %vm1187, %v1177, 2102212464
    %v1190 = vsel %vm1186, %v1174, %v1189
    %v1191 = vsel %vm1185, %v1188, %v1190
    %v1192 = vsel %vm1184, %v1171, %v1174
    %v1193 = vsel %vm1187, %v1180, 920167782
    %v1194 = vsel %vm1186, %v1177, %v1193
    %v1195 = vsel %vm1185, %v1192, %v1194
    %v1196 = vsel %vm1184, %v1174, %v1177
    %v1197 = vsel %vm1187, %v1183, 1326507024
    %v1198 = vsel %vm1186, %v1180, %v1197
    %v1199 = vsel %vm1185, %v1196, %v1198
    %v1200 = vshll.u32 %v1160, 8
    %v1201 = vmul.u32.u64.compose %v1200, %v1199
    %v1202 = vextract.low.u32 %v1201
    %v1203 = vextract.high.u32 %v1201
    %v1204 = vmul.u32.u64.compose %v1200, %v1195
    %v1205 = vextract.low.u32 %v1204
    %v1206 = vextract.high.u32 %v1204
    %v1207 = vmul.u32 %v1200, %v1191
    %v1208 = vadd.s32 %v1203, %v1205
    %vm1209 = vc.u32 %v1203, %v1205
    %v1210 = vadd.s32 %v1206, 1
    %v1211 = vsel %vm1209, %v1210, %v1206
    %v1212 = vadd.s32 %v1207, %v1211
    %v1213 = vadd.s32 %v1212, 536870912
    %v1214 = vshrl.u32 %v1213, 30
    %v1215 = vshll.u32 %v1214, 30
    %v1216 = vsub.s32 %v1212, %v1215
    %vm1217 = vcmp.lt.s32.totalorder %v1216, 0
    %v1218 = vsub.s32 0, %v1216
    %v1219 = vsel %vm1217, %v1218, %v1216
    %v1220 = vclz %v1219
    %v1221 = vsub.s32 %v1220, 2
    %vm1222 = vcmp.gt.s32.totalorder 0, %v1221
    %v1223 = vsel %vm1222, 0, %v1221
    %v1224 = vsub.s32 32, %v1223
    %v1225 = vshll.u32 %v1216, %v1223
    %v1226 = vshrl.u32 %v1208, %v1224
    %v1227 = vor.u32 %v1225, %v1226
    %v1228 = vsub.s32 4294967266, %v1223
    %v1229 = vadd.s32 %v1228, 127
    %v1230 = vshll.u32 %v1229, 23
    %v1231 = vor.u32 4788187, %v1230
    %v1232 = vand.u32 2147483647, %v1231
    %v1234 = vcvt.s32.f32 %v1227
    %v1235 = vmul.f32 %v1234, %v1232
    %v1236 = vxor.u32 %v1235, 2147483648
    %v1237 = vsel %vm1154, %v1236, %v1235
    %v1238 = vsub.s32 4, %v1214
    %v1239 = vsel %vm1154, %v1238, %v1214
    %v1240 = vsel %vm1153, %v320, %v1237
    %v1241 = vsel %vm1153, 0, %v1239
    %v1242 = vcosq.f32.pop %v1240
    %v1243 = vsinq.f32.pop %v1240
    %vm1244 = vweird.f32 %v320
    %v1245 = vadd.s32 %v1241, 3
    %v1246 = vand.u32 %v1245, 3
    %vm1247 = vcmp.lt.s32.totalorder %v1246, 2
    %vm1248 = vcmp.eq.s32.totalorder %v1246, 0
    %v1249 = vxor.u32 %v1243, 2147483648
    %v1250 = vsel %vm1248, %v1242, %v1249
    %vm1251 = vcmp.eq.s32.totalorder %v1246, 2
    %v1252 = vxor.u32 %v1242, 2147483648
    %v1253 = vsel %vm1251, %v1252, %v1243
    %v1254 = vsel %vm1247, %v1250, %v1253
    %v1255 = vsel %vm1244, nan, %v1254
    %v1256 = vand.u32 2147483647, %v325
    %vm1257 = vcmp.le.f32.partialorder %v1256, 0.7853982
    %vm1258 = vcmp.lt.s32.totalorder %v325, 0
    %v1259 = vand.u32 %v325, 2139095040
    %v1260 = vshrl.u32 %v1259, 23
    %v1261 = vsub.s32 %v1260, 127
    %v1262 = vand.u32 2147483647, %v325
    %v1263 = vand.u32 %v1262, 8388607
    %v1264 = vor.u32 %v1263, 8388608
    %v1265 = vsub.s32 0, %v1264
    %v1266 = vadd.s32 %v1261, 1
    %vm1267 = vcmp.gt.s32.totalorder %v1266, 0
    %v1268 = vsel %vm1267, %v1266, 0
    %v1269 = vshrl.u32 %v1268, 5
    %v1270 = vand.u32 %v1268, 31
    %v1271 = vsub.s32 32, %v1270
    %v1272 = vshrl.u32 683565275, %v1271
    %v1273 = vshll.u32 683565275, %v1270
    %v1274 = vshrl.u32 2475754826, %v1271
    %v1275 = vor.u32 %v1273, %v1274
    %v1276 = vshll.u32 2475754826, %v1270
    %v1277 = vshrl.u32 2131351028, %v1271
    %v1278 = vor.u32 %v1276, %v1277
    %v1279 = vshll.u32 2131351028, %v1270
    %v1280 = vshrl.u32 2102212464, %v1271
    %v1281 = vor.u32 %v1279, %v1280
    %v1282 = vshll.u32 2102212464, %v1270
    %v1283 = vshrl.u32 920167782, %v1271
    %v1284 = vor.u32 %v1282, %v1283
    %v1285 = vshll.u32 920167782, %v1270
    %v1286 = vshrl.u32 1326507024, %v1271
    %v1287 = vor.u32 %v1285, %v1286
    %vm1288 = vcmp.lt.s32.totalorder %v1269, 1
    %vm1289 = vcmp.lt.s32.totalorder %v1269, 2
    %vm1290 = vcmp.lt.s32.totalorder %v1269, 3
    %vm1291 = vcmp.lt.s32.totalorder %v1269, 4
    %v1292 = vsel %vm1288, %v1272, %v1275
    %v1293 = vsel %vm1291, %v1281, 2102212464
    %v1294 = vsel %vm1290, %v1278, %v1293
    %v1295 = vsel %vm1289, %v1292, %v1294
    %v1296 = vsel %vm1288, %v1275, %v1278
    %v1297 = vsel %vm1291, %v1284, 920167782
    %v1298 = vsel %vm1290, %v1281, %v1297
    %v1299 = vsel %vm1289, %v1296, %v1298
    %v1300 = vsel %vm1288, %v1278, %v1281
    %v1301 = vsel %vm1291, %v1287, 1326507024
    %v1302 = vsel %vm1290, %v1284, %v1301
    %v1303 = vsel %vm1289, %v1300, %v1302
    %v1304 = vshll.u32 %v1264, 8
    %v1305 = vmul.u32.u64.compose %v1304, %v1303
    %v1306 = vextract.low.u32 %v1305
    %v1307 = vextract.high.u32 %v1305
    %v1308 = vmul.u32.u64.compose %v1304, %v1299
    %v1309 = vextract.low.u32 %v1308
    %v1310 = vextract.high.u32 %v1308
    %v1311 = vmul.u32 %v1304, %v1295
    %v1312 = vadd.s32 %v1307, %v1309
    %vm1313 = vc.u32 %v1307, %v1309
    %v1314 = vadd.s32 %v1310, 1
    %v1315 = vsel %vm1313, %v1314, %v1310
    %v1316 = vadd.s32 %v1311, %v1315
    %v1317 = vadd.s32 %v1316, 536870912
    %v1318 = vshrl.u32 %v1317, 30
    %v1319 = vshll.u32 %v1318, 30
    %v1320 = vsub.s32 %v1316, %v1319
    %vm1321 = vcmp.lt.s32.totalorder %v1320, 0
    %v1322 = vsub.s32 0, %v1320
    %v1323 = vsel %vm1321, %v1322, %v1320
    %v1324 = vclz %v1323
    %v1325 = vsub.s32 %v1324, 2
    %vm1326 = vcmp.gt.s32.totalorder 0, %v1325
    %v1327 = vsel %vm1326, 0, %v1325
    %v1328 = vsub.s32 32, %v1327
    %v1329 = vshll.u32 %v1320, %v1327
    %v1330 = vshrl.u32 %v1312, %v1328
    %v1331 = vor.u32 %v1329, %v1330
    %v1332 = vsub.s32 4294967266, %v1327
    %v1333 = vadd.s32 %v1332, 127
    %v1334 = vshll.u32 %v1333, 23
    %v1335 = vor.u32 4788187, %v1334
    %v1336 = vand.u32 2147483647, %v1335
    %v1338 = vcvt.s32.f32 %v1331
    %v1339 = vmul.f32 %v1338, %v1336
    %v1340 = vxor.u32 %v1339, 2147483648
    %v1341 = vsel %vm1258, %v1340, %v1339
    %v1342 = vsub.s32 4, %v1318
    %v1343 = vsel %vm1258, %v1342, %v1318
    %v1344 = vsel %vm1257, %v325, %v1341
    %v1345 = vsel %vm1257, 0, %v1343
    %v1346 = vcosq.f32.pop %v1344
    %v1347 = vsinq.f32.pop %v1344
    %vm1348 = vweird.f32 %v325
    %v1349 = vadd.s32 %v1345, 3
    %v1350 = vand.u32 %v1349, 3
    %vm1351 = vcmp.lt.s32.totalorder %v1350, 2
    %vm1352 = vcmp.eq.s32.totalorder %v1350, 0
    %v1353 = vxor.u32 %v1347, 2147483648
    %v1354 = vsel %vm1352, %v1346, %v1353
    %vm1355 = vcmp.eq.s32.totalorder %v1350, 2
    %v1356 = vxor.u32 %v1346, 2147483648
    %v1357 = vsel %vm1355, %v1356, %v1347
    %v1358 = vsel %vm1351, %v1354, %v1357
    %v1359 = vsel %vm1348, nan, %v1358
    %v1360 = vand.u32 2147483647, %v330
    %vm1361 = vcmp.le.f32.partialorder %v1360, 0.7853982
    %vm1362 = vcmp.lt.s32.totalorder %v330, 0
    %v1363 = vand.u32 %v330, 2139095040
    %v1364 = vshrl.u32 %v1363, 23
    %v1365 = vsub.s32 %v1364, 127
    %v1366 = vand.u32 2147483647, %v330
    %v1367 = vand.u32 %v1366, 8388607
    %v1368 = vor.u32 %v1367, 8388608
    %v1369 = vsub.s32 0, %v1368
    %v1370 = vadd.s32 %v1365, 1
    %vm1371 = vcmp.gt.s32.totalorder %v1370, 0
    %v1372 = vsel %vm1371, %v1370, 0
    %v1373 = vshrl.u32 %v1372, 5
    %v1374 = vand.u32 %v1372, 31
    %v1375 = vsub.s32 32, %v1374
    %v1376 = vshrl.u32 683565275, %v1375
    %v1377 = vshll.u32 683565275, %v1374
    %v1378 = vshrl.u32 2475754826, %v1375
    %v1379 = vor.u32 %v1377, %v1378
    %v1380 = vshll.u32 2475754826, %v1374
    %v1381 = vshrl.u32 2131351028, %v1375
    %v1382 = vor.u32 %v1380, %v1381
    %v1383 = vshll.u32 2131351028, %v1374
    %v1384 = vshrl.u32 2102212464, %v1375
    %v1385 = vor.u32 %v1383, %v1384
    %v1386 = vshll.u32 2102212464, %v1374
    %v1387 = vshrl.u32 920167782, %v1375
    %v1388 = vor.u32 %v1386, %v1387
    %v1389 = vshll.u32 920167782, %v1374
    %v1390 = vshrl.u32 1326507024, %v1375
    %v1391 = vor.u32 %v1389, %v1390
    %vm1392 = vcmp.lt.s32.totalorder %v1373, 1
    %vm1393 = vcmp.lt.s32.totalorder %v1373, 2
    %vm1394 = vcmp.lt.s32.totalorder %v1373, 3
    %vm1395 = vcmp.lt.s32.totalorder %v1373, 4
    %v1396 = vsel %vm1392, %v1376, %v1379
    %v1397 = vsel %vm1395, %v1385, 2102212464
    %v1398 = vsel %vm1394, %v1382, %v1397
    %v1399 = vsel %vm1393, %v1396, %v1398
    %v1400 = vsel %vm1392, %v1379, %v1382
    %v1401 = vsel %vm1395, %v1388, 920167782
    %v1402 = vsel %vm1394, %v1385, %v1401
    %v1403 = vsel %vm1393, %v1400, %v1402
    %v1404 = vsel %vm1392, %v1382, %v1385
    %v1405 = vsel %vm1395, %v1391, 1326507024
    %v1406 = vsel %vm1394, %v1388, %v1405
    %v1407 = vsel %vm1393, %v1404, %v1406
    %v1408 = vshll.u32 %v1368, 8
    %v1409 = vmul.u32.u64.compose %v1408, %v1407
    %v1410 = vextract.low.u32 %v1409
    %v1411 = vextract.high.u32 %v1409
    %v1412 = vmul.u32.u64.compose %v1408, %v1403
    %v1413 = vextract.low.u32 %v1412
    %v1414 = vextract.high.u32 %v1412
    %v1415 = vmul.u32 %v1408, %v1399
    %v1416 = vadd.s32 %v1411, %v1413
    %vm1417 = vc.u32 %v1411, %v1413
    %v1418 = vadd.s32 %v1414, 1
    %v1419 = vsel %vm1417, %v1418, %v1414
    %v1420 = vadd.s32 %v1415, %v1419
    %v1421 = vadd.s32 %v1420, 536870912
    %v1422 = vshrl.u32 %v1421, 30
    %v1423 = vshll.u32 %v1422, 30
    %v1424 = vsub.s32 %v1420, %v1423
    %vm1425 = vcmp.lt.s32.totalorder %v1424, 0
    %v1426 = vsub.s32 0, %v1424
    %v1427 = vsel %vm1425, %v1426, %v1424
    %v1428 = vclz %v1427
    %v1429 = vsub.s32 %v1428, 2
    %vm1430 = vcmp.gt.s32.totalorder 0, %v1429
    %v1431 = vsel %vm1430, 0, %v1429
    %v1432 = vsub.s32 32, %v1431
    %v1433 = vshll.u32 %v1424, %v1431
    %v1434 = vshrl.u32 %v1416, %v1432
    %v1435 = vor.u32 %v1433, %v1434
    %v1436 = vsub.s32 4294967266, %v1431
    %v1437 = vadd.s32 %v1436, 127
    %v1438 = vshll.u32 %v1437, 23
    %v1439 = vor.u32 4788187, %v1438
    %v1440 = vand.u32 2147483647, %v1439
    %v1442 = vcvt.s32.f32 %v1435
    %v1443 = vmul.f32 %v1442, %v1440
    %v1444 = vxor.u32 %v1443, 2147483648
    %v1445 = vsel %vm1362, %v1444, %v1443
    %v1446 = vsub.s32 4, %v1422
    %v1447 = vsel %vm1362, %v1446, %v1422
    %v1448 = vsel %vm1361, %v330, %v1445
    %v1449 = vsel %vm1361, 0, %v1447
    %v1450 = vcosq.f32.pop %v1448
    %v1451 = vsinq.f32.pop %v1448
    %vm1452 = vweird.f32 %v330
    %v1453 = vadd.s32 %v1449, 3
    %v1454 = vand.u32 %v1453, 3
    %vm1455 = vcmp.lt.s32.totalorder %v1454, 2
    %vm1456 = vcmp.eq.s32.totalorder %v1454, 0
    %v1457 = vxor.u32 %v1451, 2147483648
    %v1458 = vsel %vm1456, %v1450, %v1457
    %vm1459 = vcmp.eq.s32.totalorder %v1454, 2
    %v1460 = vxor.u32 %v1450, 2147483648
    %v1461 = vsel %vm1459, %v1460, %v1451
    %v1462 = vsel %vm1455, %v1458, %v1461
    %v1463 = vsel %vm1452, nan, %v1462
    %v1464 = vand.u32 2147483647, %v335
    %vm1465 = vcmp.le.f32.partialorder %v1464, 0.7853982
    %vm1466 = vcmp.lt.s32.totalorder %v335, 0
    %v1467 = vand.u32 %v335, 2139095040
    %v1468 = vshrl.u32 %v1467, 23
    %v1469 = vsub.s32 %v1468, 127
    %v1470 = vand.u32 2147483647, %v335
    %v1471 = vand.u32 %v1470, 8388607
    %v1472 = vor.u32 %v1471, 8388608
    %v1473 = vsub.s32 0, %v1472
    %v1474 = vadd.s32 %v1469, 1
    %vm1475 = vcmp.gt.s32.totalorder %v1474, 0
    %v1476 = vsel %vm1475, %v1474, 0
    %v1477 = vshrl.u32 %v1476, 5
    %v1478 = vand.u32 %v1476, 31
    %v1479 = vsub.s32 32, %v1478
    %v1480 = vshrl.u32 683565275, %v1479
    %v1481 = vshll.u32 683565275, %v1478
    %v1482 = vshrl.u32 2475754826, %v1479
    %v1483 = vor.u32 %v1481, %v1482
    %v1484 = vshll.u32 2475754826, %v1478
    %v1485 = vshrl.u32 2131351028, %v1479
    %v1486 = vor.u32 %v1484, %v1485
    %v1487 = vshll.u32 2131351028, %v1478
    %v1488 = vshrl.u32 2102212464, %v1479
    %v1489 = vor.u32 %v1487, %v1488
    %v1490 = vshll.u32 2102212464, %v1478
    %v1491 = vshrl.u32 920167782, %v1479
    %v1492 = vor.u32 %v1490, %v1491
    %v1493 = vshll.u32 920167782, %v1478
    %v1494 = vshrl.u32 1326507024, %v1479
    %v1495 = vor.u32 %v1493, %v1494
    %vm1496 = vcmp.lt.s32.totalorder %v1477, 1
    %vm1497 = vcmp.lt.s32.totalorder %v1477, 2
    %vm1498 = vcmp.lt.s32.totalorder %v1477, 3
    %vm1499 = vcmp.lt.s32.totalorder %v1477, 4
    %v1500 = vsel %vm1496, %v1480, %v1483
    %v1501 = vsel %vm1499, %v1489, 2102212464
    %v1502 = vsel %vm1498, %v1486, %v1501
    %v1503 = vsel %vm1497, %v1500, %v1502
    %v1504 = vsel %vm1496, %v1483, %v1486
    %v1505 = vsel %vm1499, %v1492, 920167782
    %v1506 = vsel %vm1498, %v1489, %v1505
    %v1507 = vsel %vm1497, %v1504, %v1506
    %v1508 = vsel %vm1496, %v1486, %v1489
    %v1509 = vsel %vm1499, %v1495, 1326507024
    %v1510 = vsel %vm1498, %v1492, %v1509
    %v1511 = vsel %vm1497, %v1508, %v1510
    %v1512 = vshll.u32 %v1472, 8
    %v1513 = vmul.u32.u64.compose %v1512, %v1511
    %v1514 = vextract.low.u32 %v1513
    %v1515 = vextract.high.u32 %v1513
    %v1516 = vmul.u32.u64.compose %v1512, %v1507
    %v1517 = vextract.low.u32 %v1516
    %v1518 = vextract.high.u32 %v1516
    %v1519 = vmul.u32 %v1512, %v1503
    %v1520 = vadd.s32 %v1515, %v1517
    %vm1521 = vc.u32 %v1515, %v1517
    %v1522 = vadd.s32 %v1518, 1
    %v1523 = vsel %vm1521, %v1522, %v1518
    %v1524 = vadd.s32 %v1519, %v1523
    %v1525 = vadd.s32 %v1524, 536870912
    %v1526 = vshrl.u32 %v1525, 30
    %v1527 = vshll.u32 %v1526, 30
    %v1528 = vsub.s32 %v1524, %v1527
    %vm1529 = vcmp.lt.s32.totalorder %v1528, 0
    %v1530 = vsub.s32 0, %v1528
    %v1531 = vsel %vm1529, %v1530, %v1528
    %v1532 = vclz %v1531
    %v1533 = vsub.s32 %v1532, 2
    %vm1534 = vcmp.gt.s32.totalorder 0, %v1533
    %v1535 = vsel %vm1534, 0, %v1533
    %v1536 = vsub.s32 32, %v1535
    %v1537 = vshll.u32 %v1528, %v1535
    %v1538 = vshrl.u32 %v1520, %v1536
    %v1539 = vor.u32 %v1537, %v1538
    %v1540 = vsub.s32 4294967266, %v1535
    %v1541 = vadd.s32 %v1540, 127
    %v1542 = vshll.u32 %v1541, 23
    %v1543 = vor.u32 4788187, %v1542
    %v1544 = vand.u32 2147483647, %v1543
    %v1546 = vcvt.s32.f32 %v1539
    %v1547 = vmul.f32 %v1546, %v1544
    %v1548 = vxor.u32 %v1547, 2147483648
    %v1549 = vsel %vm1466, %v1548, %v1547
    %v1550 = vsub.s32 4, %v1526
    %v1551 = vsel %vm1466, %v1550, %v1526
    %v1552 = vsel %vm1465, %v335, %v1549
    %v1553 = vsel %vm1465, 0, %v1551
    %v1554 = vcosq.f32.pop %v1552
    %v1555 = vsinq.f32.pop %v1552
    %vm1556 = vweird.f32 %v335
    %v1557 = vadd.s32 %v1553, 3
    %v1558 = vand.u32 %v1557, 3
    %vm1559 = vcmp.lt.s32.totalorder %v1558, 2
    %vm1560 = vcmp.eq.s32.totalorder %v1558, 0
    %v1561 = vxor.u32 %v1555, 2147483648
    %v1562 = vsel %vm1560, %v1554, %v1561
    %vm1563 = vcmp.eq.s32.totalorder %v1558, 2
    %v1564 = vxor.u32 %v1554, 2147483648
    %v1565 = vsel %vm1563, %v1564, %v1555
    %v1566 = vsel %vm1559, %v1562, %v1565
    %v1567 = vsel %vm1556, nan, %v1566
    %v1568 = vand.u32 2147483647, %v340
    %vm1569 = vcmp.le.f32.partialorder %v1568, 0.7853982
    %vm1570 = vcmp.lt.s32.totalorder %v340, 0
    %v1571 = vand.u32 %v340, 2139095040
    %v1572 = vshrl.u32 %v1571, 23
    %v1573 = vsub.s32 %v1572, 127
    %v1574 = vand.u32 2147483647, %v340
    %v1575 = vand.u32 %v1574, 8388607
    %v1576 = vor.u32 %v1575, 8388608
    %v1577 = vsub.s32 0, %v1576
    %v1578 = vadd.s32 %v1573, 1
    %vm1579 = vcmp.gt.s32.totalorder %v1578, 0
    %v1580 = vsel %vm1579, %v1578, 0
    %v1581 = vshrl.u32 %v1580, 5
    %v1582 = vand.u32 %v1580, 31
    %v1583 = vsub.s32 32, %v1582
    %v1584 = vshrl.u32 683565275, %v1583
    %v1585 = vshll.u32 683565275, %v1582
    %v1586 = vshrl.u32 2475754826, %v1583
    %v1587 = vor.u32 %v1585, %v1586
    %v1588 = vshll.u32 2475754826, %v1582
    %v1589 = vshrl.u32 2131351028, %v1583
    %v1590 = vor.u32 %v1588, %v1589
    %v1591 = vshll.u32 2131351028, %v1582
    %v1592 = vshrl.u32 2102212464, %v1583
    %v1593 = vor.u32 %v1591, %v1592
    %v1594 = vshll.u32 2102212464, %v1582
    %v1595 = vshrl.u32 920167782, %v1583
    %v1596 = vor.u32 %v1594, %v1595
    %v1597 = vshll.u32 920167782, %v1582
    %v1598 = vshrl.u32 1326507024, %v1583
    %v1599 = vor.u32 %v1597, %v1598
    %vm1600 = vcmp.lt.s32.totalorder %v1581, 1
    %vm1601 = vcmp.lt.s32.totalorder %v1581, 2
    %vm1602 = vcmp.lt.s32.totalorder %v1581, 3
    %vm1603 = vcmp.lt.s32.totalorder %v1581, 4
    %v1604 = vsel %vm1600, %v1584, %v1587
    %v1605 = vsel %vm1603, %v1593, 2102212464
    %v1606 = vsel %vm1602, %v1590, %v1605
    %v1607 = vsel %vm1601, %v1604, %v1606
    %v1608 = vsel %vm1600, %v1587, %v1590
    %v1609 = vsel %vm1603, %v1596, 920167782
    %v1610 = vsel %vm1602, %v1593, %v1609
    %v1611 = vsel %vm1601, %v1608, %v1610
    %v1612 = vsel %vm1600, %v1590, %v1593
    %v1613 = vsel %vm1603, %v1599, 1326507024
    %v1614 = vsel %vm1602, %v1596, %v1613
    %v1615 = vsel %vm1601, %v1612, %v1614
    %v1616 = vshll.u32 %v1576, 8
    %v1617 = vmul.u32.u64.compose %v1616, %v1615
    %v1618 = vextract.low.u32 %v1617
    %v1619 = vextract.high.u32 %v1617
    %v1620 = vmul.u32.u64.compose %v1616, %v1611
    %v1621 = vextract.low.u32 %v1620
    %v1622 = vextract.high.u32 %v1620
    %v1623 = vmul.u32 %v1616, %v1607
    %v1624 = vadd.s32 %v1619, %v1621
    %vm1625 = vc.u32 %v1619, %v1621
    %v1626 = vadd.s32 %v1622, 1
    %v1627 = vsel %vm1625, %v1626, %v1622
    %v1628 = vadd.s32 %v1623, %v1627
    %v1629 = vadd.s32 %v1628, 536870912
    %v1630 = vshrl.u32 %v1629, 30
    %v1631 = vshll.u32 %v1630, 30
    %v1632 = vsub.s32 %v1628, %v1631
    %vm1633 = vcmp.lt.s32.totalorder %v1632, 0
    %v1634 = vsub.s32 0, %v1632
    %v1635 = vsel %vm1633, %v1634, %v1632
    %v1636 = vclz %v1635
    %v1637 = vsub.s32 %v1636, 2
    %vm1638 = vcmp.gt.s32.totalorder 0, %v1637
    %v1639 = vsel %vm1638, 0, %v1637
    %v1640 = vsub.s32 32, %v1639
    %v1641 = vshll.u32 %v1632, %v1639
    %v1642 = vshrl.u32 %v1624, %v1640
    %v1643 = vor.u32 %v1641, %v1642
    %v1644 = vsub.s32 4294967266, %v1639
    %v1645 = vadd.s32 %v1644, 127
    %v1646 = vshll.u32 %v1645, 23
    %v1647 = vor.u32 4788187, %v1646
    %v1648 = vand.u32 2147483647, %v1647
    %v1650 = vcvt.s32.f32 %v1643
    %v1651 = vmul.f32 %v1650, %v1648
    %v1652 = vxor.u32 %v1651, 2147483648
    %v1653 = vsel %vm1570, %v1652, %v1651
    %v1654 = vsub.s32 4, %v1630
    %v1655 = vsel %vm1570, %v1654, %v1630
    %v1656 = vsel %vm1569, %v340, %v1653
    %v1657 = vsel %vm1569, 0, %v1655
    %v1658 = vcosq.f32.pop %v1656
    %v1659 = vsinq.f32.pop %v1656
    %vm1660 = vweird.f32 %v340
    %v1661 = vadd.s32 %v1657, 3
    %v1662 = vand.u32 %v1661, 3
    %vm1663 = vcmp.lt.s32.totalorder %v1662, 2
    %vm1664 = vcmp.eq.s32.totalorder %v1662, 0
    %v1665 = vxor.u32 %v1659, 2147483648
    %v1666 = vsel %vm1664, %v1658, %v1665
    %vm1667 = vcmp.eq.s32.totalorder %v1662, 2
    %v1668 = vxor.u32 %v1658, 2147483648
    %v1669 = vsel %vm1667, %v1668, %v1659
    %v1670 = vsel %vm1663, %v1666, %v1669
    %v1671 = vsel %vm1660, nan, %v1670
    %v1672 = vand.u32 2147483647, %v345
    %vm1673 = vcmp.le.f32.partialorder %v1672, 0.7853982
    %vm1674 = vcmp.lt.s32.totalorder %v345, 0
    %v1675 = vand.u32 %v345, 2139095040
    %v1676 = vshrl.u32 %v1675, 23
    %v1677 = vsub.s32 %v1676, 127
    %v1678 = vand.u32 2147483647, %v345
    %v1679 = vand.u32 %v1678, 8388607
    %v1680 = vor.u32 %v1679, 8388608
    %v1681 = vsub.s32 0, %v1680
    %v1682 = vadd.s32 %v1677, 1
    %vm1683 = vcmp.gt.s32.totalorder %v1682, 0
    %v1684 = vsel %vm1683, %v1682, 0
    %v1685 = vshrl.u32 %v1684, 5
    %v1686 = vand.u32 %v1684, 31
    %v1687 = vsub.s32 32, %v1686
    %v1688 = vshrl.u32 683565275, %v1687
    %v1689 = vshll.u32 683565275, %v1686
    %v1690 = vshrl.u32 2475754826, %v1687
    %v1691 = vor.u32 %v1689, %v1690
    %v1692 = vshll.u32 2475754826, %v1686
    %v1693 = vshrl.u32 2131351028, %v1687
    %v1694 = vor.u32 %v1692, %v1693
    %v1695 = vshll.u32 2131351028, %v1686
    %v1696 = vshrl.u32 2102212464, %v1687
    %v1697 = vor.u32 %v1695, %v1696
    %v1698 = vshll.u32 2102212464, %v1686
    %v1699 = vshrl.u32 920167782, %v1687
    %v1700 = vor.u32 %v1698, %v1699
    %v1701 = vshll.u32 920167782, %v1686
    %v1702 = vshrl.u32 1326507024, %v1687
    %v1703 = vor.u32 %v1701, %v1702
    %vm1704 = vcmp.lt.s32.totalorder %v1685, 1
    %vm1705 = vcmp.lt.s32.totalorder %v1685, 2
    %vm1706 = vcmp.lt.s32.totalorder %v1685, 3
    %vm1707 = vcmp.lt.s32.totalorder %v1685, 4
    %v1708 = vsel %vm1704, %v1688, %v1691
    %v1709 = vsel %vm1707, %v1697, 2102212464
    %v1710 = vsel %vm1706, %v1694, %v1709
    %v1711 = vsel %vm1705, %v1708, %v1710
    %v1712 = vsel %vm1704, %v1691, %v1694
    %v1713 = vsel %vm1707, %v1700, 920167782
    %v1714 = vsel %vm1706, %v1697, %v1713
    %v1715 = vsel %vm1705, %v1712, %v1714
    %v1716 = vsel %vm1704, %v1694, %v1697
    %v1717 = vsel %vm1707, %v1703, 1326507024
    %v1718 = vsel %vm1706, %v1700, %v1717
    %v1719 = vsel %vm1705, %v1716, %v1718
    %v1720 = vshll.u32 %v1680, 8
    %v1721 = vmul.u32.u64.compose %v1720, %v1719
    %v1722 = vextract.low.u32 %v1721
    %v1723 = vextract.high.u32 %v1721
    %v1724 = vmul.u32.u64.compose %v1720, %v1715
    %v1725 = vextract.low.u32 %v1724
    %v1726 = vextract.high.u32 %v1724
    %v1727 = vmul.u32 %v1720, %v1711
    %v1728 = vadd.s32 %v1723, %v1725
    %vm1729 = vc.u32 %v1723, %v1725
    %v1730 = vadd.s32 %v1726, 1
    %v1731 = vsel %vm1729, %v1730, %v1726
    %v1732 = vadd.s32 %v1727, %v1731
    %v1733 = vadd.s32 %v1732, 536870912
    %v1734 = vshrl.u32 %v1733, 30
    %v1735 = vshll.u32 %v1734, 30
    %v1736 = vsub.s32 %v1732, %v1735
    %vm1737 = vcmp.lt.s32.totalorder %v1736, 0
    %v1738 = vsub.s32 0, %v1736
    %v1739 = vsel %vm1737, %v1738, %v1736
    %v1740 = vclz %v1739
    %v1741 = vsub.s32 %v1740, 2
    %vm1742 = vcmp.gt.s32.totalorder 0, %v1741
    %v1743 = vsel %vm1742, 0, %v1741
    %v1744 = vsub.s32 32, %v1743
    %v1745 = vshll.u32 %v1736, %v1743
    %v1746 = vshrl.u32 %v1728, %v1744
    %v1747 = vor.u32 %v1745, %v1746
    %v1748 = vsub.s32 4294967266, %v1743
    %v1749 = vadd.s32 %v1748, 127
    %v1750 = vshll.u32 %v1749, 23
    %v1751 = vor.u32 4788187, %v1750
    %v1752 = vand.u32 2147483647, %v1751
    %v1754 = vcvt.s32.f32 %v1747
    %v1755 = vmul.f32 %v1754, %v1752
    %v1756 = vxor.u32 %v1755, 2147483648
    %v1757 = vsel %vm1674, %v1756, %v1755
    %v1758 = vsub.s32 4, %v1734
    %v1759 = vsel %vm1674, %v1758, %v1734
    %v1760 = vsel %vm1673, %v345, %v1757
    %v1761 = vsel %vm1673, 0, %v1759
    %v1762 = vcosq.f32.pop %v1760
    %v1763 = vsinq.f32.pop %v1760
    %vm1764 = vweird.f32 %v345
    %v1765 = vadd.s32 %v1761, 3
    %v1766 = vand.u32 %v1765, 3
    %vm1767 = vcmp.lt.s32.totalorder %v1766, 2
    %vm1768 = vcmp.eq.s32.totalorder %v1766, 0
    %v1769 = vxor.u32 %v1763, 2147483648
    %v1770 = vsel %vm1768, %v1762, %v1769
    %vm1771 = vcmp.eq.s32.totalorder %v1766, 2
    %v1772 = vxor.u32 %v1762, 2147483648
    %v1773 = vsel %vm1771, %v1772, %v1763
    %v1774 = vsel %vm1767, %v1770, %v1773
    %v1775 = vsel %vm1764, nan, %v1774
    %v1776 = vand.u32 2147483647, %v350
    %vm1777 = vcmp.le.f32.partialorder %v1776, 0.7853982
    %vm1778 = vcmp.lt.s32.totalorder %v350, 0
    %v1779 = vand.u32 %v350, 2139095040
    %v1780 = vshrl.u32 %v1779, 23
    %v1781 = vsub.s32 %v1780, 127
    %v1782 = vand.u32 2147483647, %v350
    %v1783 = vand.u32 %v1782, 8388607
    %v1784 = vor.u32 %v1783, 8388608
    %v1785 = vsub.s32 0, %v1784
    %v1786 = vadd.s32 %v1781, 1
    %vm1787 = vcmp.gt.s32.totalorder %v1786, 0
    %v1788 = vsel %vm1787, %v1786, 0
    %v1789 = vshrl.u32 %v1788, 5
    %v1790 = vand.u32 %v1788, 31
    %v1791 = vsub.s32 32, %v1790
    %v1792 = vshrl.u32 683565275, %v1791
    %v1793 = vshll.u32 683565275, %v1790
    %v1794 = vshrl.u32 2475754826, %v1791
    %v1795 = vor.u32 %v1793, %v1794
    %v1796 = vshll.u32 2475754826, %v1790
    %v1797 = vshrl.u32 2131351028, %v1791
    %v1798 = vor.u32 %v1796, %v1797
    %v1799 = vshll.u32 2131351028, %v1790
    %v1800 = vshrl.u32 2102212464, %v1791
    %v1801 = vor.u32 %v1799, %v1800
    %v1802 = vshll.u32 2102212464, %v1790
    %v1803 = vshrl.u32 920167782, %v1791
    %v1804 = vor.u32 %v1802, %v1803
    %v1805 = vshll.u32 920167782, %v1790
    %v1806 = vshrl.u32 1326507024, %v1791
    %v1807 = vor.u32 %v1805, %v1806
    %vm1808 = vcmp.lt.s32.totalorder %v1789, 1
    %vm1809 = vcmp.lt.s32.totalorder %v1789, 2
    %vm1810 = vcmp.lt.s32.totalorder %v1789, 3
    %vm1811 = vcmp.lt.s32.totalorder %v1789, 4
    %v1812 = vsel %vm1808, %v1792, %v1795
    %v1813 = vsel %vm1811, %v1801, 2102212464
    %v1814 = vsel %vm1810, %v1798, %v1813
    %v1815 = vsel %vm1809, %v1812, %v1814
    %v1816 = vsel %vm1808, %v1795, %v1798
    %v1817 = vsel %vm1811, %v1804, 920167782
    %v1818 = vsel %vm1810, %v1801, %v1817
    %v1819 = vsel %vm1809, %v1816, %v1818
    %v1820 = vsel %vm1808, %v1798, %v1801
    %v1821 = vsel %vm1811, %v1807, 1326507024
    %v1822 = vsel %vm1810, %v1804, %v1821
    %v1823 = vsel %vm1809, %v1820, %v1822
    %v1824 = vshll.u32 %v1784, 8
    %v1825 = vmul.u32.u64.compose %v1824, %v1823
    %v1826 = vextract.low.u32 %v1825
    %v1827 = vextract.high.u32 %v1825
    %v1828 = vmul.u32.u64.compose %v1824, %v1819
    %v1829 = vextract.low.u32 %v1828
    %v1830 = vextract.high.u32 %v1828
    %v1831 = vmul.u32 %v1824, %v1815
    %v1832 = vadd.s32 %v1827, %v1829
    %vm1833 = vc.u32 %v1827, %v1829
    %v1834 = vadd.s32 %v1830, 1
    %v1835 = vsel %vm1833, %v1834, %v1830
    %v1836 = vadd.s32 %v1831, %v1835
    %v1837 = vadd.s32 %v1836, 536870912
    %v1838 = vshrl.u32 %v1837, 30
    %v1839 = vshll.u32 %v1838, 30
    %v1840 = vsub.s32 %v1836, %v1839
    %vm1841 = vcmp.lt.s32.totalorder %v1840, 0
    %v1842 = vsub.s32 0, %v1840
    %v1843 = vsel %vm1841, %v1842, %v1840
    %v1844 = vclz %v1843
    %v1845 = vsub.s32 %v1844, 2
    %vm1846 = vcmp.gt.s32.totalorder 0, %v1845
    %v1847 = vsel %vm1846, 0, %v1845
    %v1848 = vsub.s32 32, %v1847
    %v1849 = vshll.u32 %v1840, %v1847
    %v1850 = vshrl.u32 %v1832, %v1848
    %v1851 = vor.u32 %v1849, %v1850
    %v1852 = vsub.s32 4294967266, %v1847
    %v1853 = vadd.s32 %v1852, 127
    %v1854 = vshll.u32 %v1853, 23
    %v1855 = vor.u32 4788187, %v1854
    %v1856 = vand.u32 2147483647, %v1855
    %v1858 = vcvt.s32.f32 %v1851
    %v1859 = vmul.f32 %v1858, %v1856
    %v1860 = vxor.u32 %v1859, 2147483648
    %v1861 = vsel %vm1778, %v1860, %v1859
    %v1862 = vsub.s32 4, %v1838
    %v1863 = vsel %vm1778, %v1862, %v1838
    %v1864 = vsel %vm1777, %v350, %v1861
    %v1865 = vsel %vm1777, 0, %v1863
    %v1866 = vcosq.f32.pop %v1864
    %v1867 = vsinq.f32.pop %v1864
    %vm1868 = vweird.f32 %v350
    %v1869 = vadd.s32 %v1865, 3
    %v1870 = vand.u32 %v1869, 3
    %vm1871 = vcmp.lt.s32.totalorder %v1870, 2
    %vm1872 = vcmp.eq.s32.totalorder %v1870, 0
    %v1873 = vxor.u32 %v1867, 2147483648
    %v1874 = vsel %vm1872, %v1866, %v1873
    %vm1875 = vcmp.eq.s32.totalorder %v1870, 2
    %v1876 = vxor.u32 %v1866, 2147483648
    %v1877 = vsel %vm1875, %v1876, %v1867
    %v1878 = vsel %vm1871, %v1874, %v1877
    %v1879 = vsel %vm1868, nan, %v1878
    %v1880 = vand.u32 2147483647, %v355
    %vm1881 = vcmp.le.f32.partialorder %v1880, 0.7853982
    %vm1882 = vcmp.lt.s32.totalorder %v355, 0
    %v1883 = vand.u32 %v355, 2139095040
    %v1884 = vshrl.u32 %v1883, 23
    %v1885 = vsub.s32 %v1884, 127
    %v1886 = vand.u32 2147483647, %v355
    %v1887 = vand.u32 %v1886, 8388607
    %v1888 = vor.u32 %v1887, 8388608
    %v1889 = vsub.s32 0, %v1888
    %v1890 = vadd.s32 %v1885, 1
    %vm1891 = vcmp.gt.s32.totalorder %v1890, 0
    %v1892 = vsel %vm1891, %v1890, 0
    %v1893 = vshrl.u32 %v1892, 5
    %v1894 = vand.u32 %v1892, 31
    %v1895 = vsub.s32 32, %v1894
    %v1896 = vshrl.u32 683565275, %v1895
    %v1897 = vshll.u32 683565275, %v1894
    %v1898 = vshrl.u32 2475754826, %v1895
    %v1899 = vor.u32 %v1897, %v1898
    %v1900 = vshll.u32 2475754826, %v1894
    %v1901 = vshrl.u32 2131351028, %v1895
    %v1902 = vor.u32 %v1900, %v1901
    %v1903 = vshll.u32 2131351028, %v1894
    %v1904 = vshrl.u32 2102212464, %v1895
    %v1905 = vor.u32 %v1903, %v1904
    %v1906 = vshll.u32 2102212464, %v1894
    %v1907 = vshrl.u32 920167782, %v1895
    %v1908 = vor.u32 %v1906, %v1907
    %v1909 = vshll.u32 920167782, %v1894
    %v1910 = vshrl.u32 1326507024, %v1895
    %v1911 = vor.u32 %v1909, %v1910
    %vm1912 = vcmp.lt.s32.totalorder %v1893, 1
    %vm1913 = vcmp.lt.s32.totalorder %v1893, 2
    %vm1914 = vcmp.lt.s32.totalorder %v1893, 3
    %vm1915 = vcmp.lt.s32.totalorder %v1893, 4
    %v1916 = vsel %vm1912, %v1896, %v1899
    %v1917 = vsel %vm1915, %v1905, 2102212464
    %v1918 = vsel %vm1914, %v1902, %v1917
    %v1919 = vsel %vm1913, %v1916, %v1918
    %v1920 = vsel %vm1912, %v1899, %v1902
    %v1921 = vsel %vm1915, %v1908, 920167782
    %v1922 = vsel %vm1914, %v1905, %v1921
    %v1923 = vsel %vm1913, %v1920, %v1922
    %v1924 = vsel %vm1912, %v1902, %v1905
    %v1925 = vsel %vm1915, %v1911, 1326507024
    %v1926 = vsel %vm1914, %v1908, %v1925
    %v1927 = vsel %vm1913, %v1924, %v1926
    %v1928 = vshll.u32 %v1888, 8
    %v1929 = vmul.u32.u64.compose %v1928, %v1927
    %v1930 = vextract.low.u32 %v1929
    %v1931 = vextract.high.u32 %v1929
    %v1932 = vmul.u32.u64.compose %v1928, %v1923
    %v1933 = vextract.low.u32 %v1932
    %v1934 = vextract.high.u32 %v1932
    %v1935 = vmul.u32 %v1928, %v1919
    %v1936 = vadd.s32 %v1931, %v1933
    %vm1937 = vc.u32 %v1931, %v1933
    %v1938 = vadd.s32 %v1934, 1
    %v1939 = vsel %vm1937, %v1938, %v1934
    %v1940 = vadd.s32 %v1935, %v1939
    %v1941 = vadd.s32 %v1940, 536870912
    %v1942 = vshrl.u32 %v1941, 30
    %v1943 = vshll.u32 %v1942, 30
    %v1944 = vsub.s32 %v1940, %v1943
    %vm1945 = vcmp.lt.s32.totalorder %v1944, 0
    %v1946 = vsub.s32 0, %v1944
    %v1947 = vsel %vm1945, %v1946, %v1944
    %v1948 = vclz %v1947
    %v1949 = vsub.s32 %v1948, 2
    %vm1950 = vcmp.gt.s32.totalorder 0, %v1949
    %v1951 = vsel %vm1950, 0, %v1949
    %v1952 = vsub.s32 32, %v1951
    %v1953 = vshll.u32 %v1944, %v1951
    %v1954 = vshrl.u32 %v1936, %v1952
    %v1955 = vor.u32 %v1953, %v1954
    %v1956 = vsub.s32 4294967266, %v1951
    %v1957 = vadd.s32 %v1956, 127
    %v1958 = vshll.u32 %v1957, 23
    %v1959 = vor.u32 4788187, %v1958
    %v1960 = vand.u32 2147483647, %v1959
    %v1962 = vcvt.s32.f32 %v1955
    %v1963 = vmul.f32 %v1962, %v1960
    %v1964 = vxor.u32 %v1963, 2147483648
    %v1965 = vsel %vm1882, %v1964, %v1963
    %v1966 = vsub.s32 4, %v1942
    %v1967 = vsel %vm1882, %v1966, %v1942
    %v1968 = vsel %vm1881, %v355, %v1965
    %v1969 = vsel %vm1881, 0, %v1967
    %v1970 = vcosq.f32.pop %v1968
    %v1971 = vsinq.f32.pop %v1968
    %vm1972 = vweird.f32 %v355
    %v1973 = vadd.s32 %v1969, 3
    %v1974 = vand.u32 %v1973, 3
    %vm1975 = vcmp.lt.s32.totalorder %v1974, 2
    %vm1976 = vcmp.eq.s32.totalorder %v1974, 0
    %v1977 = vxor.u32 %v1971, 2147483648
    %v1978 = vsel %vm1976, %v1970, %v1977
    %vm1979 = vcmp.eq.s32.totalorder %v1974, 2
    %v1980 = vxor.u32 %v1970, 2147483648
    %v1981 = vsel %vm1979, %v1980, %v1971
    %v1982 = vsel %vm1975, %v1978, %v1981
    %v1983 = vsel %vm1972, nan, %v1982
    %v1984 = vand.u32 2147483647, %v360
    %vm1985 = vcmp.le.f32.partialorder %v1984, 0.7853982
    %vm1986 = vcmp.lt.s32.totalorder %v360, 0
    %v1987 = vand.u32 %v360, 2139095040
    %v1988 = vshrl.u32 %v1987, 23
    %v1989 = vsub.s32 %v1988, 127
    %v1990 = vand.u32 2147483647, %v360
    %v1991 = vand.u32 %v1990, 8388607
    %v1992 = vor.u32 %v1991, 8388608
    %v1993 = vsub.s32 0, %v1992
    %v1994 = vadd.s32 %v1989, 1
    %vm1995 = vcmp.gt.s32.totalorder %v1994, 0
    %v1996 = vsel %vm1995, %v1994, 0
    %v1997 = vshrl.u32 %v1996, 5
    %v1998 = vand.u32 %v1996, 31
    %v1999 = vsub.s32 32, %v1998
    %v2000 = vshrl.u32 683565275, %v1999
    %v2001 = vshll.u32 683565275, %v1998
    %v2002 = vshrl.u32 2475754826, %v1999
    %v2003 = vor.u32 %v2001, %v2002
    %v2004 = vshll.u32 2475754826, %v1998
    %v2005 = vshrl.u32 2131351028, %v1999
    %v2006 = vor.u32 %v2004, %v2005
    %v2007 = vshll.u32 2131351028, %v1998
    %v2008 = vshrl.u32 2102212464, %v1999
    %v2009 = vor.u32 %v2007, %v2008
    %v2010 = vshll.u32 2102212464, %v1998
    %v2011 = vshrl.u32 920167782, %v1999
    %v2012 = vor.u32 %v2010, %v2011
    %v2013 = vshll.u32 920167782, %v1998
    %v2014 = vshrl.u32 1326507024, %v1999
    %v2015 = vor.u32 %v2013, %v2014
    %vm2016 = vcmp.lt.s32.totalorder %v1997, 1
    %vm2017 = vcmp.lt.s32.totalorder %v1997, 2
    %vm2018 = vcmp.lt.s32.totalorder %v1997, 3
    %vm2019 = vcmp.lt.s32.totalorder %v1997, 4
    %v2020 = vsel %vm2016, %v2000, %v2003
    %v2021 = vsel %vm2019, %v2009, 2102212464
    %v2022 = vsel %vm2018, %v2006, %v2021
    %v2023 = vsel %vm2017, %v2020, %v2022
    %v2024 = vsel %vm2016, %v2003, %v2006
    %v2025 = vsel %vm2019, %v2012, 920167782
    %v2026 = vsel %vm2018, %v2009, %v2025
    %v2027 = vsel %vm2017, %v2024, %v2026
    %v2028 = vsel %vm2016, %v2006, %v2009
    %v2029 = vsel %vm2019, %v2015, 1326507024
    %v2030 = vsel %vm2018, %v2012, %v2029
    %v2031 = vsel %vm2017, %v2028, %v2030
    %v2032 = vshll.u32 %v1992, 8
    %v2033 = vmul.u32.u64.compose %v2032, %v2031
    %v2034 = vextract.low.u32 %v2033
    %v2035 = vextract.high.u32 %v2033
    %v2036 = vmul.u32.u64.compose %v2032, %v2027
    %v2037 = vextract.low.u32 %v2036
    %v2038 = vextract.high.u32 %v2036
    %v2039 = vmul.u32 %v2032, %v2023
    %v2040 = vadd.s32 %v2035, %v2037
    %vm2041 = vc.u32 %v2035, %v2037
    %v2042 = vadd.s32 %v2038, 1
    %v2043 = vsel %vm2041, %v2042, %v2038
    %v2044 = vadd.s32 %v2039, %v2043
    %v2045 = vadd.s32 %v2044, 536870912
    %v2046 = vshrl.u32 %v2045, 30
    %v2047 = vshll.u32 %v2046, 30
    %v2048 = vsub.s32 %v2044, %v2047
    %vm2049 = vcmp.lt.s32.totalorder %v2048, 0
    %v2050 = vsub.s32 0, %v2048
    %v2051 = vsel %vm2049, %v2050, %v2048
    %v2052 = vclz %v2051
    %v2053 = vsub.s32 %v2052, 2
    %vm2054 = vcmp.gt.s32.totalorder 0, %v2053
    %v2055 = vsel %vm2054, 0, %v2053
    %v2056 = vsub.s32 32, %v2055
    %v2057 = vshll.u32 %v2048, %v2055
    %v2058 = vshrl.u32 %v2040, %v2056
    %v2059 = vor.u32 %v2057, %v2058
    %v2060 = vsub.s32 4294967266, %v2055
    %v2061 = vadd.s32 %v2060, 127
    %v2062 = vshll.u32 %v2061, 23
    %v2063 = vor.u32 4788187, %v2062
    %v2064 = vand.u32 2147483647, %v2063
    %v2066 = vcvt.s32.f32 %v2059
    %v2067 = vmul.f32 %v2066, %v2064
    %v2068 = vxor.u32 %v2067, 2147483648
    %v2069 = vsel %vm1986, %v2068, %v2067
    %v2070 = vsub.s32 4, %v2046
    %v2071 = vsel %vm1986, %v2070, %v2046
    %v2072 = vsel %vm1985, %v360, %v2069
    %v2073 = vsel %vm1985, 0, %v2071
    %v2074 = vcosq.f32.pop %v2072
    %v2075 = vsinq.f32.pop %v2072
    %vm2076 = vweird.f32 %v360
    %v2077 = vadd.s32 %v2073, 3
    %v2078 = vand.u32 %v2077, 3
    %vm2079 = vcmp.lt.s32.totalorder %v2078, 2
    %vm2080 = vcmp.eq.s32.totalorder %v2078, 0
    %v2081 = vxor.u32 %v2075, 2147483648
    %v2082 = vsel %vm2080, %v2074, %v2081
    %vm2083 = vcmp.eq.s32.totalorder %v2078, 2
    %v2084 = vxor.u32 %v2074, 2147483648
    %v2085 = vsel %vm2083, %v2084, %v2075
    %v2086 = vsel %vm2079, %v2082, %v2085
    %v2087 = vsel %vm2076, nan, %v2086
    %v2088 = vand.u32 2147483647, %v365
    %vm2089 = vcmp.le.f32.partialorder %v2088, 0.7853982
    %vm2090 = vcmp.lt.s32.totalorder %v365, 0
    %v2091 = vand.u32 %v365, 2139095040
    %v2092 = vshrl.u32 %v2091, 23
    %v2093 = vsub.s32 %v2092, 127
    %v2094 = vand.u32 2147483647, %v365
    %v2095 = vand.u32 %v2094, 8388607
    %v2096 = vor.u32 %v2095, 8388608
    %v2097 = vsub.s32 0, %v2096
    %v2098 = vadd.s32 %v2093, 1
    %vm2099 = vcmp.gt.s32.totalorder %v2098, 0
    %v2100 = vsel %vm2099, %v2098, 0
    %v2101 = vshrl.u32 %v2100, 5
    %v2102 = vand.u32 %v2100, 31
    %v2103 = vsub.s32 32, %v2102
    %v2104 = vshrl.u32 683565275, %v2103
    %v2105 = vshll.u32 683565275, %v2102
    %v2106 = vshrl.u32 2475754826, %v2103
    %v2107 = vor.u32 %v2105, %v2106
    %v2108 = vshll.u32 2475754826, %v2102
    %v2109 = vshrl.u32 2131351028, %v2103
    %v2110 = vor.u32 %v2108, %v2109
    %v2111 = vshll.u32 2131351028, %v2102
    %v2112 = vshrl.u32 2102212464, %v2103
    %v2113 = vor.u32 %v2111, %v2112
    %v2114 = vshll.u32 2102212464, %v2102
    %v2115 = vshrl.u32 920167782, %v2103
    %v2116 = vor.u32 %v2114, %v2115
    %v2117 = vshll.u32 920167782, %v2102
    %v2118 = vshrl.u32 1326507024, %v2103
    %v2119 = vor.u32 %v2117, %v2118
    %vm2120 = vcmp.lt.s32.totalorder %v2101, 1
    %vm2121 = vcmp.lt.s32.totalorder %v2101, 2
    %vm2122 = vcmp.lt.s32.totalorder %v2101, 3
    %vm2123 = vcmp.lt.s32.totalorder %v2101, 4
    %v2124 = vsel %vm2120, %v2104, %v2107
    %v2125 = vsel %vm2123, %v2113, 2102212464
    %v2126 = vsel %vm2122, %v2110, %v2125
    %v2127 = vsel %vm2121, %v2124, %v2126
    %v2128 = vsel %vm2120, %v2107, %v2110
    %v2129 = vsel %vm2123, %v2116, 920167782
    %v2130 = vsel %vm2122, %v2113, %v2129
    %v2131 = vsel %vm2121, %v2128, %v2130
    %v2132 = vsel %vm2120, %v2110, %v2113
    %v2133 = vsel %vm2123, %v2119, 1326507024
    %v2134 = vsel %vm2122, %v2116, %v2133
    %v2135 = vsel %vm2121, %v2132, %v2134
    %v2136 = vshll.u32 %v2096, 8
    %v2137 = vmul.u32.u64.compose %v2136, %v2135
    %v2138 = vextract.low.u32 %v2137
    %v2139 = vextract.high.u32 %v2137
    %v2140 = vmul.u32.u64.compose %v2136, %v2131
    %v2141 = vextract.low.u32 %v2140
    %v2142 = vextract.high.u32 %v2140
    %v2143 = vmul.u32 %v2136, %v2127
    %v2144 = vadd.s32 %v2139, %v2141
    %vm2145 = vc.u32 %v2139, %v2141
    %v2146 = vadd.s32 %v2142, 1
    %v2147 = vsel %vm2145, %v2146, %v2142
    %v2148 = vadd.s32 %v2143, %v2147
    %v2149 = vadd.s32 %v2148, 536870912
    %v2150 = vshrl.u32 %v2149, 30
    %v2151 = vshll.u32 %v2150, 30
    %v2152 = vsub.s32 %v2148, %v2151
    %vm2153 = vcmp.lt.s32.totalorder %v2152, 0
    %v2154 = vsub.s32 0, %v2152
    %v2155 = vsel %vm2153, %v2154, %v2152
    %v2156 = vclz %v2155
    %v2157 = vsub.s32 %v2156, 2
    %vm2158 = vcmp.gt.s32.totalorder 0, %v2157
    %v2159 = vsel %vm2158, 0, %v2157
    %v2160 = vsub.s32 32, %v2159
    %v2161 = vshll.u32 %v2152, %v2159
    %v2162 = vshrl.u32 %v2144, %v2160
    %v2163 = vor.u32 %v2161, %v2162
    %v2164 = vsub.s32 4294967266, %v2159
    %v2165 = vadd.s32 %v2164, 127
    %v2166 = vshll.u32 %v2165, 23
    %v2167 = vor.u32 4788187, %v2166
    %v2168 = vand.u32 2147483647, %v2167
    %v2170 = vcvt.s32.f32 %v2163
    %v2171 = vmul.f32 %v2170, %v2168
    %v2172 = vxor.u32 %v2171, 2147483648
    %v2173 = vsel %vm2090, %v2172, %v2171
    %v2174 = vsub.s32 4, %v2150
    %v2175 = vsel %vm2090, %v2174, %v2150
    %v2176 = vsel %vm2089, %v365, %v2173
    %v2177 = vsel %vm2089, 0, %v2175
    %v2178 = vcosq.f32.pop %v2176
    %v2179 = vsinq.f32.pop %v2176
    %vm2180 = vweird.f32 %v365
    %v2181 = vadd.s32 %v2177, 3
    %v2182 = vand.u32 %v2181, 3
    %vm2183 = vcmp.lt.s32.totalorder %v2182, 2
    %vm2184 = vcmp.eq.s32.totalorder %v2182, 0
    %v2185 = vxor.u32 %v2179, 2147483648
    %v2186 = vsel %vm2184, %v2178, %v2185
    %vm2187 = vcmp.eq.s32.totalorder %v2182, 2
    %v2188 = vxor.u32 %v2178, 2147483648
    %v2189 = vsel %vm2187, %v2188, %v2179
    %v2190 = vsel %vm2183, %v2186, %v2189
    %v2191 = vsel %vm2180, nan, %v2190
    %v2192 = vand.u32 2147483647, %v370
    %vm2193 = vcmp.le.f32.partialorder %v2192, 0.7853982
    %vm2194 = vcmp.lt.s32.totalorder %v370, 0
    %v2195 = vand.u32 %v370, 2139095040
    %v2196 = vshrl.u32 %v2195, 23
    %v2197 = vsub.s32 %v2196, 127
    %v2198 = vand.u32 2147483647, %v370
    %v2199 = vand.u32 %v2198, 8388607
    %v2200 = vor.u32 %v2199, 8388608
    %v2201 = vsub.s32 0, %v2200
    %v2202 = vadd.s32 %v2197, 1
    %vm2203 = vcmp.gt.s32.totalorder %v2202, 0
    %v2204 = vsel %vm2203, %v2202, 0
    %v2205 = vshrl.u32 %v2204, 5
    %v2206 = vand.u32 %v2204, 31
    %v2207 = vsub.s32 32, %v2206
    %v2208 = vshrl.u32 683565275, %v2207
    %v2209 = vshll.u32 683565275, %v2206
    %v2210 = vshrl.u32 2475754826, %v2207
    %v2211 = vor.u32 %v2209, %v2210
    %v2212 = vshll.u32 2475754826, %v2206
    %v2213 = vshrl.u32 2131351028, %v2207
    %v2214 = vor.u32 %v2212, %v2213
    %v2215 = vshll.u32 2131351028, %v2206
    %v2216 = vshrl.u32 2102212464, %v2207
    %v2217 = vor.u32 %v2215, %v2216
    %v2218 = vshll.u32 2102212464, %v2206
    %v2219 = vshrl.u32 920167782, %v2207
    %v2220 = vor.u32 %v2218, %v2219
    %v2221 = vshll.u32 920167782, %v2206
    %v2222 = vshrl.u32 1326507024, %v2207
    %v2223 = vor.u32 %v2221, %v2222
    %vm2224 = vcmp.lt.s32.totalorder %v2205, 1
    %vm2225 = vcmp.lt.s32.totalorder %v2205, 2
    %vm2226 = vcmp.lt.s32.totalorder %v2205, 3
    %vm2227 = vcmp.lt.s32.totalorder %v2205, 4
    %v2228 = vsel %vm2224, %v2208, %v2211
    %v2229 = vsel %vm2227, %v2217, 2102212464
    %v2230 = vsel %vm2226, %v2214, %v2229
    %v2231 = vsel %vm2225, %v2228, %v2230
    %v2232 = vsel %vm2224, %v2211, %v2214
    %v2233 = vsel %vm2227, %v2220, 920167782
    %v2234 = vsel %vm2226, %v2217, %v2233
    %v2235 = vsel %vm2225, %v2232, %v2234
    %v2236 = vsel %vm2224, %v2214, %v2217
    %v2237 = vsel %vm2227, %v2223, 1326507024
    %v2238 = vsel %vm2226, %v2220, %v2237
    %v2239 = vsel %vm2225, %v2236, %v2238
    %v2240 = vshll.u32 %v2200, 8
    %v2241 = vmul.u32.u64.compose %v2240, %v2239
    %v2242 = vextract.low.u32 %v2241
    %v2243 = vextract.high.u32 %v2241
    %v2244 = vmul.u32.u64.compose %v2240, %v2235
    %v2245 = vextract.low.u32 %v2244
    %v2246 = vextract.high.u32 %v2244
    %v2247 = vmul.u32 %v2240, %v2231
    %v2248 = vadd.s32 %v2243, %v2245
    %vm2249 = vc.u32 %v2243, %v2245
    %v2250 = vadd.s32 %v2246, 1
    %v2251 = vsel %vm2249, %v2250, %v2246
    %v2252 = vadd.s32 %v2247, %v2251
    %v2253 = vadd.s32 %v2252, 536870912
    %v2254 = vshrl.u32 %v2253, 30
    %v2255 = vshll.u32 %v2254, 30
    %v2256 = vsub.s32 %v2252, %v2255
    %vm2257 = vcmp.lt.s32.totalorder %v2256, 0
    %v2258 = vsub.s32 0, %v2256
    %v2259 = vsel %vm2257, %v2258, %v2256
    %v2260 = vclz %v2259
    %v2261 = vsub.s32 %v2260, 2
    %vm2262 = vcmp.gt.s32.totalorder 0, %v2261
    %v2263 = vsel %vm2262, 0, %v2261
    %v2264 = vsub.s32 32, %v2263
    %v2265 = vshll.u32 %v2256, %v2263
    %v2266 = vshrl.u32 %v2248, %v2264
    %v2267 = vor.u32 %v2265, %v2266
    %v2268 = vsub.s32 4294967266, %v2263
    %v2269 = vadd.s32 %v2268, 127
    %v2270 = vshll.u32 %v2269, 23
    %v2271 = vor.u32 4788187, %v2270
    %v2272 = vand.u32 2147483647, %v2271
    %v2274 = vcvt.s32.f32 %v2267
    %v2275 = vmul.f32 %v2274, %v2272
    %v2276 = vxor.u32 %v2275, 2147483648
    %v2277 = vsel %vm2194, %v2276, %v2275
    %v2278 = vsub.s32 4, %v2254
    %v2279 = vsel %vm2194, %v2278, %v2254
    %v2280 = vsel %vm2193, %v370, %v2277
    %v2281 = vsel %vm2193, 0, %v2279
    %v2282 = vcosq.f32.pop %v2280
    %v2283 = vsinq.f32.pop %v2280
    %vm2284 = vweird.f32 %v370
    %v2285 = vadd.s32 %v2281, 3
    %v2286 = vand.u32 %v2285, 3
    %vm2287 = vcmp.lt.s32.totalorder %v2286, 2
    %vm2288 = vcmp.eq.s32.totalorder %v2286, 0
    %v2289 = vxor.u32 %v2283, 2147483648
    %v2290 = vsel %vm2288, %v2282, %v2289
    %vm2291 = vcmp.eq.s32.totalorder %v2286, 2
    %v2292 = vxor.u32 %v2282, 2147483648
    %v2293 = vsel %vm2291, %v2292, %v2283
    %v2294 = vsel %vm2287, %v2290, %v2293
    %v2295 = vsel %vm2284, nan, %v2294
    %v2296 = vand.u32 2147483647, %v375
    %vm2297 = vcmp.le.f32.partialorder %v2296, 0.7853982
    %vm2298 = vcmp.lt.s32.totalorder %v375, 0
    %v2299 = vand.u32 %v375, 2139095040
    %v2300 = vshrl.u32 %v2299, 23
    %v2301 = vsub.s32 %v2300, 127
    %v2302 = vand.u32 2147483647, %v375
    %v2303 = vand.u32 %v2302, 8388607
    %v2304 = vor.u32 %v2303, 8388608
    %v2305 = vsub.s32 0, %v2304
    %v2306 = vadd.s32 %v2301, 1
    %vm2307 = vcmp.gt.s32.totalorder %v2306, 0
    %v2308 = vsel %vm2307, %v2306, 0
    %v2309 = vshrl.u32 %v2308, 5
    %v2310 = vand.u32 %v2308, 31
    %v2311 = vsub.s32 32, %v2310
    %v2312 = vshrl.u32 683565275, %v2311
    %v2313 = vshll.u32 683565275, %v2310
    %v2314 = vshrl.u32 2475754826, %v2311
    %v2315 = vor.u32 %v2313, %v2314
    %v2316 = vshll.u32 2475754826, %v2310
    %v2317 = vshrl.u32 2131351028, %v2311
    %v2318 = vor.u32 %v2316, %v2317
    %v2319 = vshll.u32 2131351028, %v2310
    %v2320 = vshrl.u32 2102212464, %v2311
    %v2321 = vor.u32 %v2319, %v2320
    %v2322 = vshll.u32 2102212464, %v2310
    %v2323 = vshrl.u32 920167782, %v2311
    %v2324 = vor.u32 %v2322, %v2323
    %v2325 = vshll.u32 920167782, %v2310
    %v2326 = vshrl.u32 1326507024, %v2311
    %v2327 = vor.u32 %v2325, %v2326
    %vm2328 = vcmp.lt.s32.totalorder %v2309, 1
    %vm2329 = vcmp.lt.s32.totalorder %v2309, 2
    %vm2330 = vcmp.lt.s32.totalorder %v2309, 3
    %vm2331 = vcmp.lt.s32.totalorder %v2309, 4
    %v2332 = vsel %vm2328, %v2312, %v2315
    %v2333 = vsel %vm2331, %v2321, 2102212464
    %v2334 = vsel %vm2330, %v2318, %v2333
    %v2335 = vsel %vm2329, %v2332, %v2334
    %v2336 = vsel %vm2328, %v2315, %v2318
    %v2337 = vsel %vm2331, %v2324, 920167782
    %v2338 = vsel %vm2330, %v2321, %v2337
    %v2339 = vsel %vm2329, %v2336, %v2338
    %v2340 = vsel %vm2328, %v2318, %v2321
    %v2341 = vsel %vm2331, %v2327, 1326507024
    %v2342 = vsel %vm2330, %v2324, %v2341
    %v2343 = vsel %vm2329, %v2340, %v2342
    %v2344 = vshll.u32 %v2304, 8
    %v2345 = vmul.u32.u64.compose %v2344, %v2343
    %v2346 = vextract.low.u32 %v2345
    %v2347 = vextract.high.u32 %v2345
    %v2348 = vmul.u32.u64.compose %v2344, %v2339
    %v2349 = vextract.low.u32 %v2348
    %v2350 = vextract.high.u32 %v2348
    %v2351 = vmul.u32 %v2344, %v2335
    %v2352 = vadd.s32 %v2347, %v2349
    %vm2353 = vc.u32 %v2347, %v2349
    %v2354 = vadd.s32 %v2350, 1
    %v2355 = vsel %vm2353, %v2354, %v2350
    %v2356 = vadd.s32 %v2351, %v2355
    %v2357 = vadd.s32 %v2356, 536870912
    %v2358 = vshrl.u32 %v2357, 30
    %v2359 = vshll.u32 %v2358, 30
    %v2360 = vsub.s32 %v2356, %v2359
    %vm2361 = vcmp.lt.s32.totalorder %v2360, 0
    %v2362 = vsub.s32 0, %v2360
    %v2363 = vsel %vm2361, %v2362, %v2360
    %v2364 = vclz %v2363
    %v2365 = vsub.s32 %v2364, 2
    %vm2366 = vcmp.gt.s32.totalorder 0, %v2365
    %v2367 = vsel %vm2366, 0, %v2365
    %v2368 = vsub.s32 32, %v2367
    %v2369 = vshll.u32 %v2360, %v2367
    %v2370 = vshrl.u32 %v2352, %v2368
    %v2371 = vor.u32 %v2369, %v2370
    %v2372 = vsub.s32 4294967266, %v2367
    %v2373 = vadd.s32 %v2372, 127
    %v2374 = vshll.u32 %v2373, 23
    %v2375 = vor.u32 4788187, %v2374
    %v2376 = vand.u32 2147483647, %v2375
    %v2378 = vcvt.s32.f32 %v2371
    %v2379 = vmul.f32 %v2378, %v2376
    %v2380 = vxor.u32 %v2379, 2147483648
    %v2381 = vsel %vm2298, %v2380, %v2379
    %v2382 = vsub.s32 4, %v2358
    %v2383 = vsel %vm2298, %v2382, %v2358
    %v2384 = vsel %vm2297, %v375, %v2381
    %v2385 = vsel %vm2297, 0, %v2383
    %v2386 = vcosq.f32.pop %v2384
    %v2387 = vsinq.f32.pop %v2384
    %vm2388 = vweird.f32 %v375
    %v2389 = vadd.s32 %v2385, 3
    %v2390 = vand.u32 %v2389, 3
    %vm2391 = vcmp.lt.s32.totalorder %v2390, 2
    %vm2392 = vcmp.eq.s32.totalorder %v2390, 0
    %v2393 = vxor.u32 %v2387, 2147483648
    %v2394 = vsel %vm2392, %v2386, %v2393
    %vm2395 = vcmp.eq.s32.totalorder %v2390, 2
    %v2396 = vxor.u32 %v2386, 2147483648
    %v2397 = vsel %vm2395, %v2396, %v2387
    %v2398 = vsel %vm2391, %v2394, %v2397
    %v2399 = vsel %vm2388, nan, %v2398
    %v2400 = vand.u32 2147483647, %v380
    %vm2401 = vcmp.le.f32.partialorder %v2400, 0.7853982
    %vm2402 = vcmp.lt.s32.totalorder %v380, 0
    %v2403 = vand.u32 %v380, 2139095040
    %v2404 = vshrl.u32 %v2403, 23
    %v2405 = vsub.s32 %v2404, 127
    %v2406 = vand.u32 2147483647, %v380
    %v2407 = vand.u32 %v2406, 8388607
    %v2408 = vor.u32 %v2407, 8388608
    %v2409 = vsub.s32 0, %v2408
    %v2410 = vadd.s32 %v2405, 1
    %vm2411 = vcmp.gt.s32.totalorder %v2410, 0
    %v2412 = vsel %vm2411, %v2410, 0
    %v2413 = vshrl.u32 %v2412, 5
    %v2414 = vand.u32 %v2412, 31
    %v2415 = vsub.s32 32, %v2414
    %v2416 = vshrl.u32 683565275, %v2415
    %v2417 = vshll.u32 683565275, %v2414
    %v2418 = vshrl.u32 2475754826, %v2415
    %v2419 = vor.u32 %v2417, %v2418
    %v2420 = vshll.u32 2475754826, %v2414
    %v2421 = vshrl.u32 2131351028, %v2415
    %v2422 = vor.u32 %v2420, %v2421
    %v2423 = vshll.u32 2131351028, %v2414
    %v2424 = vshrl.u32 2102212464, %v2415
    %v2425 = vor.u32 %v2423, %v2424
    %v2426 = vshll.u32 2102212464, %v2414
    %v2427 = vshrl.u32 920167782, %v2415
    %v2428 = vor.u32 %v2426, %v2427
    %v2429 = vshll.u32 920167782, %v2414
    %v2430 = vshrl.u32 1326507024, %v2415
    %v2431 = vor.u32 %v2429, %v2430
    %vm2432 = vcmp.lt.s32.totalorder %v2413, 1
    %vm2433 = vcmp.lt.s32.totalorder %v2413, 2
    %vm2434 = vcmp.lt.s32.totalorder %v2413, 3
    %vm2435 = vcmp.lt.s32.totalorder %v2413, 4
    %v2436 = vsel %vm2432, %v2416, %v2419
    %v2437 = vsel %vm2435, %v2425, 2102212464
    %v2438 = vsel %vm2434, %v2422, %v2437
    %v2439 = vsel %vm2433, %v2436, %v2438
    %v2440 = vsel %vm2432, %v2419, %v2422
    %v2441 = vsel %vm2435, %v2428, 920167782
    %v2442 = vsel %vm2434, %v2425, %v2441
    %v2443 = vsel %vm2433, %v2440, %v2442
    %v2444 = vsel %vm2432, %v2422, %v2425
    %v2445 = vsel %vm2435, %v2431, 1326507024
    %v2446 = vsel %vm2434, %v2428, %v2445
    %v2447 = vsel %vm2433, %v2444, %v2446
    %v2448 = vshll.u32 %v2408, 8
    %v2449 = vmul.u32.u64.compose %v2448, %v2447
    %v2450 = vextract.low.u32 %v2449
    %v2451 = vextract.high.u32 %v2449
    %v2452 = vmul.u32.u64.compose %v2448, %v2443
    %v2453 = vextract.low.u32 %v2452
    %v2454 = vextract.high.u32 %v2452
    %v2455 = vmul.u32 %v2448, %v2439
    %v2456 = vadd.s32 %v2451, %v2453
    %vm2457 = vc.u32 %v2451, %v2453
    %v2458 = vadd.s32 %v2454, 1
    %v2459 = vsel %vm2457, %v2458, %v2454
    %v2460 = vadd.s32 %v2455, %v2459
    %v2461 = vadd.s32 %v2460, 536870912
    %v2462 = vshrl.u32 %v2461, 30
    %v2463 = vshll.u32 %v2462, 30
    %v2464 = vsub.s32 %v2460, %v2463
    %vm2465 = vcmp.lt.s32.totalorder %v2464, 0
    %v2466 = vsub.s32 0, %v2464
    %v2467 = vsel %vm2465, %v2466, %v2464
    %v2468 = vclz %v2467
    %v2469 = vsub.s32 %v2468, 2
    %vm2470 = vcmp.gt.s32.totalorder 0, %v2469
    %v2471 = vsel %vm2470, 0, %v2469
    %v2472 = vsub.s32 32, %v2471
    %v2473 = vshll.u32 %v2464, %v2471
    %v2474 = vshrl.u32 %v2456, %v2472
    %v2475 = vor.u32 %v2473, %v2474
    %v2476 = vsub.s32 4294967266, %v2471
    %v2477 = vadd.s32 %v2476, 127
    %v2478 = vshll.u32 %v2477, 23
    %v2479 = vor.u32 4788187, %v2478
    %v2480 = vand.u32 2147483647, %v2479
    %v2482 = vcvt.s32.f32 %v2475
    %v2483 = vmul.f32 %v2482, %v2480
    %v2484 = vxor.u32 %v2483, 2147483648
    %v2485 = vsel %vm2402, %v2484, %v2483
    %v2486 = vsub.s32 4, %v2462
    %v2487 = vsel %vm2402, %v2486, %v2462
    %v2488 = vsel %vm2401, %v380, %v2485
    %v2489 = vsel %vm2401, 0, %v2487
    %v2490 = vcosq.f32.pop %v2488
    %v2491 = vsinq.f32.pop %v2488
    %vm2492 = vweird.f32 %v380
    %v2493 = vadd.s32 %v2489, 3
    %v2494 = vand.u32 %v2493, 3
    %vm2495 = vcmp.lt.s32.totalorder %v2494, 2
    %vm2496 = vcmp.eq.s32.totalorder %v2494, 0
    %v2497 = vxor.u32 %v2491, 2147483648
    %v2498 = vsel %vm2496, %v2490, %v2497
    %vm2499 = vcmp.eq.s32.totalorder %v2494, 2
    %v2500 = vxor.u32 %v2490, 2147483648
    %v2501 = vsel %vm2499, %v2500, %v2491
    %v2502 = vsel %vm2495, %v2498, %v2501
    %v2503 = vsel %vm2492, nan, %v2502
    %v2504 = vand.u32 2147483647, %v385
    %vm2505 = vcmp.le.f32.partialorder %v2504, 0.7853982
    %vm2506 = vcmp.lt.s32.totalorder %v385, 0
    %v2507 = vand.u32 %v385, 2139095040
    %v2508 = vshrl.u32 %v2507, 23
    %v2509 = vsub.s32 %v2508, 127
    %v2510 = vand.u32 2147483647, %v385
    %v2511 = vand.u32 %v2510, 8388607
    %v2512 = vor.u32 %v2511, 8388608
    %v2513 = vsub.s32 0, %v2512
    %v2514 = vadd.s32 %v2509, 1
    %vm2515 = vcmp.gt.s32.totalorder %v2514, 0
    %v2516 = vsel %vm2515, %v2514, 0
    %v2517 = vshrl.u32 %v2516, 5
    %v2518 = vand.u32 %v2516, 31
    %v2519 = vsub.s32 32, %v2518
    %v2520 = vshrl.u32 683565275, %v2519
    %v2521 = vshll.u32 683565275, %v2518
    %v2522 = vshrl.u32 2475754826, %v2519
    %v2523 = vor.u32 %v2521, %v2522
    %v2524 = vshll.u32 2475754826, %v2518
    %v2525 = vshrl.u32 2131351028, %v2519
    %v2526 = vor.u32 %v2524, %v2525
    %v2527 = vshll.u32 2131351028, %v2518
    %v2528 = vshrl.u32 2102212464, %v2519
    %v2529 = vor.u32 %v2527, %v2528
    %v2530 = vshll.u32 2102212464, %v2518
    %v2531 = vshrl.u32 920167782, %v2519
    %v2532 = vor.u32 %v2530, %v2531
    %v2533 = vshll.u32 920167782, %v2518
    %v2534 = vshrl.u32 1326507024, %v2519
    %v2535 = vor.u32 %v2533, %v2534
    %vm2536 = vcmp.lt.s32.totalorder %v2517, 1
    %vm2537 = vcmp.lt.s32.totalorder %v2517, 2
    %vm2538 = vcmp.lt.s32.totalorder %v2517, 3
    %vm2539 = vcmp.lt.s32.totalorder %v2517, 4
    %v2540 = vsel %vm2536, %v2520, %v2523
    %v2541 = vsel %vm2539, %v2529, 2102212464
    %v2542 = vsel %vm2538, %v2526, %v2541
    %v2543 = vsel %vm2537, %v2540, %v2542
    %v2544 = vsel %vm2536, %v2523, %v2526
    %v2545 = vsel %vm2539, %v2532, 920167782
    %v2546 = vsel %vm2538, %v2529, %v2545
    %v2547 = vsel %vm2537, %v2544, %v2546
    %v2548 = vsel %vm2536, %v2526, %v2529
    %v2549 = vsel %vm2539, %v2535, 1326507024
    %v2550 = vsel %vm2538, %v2532, %v2549
    %v2551 = vsel %vm2537, %v2548, %v2550
    %v2552 = vshll.u32 %v2512, 8
    %v2553 = vmul.u32.u64.compose %v2552, %v2551
    %v2554 = vextract.low.u32 %v2553
    %v2555 = vextract.high.u32 %v2553
    %v2556 = vmul.u32.u64.compose %v2552, %v2547
    %v2557 = vextract.low.u32 %v2556
    %v2558 = vextract.high.u32 %v2556
    %v2559 = vmul.u32 %v2552, %v2543
    %v2560 = vadd.s32 %v2555, %v2557
    %vm2561 = vc.u32 %v2555, %v2557
    %v2562 = vadd.s32 %v2558, 1
    %v2563 = vsel %vm2561, %v2562, %v2558
    %v2564 = vadd.s32 %v2559, %v2563
    %v2565 = vadd.s32 %v2564, 536870912
    %v2566 = vshrl.u32 %v2565, 30
    %v2567 = vshll.u32 %v2566, 30
    %v2568 = vsub.s32 %v2564, %v2567
    %vm2569 = vcmp.lt.s32.totalorder %v2568, 0
    %v2570 = vsub.s32 0, %v2568
    %v2571 = vsel %vm2569, %v2570, %v2568
    %v2572 = vclz %v2571
    %v2573 = vsub.s32 %v2572, 2
    %vm2574 = vcmp.gt.s32.totalorder 0, %v2573
    %v2575 = vsel %vm2574, 0, %v2573
    %v2576 = vsub.s32 32, %v2575
    %v2577 = vshll.u32 %v2568, %v2575
    %v2578 = vshrl.u32 %v2560, %v2576
    %v2579 = vor.u32 %v2577, %v2578
    %v2580 = vsub.s32 4294967266, %v2575
    %v2581 = vadd.s32 %v2580, 127
    %v2582 = vshll.u32 %v2581, 23
    %v2583 = vor.u32 4788187, %v2582
    %v2584 = vand.u32 2147483647, %v2583
    %v2586 = vcvt.s32.f32 %v2579
    %v2587 = vmul.f32 %v2586, %v2584
    %v2588 = vxor.u32 %v2587, 2147483648
    %v2589 = vsel %vm2506, %v2588, %v2587
    %v2590 = vsub.s32 4, %v2566
    %v2591 = vsel %vm2506, %v2590, %v2566
    %v2592 = vsel %vm2505, %v385, %v2589
    %v2593 = vsel %vm2505, 0, %v2591
    %v2594 = vcosq.f32.pop %v2592
    %v2595 = vsinq.f32.pop %v2592
    %vm2596 = vweird.f32 %v385
    %v2597 = vadd.s32 %v2593, 3
    %v2598 = vand.u32 %v2597, 3
    %vm2599 = vcmp.lt.s32.totalorder %v2598, 2
    %vm2600 = vcmp.eq.s32.totalorder %v2598, 0
    %v2601 = vxor.u32 %v2595, 2147483648
    %v2602 = vsel %vm2600, %v2594, %v2601
    %vm2603 = vcmp.eq.s32.totalorder %v2598, 2
    %v2604 = vxor.u32 %v2594, 2147483648
    %v2605 = vsel %vm2603, %v2604, %v2595
    %v2606 = vsel %vm2599, %v2602, %v2605
    %v2607 = vsel %vm2596, nan, %v2606
    %v2608 = vand.u32 2147483647, %v390
    %vm2609 = vcmp.le.f32.partialorder %v2608, 0.7853982
    %vm2610 = vcmp.lt.s32.totalorder %v390, 0
    %v2611 = vand.u32 %v390, 2139095040
    %v2612 = vshrl.u32 %v2611, 23
    %v2613 = vsub.s32 %v2612, 127
    %v2614 = vand.u32 2147483647, %v390
    %v2615 = vand.u32 %v2614, 8388607
    %v2616 = vor.u32 %v2615, 8388608
    %v2617 = vsub.s32 0, %v2616
    %v2618 = vadd.s32 %v2613, 1
    %vm2619 = vcmp.gt.s32.totalorder %v2618, 0
    %v2620 = vsel %vm2619, %v2618, 0
    %v2621 = vshrl.u32 %v2620, 5
    %v2622 = vand.u32 %v2620, 31
    %v2623 = vsub.s32 32, %v2622
    %v2624 = vshrl.u32 683565275, %v2623
    %v2625 = vshll.u32 683565275, %v2622
    %v2626 = vshrl.u32 2475754826, %v2623
    %v2627 = vor.u32 %v2625, %v2626
    %v2628 = vshll.u32 2475754826, %v2622
    %v2629 = vshrl.u32 2131351028, %v2623
    %v2630 = vor.u32 %v2628, %v2629
    %v2631 = vshll.u32 2131351028, %v2622
    %v2632 = vshrl.u32 2102212464, %v2623
    %v2633 = vor.u32 %v2631, %v2632
    %v2634 = vshll.u32 2102212464, %v2622
    %v2635 = vshrl.u32 920167782, %v2623
    %v2636 = vor.u32 %v2634, %v2635
    %v2637 = vshll.u32 920167782, %v2622
    %v2638 = vshrl.u32 1326507024, %v2623
    %v2639 = vor.u32 %v2637, %v2638
    %vm2640 = vcmp.lt.s32.totalorder %v2621, 1
    %vm2641 = vcmp.lt.s32.totalorder %v2621, 2
    %vm2642 = vcmp.lt.s32.totalorder %v2621, 3
    %vm2643 = vcmp.lt.s32.totalorder %v2621, 4
    %v2644 = vsel %vm2640, %v2624, %v2627
    %v2645 = vsel %vm2643, %v2633, 2102212464
    %v2646 = vsel %vm2642, %v2630, %v2645
    %v2647 = vsel %vm2641, %v2644, %v2646
    %v2648 = vsel %vm2640, %v2627, %v2630
    %v2649 = vsel %vm2643, %v2636, 920167782
    %v2650 = vsel %vm2642, %v2633, %v2649
    %v2651 = vsel %vm2641, %v2648, %v2650
    %v2652 = vsel %vm2640, %v2630, %v2633
    %v2653 = vsel %vm2643, %v2639, 1326507024
    %v2654 = vsel %vm2642, %v2636, %v2653
    %v2655 = vsel %vm2641, %v2652, %v2654
    %v2656 = vshll.u32 %v2616, 8
    %v2657 = vmul.u32.u64.compose %v2656, %v2655
    %v2658 = vextract.low.u32 %v2657
    %v2659 = vextract.high.u32 %v2657
    %v2660 = vmul.u32.u64.compose %v2656, %v2651
    %v2661 = vextract.low.u32 %v2660
    %v2662 = vextract.high.u32 %v2660
    %v2663 = vmul.u32 %v2656, %v2647
    %v2664 = vadd.s32 %v2659, %v2661
    %vm2665 = vc.u32 %v2659, %v2661
    %v2666 = vadd.s32 %v2662, 1
    %v2667 = vsel %vm2665, %v2666, %v2662
    %v2668 = vadd.s32 %v2663, %v2667
    %v2669 = vadd.s32 %v2668, 536870912
    %v2670 = vshrl.u32 %v2669, 30
    %v2671 = vshll.u32 %v2670, 30
    %v2672 = vsub.s32 %v2668, %v2671
    %vm2673 = vcmp.lt.s32.totalorder %v2672, 0
    %v2674 = vsub.s32 0, %v2672
    %v2675 = vsel %vm2673, %v2674, %v2672
    %v2676 = vclz %v2675
    %v2677 = vsub.s32 %v2676, 2
    %vm2678 = vcmp.gt.s32.totalorder 0, %v2677
    %v2679 = vsel %vm2678, 0, %v2677
    %v2680 = vsub.s32 32, %v2679
    %v2681 = vshll.u32 %v2672, %v2679
    %v2682 = vshrl.u32 %v2664, %v2680
    %v2683 = vor.u32 %v2681, %v2682
    %v2684 = vsub.s32 4294967266, %v2679
    %v2685 = vadd.s32 %v2684, 127
    %v2686 = vshll.u32 %v2685, 23
    %v2687 = vor.u32 4788187, %v2686
    %v2688 = vand.u32 2147483647, %v2687
    %v2690 = vcvt.s32.f32 %v2683
    %v2691 = vmul.f32 %v2690, %v2688
    %v2692 = vxor.u32 %v2691, 2147483648
    %v2693 = vsel %vm2610, %v2692, %v2691
    %v2694 = vsub.s32 4, %v2670
    %v2695 = vsel %vm2610, %v2694, %v2670
    %v2696 = vsel %vm2609, %v390, %v2693
    %v2697 = vsel %vm2609, 0, %v2695
    %v2698 = vcosq.f32.pop %v2696
    %v2699 = vsinq.f32.pop %v2696
    %vm2700 = vweird.f32 %v390
    %v2701 = vadd.s32 %v2697, 3
    %v2702 = vand.u32 %v2701, 3
    %vm2703 = vcmp.lt.s32.totalorder %v2702, 2
    %vm2704 = vcmp.eq.s32.totalorder %v2702, 0
    %v2705 = vxor.u32 %v2699, 2147483648
    %v2706 = vsel %vm2704, %v2698, %v2705
    %vm2707 = vcmp.eq.s32.totalorder %v2702, 2
    %v2708 = vxor.u32 %v2698, 2147483648
    %v2709 = vsel %vm2707, %v2708, %v2699
    %v2710 = vsel %vm2703, %v2706, %v2709
    %v2711 = vsel %vm2700, nan, %v2710
    %v2712 = vand.u32 2147483647, %v395
    %vm2713 = vcmp.le.f32.partialorder %v2712, 0.7853982
    %vm2714 = vcmp.lt.s32.totalorder %v395, 0
    %v2715 = vand.u32 %v395, 2139095040
    %v2716 = vshrl.u32 %v2715, 23
    %v2717 = vsub.s32 %v2716, 127
    %v2718 = vand.u32 2147483647, %v395
    %v2719 = vand.u32 %v2718, 8388607
    %v2720 = vor.u32 %v2719, 8388608
    %v2721 = vsub.s32 0, %v2720
    %v2722 = vadd.s32 %v2717, 1
    %vm2723 = vcmp.gt.s32.totalorder %v2722, 0
    %v2724 = vsel %vm2723, %v2722, 0
    %v2725 = vshrl.u32 %v2724, 5
    %v2726 = vand.u32 %v2724, 31
    %v2727 = vsub.s32 32, %v2726
    %v2728 = vshrl.u32 683565275, %v2727
    %v2729 = vshll.u32 683565275, %v2726
    %v2730 = vshrl.u32 2475754826, %v2727
    %v2731 = vor.u32 %v2729, %v2730
    %v2732 = vshll.u32 2475754826, %v2726
    %v2733 = vshrl.u32 2131351028, %v2727
    %v2734 = vor.u32 %v2732, %v2733
    %v2735 = vshll.u32 2131351028, %v2726
    %v2736 = vshrl.u32 2102212464, %v2727
    %v2737 = vor.u32 %v2735, %v2736
    %v2738 = vshll.u32 2102212464, %v2726
    %v2739 = vshrl.u32 920167782, %v2727
    %v2740 = vor.u32 %v2738, %v2739
    %v2741 = vshll.u32 920167782, %v2726
    %v2742 = vshrl.u32 1326507024, %v2727
    %v2743 = vor.u32 %v2741, %v2742
    %vm2744 = vcmp.lt.s32.totalorder %v2725, 1
    %vm2745 = vcmp.lt.s32.totalorder %v2725, 2
    %vm2746 = vcmp.lt.s32.totalorder %v2725, 3
    %vm2747 = vcmp.lt.s32.totalorder %v2725, 4
    %v2748 = vsel %vm2744, %v2728, %v2731
    %v2749 = vsel %vm2747, %v2737, 2102212464
    %v2750 = vsel %vm2746, %v2734, %v2749
    %v2751 = vsel %vm2745, %v2748, %v2750
    %v2752 = vsel %vm2744, %v2731, %v2734
    %v2753 = vsel %vm2747, %v2740, 920167782
    %v2754 = vsel %vm2746, %v2737, %v2753
    %v2755 = vsel %vm2745, %v2752, %v2754
    %v2756 = vsel %vm2744, %v2734, %v2737
    %v2757 = vsel %vm2747, %v2743, 1326507024
    %v2758 = vsel %vm2746, %v2740, %v2757
    %v2759 = vsel %vm2745, %v2756, %v2758
    %v2760 = vshll.u32 %v2720, 8
    %v2761 = vmul.u32.u64.compose %v2760, %v2759
    %v2762 = vextract.low.u32 %v2761
    %v2763 = vextract.high.u32 %v2761
    %v2764 = vmul.u32.u64.compose %v2760, %v2755
    %v2765 = vextract.low.u32 %v2764
    %v2766 = vextract.high.u32 %v2764
    %v2767 = vmul.u32 %v2760, %v2751
    %v2768 = vadd.s32 %v2763, %v2765
    %vm2769 = vc.u32 %v2763, %v2765
    %v2770 = vadd.s32 %v2766, 1
    %v2771 = vsel %vm2769, %v2770, %v2766
    %v2772 = vadd.s32 %v2767, %v2771
    %v2773 = vadd.s32 %v2772, 536870912
    %v2774 = vshrl.u32 %v2773, 30
    %v2775 = vshll.u32 %v2774, 30
    %v2776 = vsub.s32 %v2772, %v2775
    %vm2777 = vcmp.lt.s32.totalorder %v2776, 0
    %v2778 = vsub.s32 0, %v2776
    %v2779 = vsel %vm2777, %v2778, %v2776
    %v2780 = vclz %v2779
    %v2781 = vsub.s32 %v2780, 2
    %vm2782 = vcmp.gt.s32.totalorder 0, %v2781
    %v2783 = vsel %vm2782, 0, %v2781
    %v2784 = vsub.s32 32, %v2783
    %v2785 = vshll.u32 %v2776, %v2783
    %v2786 = vshrl.u32 %v2768, %v2784
    %v2787 = vor.u32 %v2785, %v2786
    %v2788 = vsub.s32 4294967266, %v2783
    %v2789 = vadd.s32 %v2788, 127
    %v2790 = vshll.u32 %v2789, 23
    %v2791 = vor.u32 4788187, %v2790
    %v2792 = vand.u32 2147483647, %v2791
    %v2794 = vcvt.s32.f32 %v2787
    %v2795 = vmul.f32 %v2794, %v2792
    %v2796 = vxor.u32 %v2795, 2147483648
    %v2797 = vsel %vm2714, %v2796, %v2795
    %v2798 = vsub.s32 4, %v2774
    %v2799 = vsel %vm2714, %v2798, %v2774
    %v2800 = vsel %vm2713, %v395, %v2797
    %v2801 = vsel %vm2713, 0, %v2799
    %v2802 = vcosq.f32.pop %v2800
    %v2803 = vsinq.f32.pop %v2800
    %vm2804 = vweird.f32 %v395
    %v2805 = vadd.s32 %v2801, 3
    %v2806 = vand.u32 %v2805, 3
    %vm2807 = vcmp.lt.s32.totalorder %v2806, 2
    %vm2808 = vcmp.eq.s32.totalorder %v2806, 0
    %v2809 = vxor.u32 %v2803, 2147483648
    %v2810 = vsel %vm2808, %v2802, %v2809
    %vm2811 = vcmp.eq.s32.totalorder %v2806, 2
    %v2812 = vxor.u32 %v2802, 2147483648
    %v2813 = vsel %vm2811, %v2812, %v2803
    %v2814 = vsel %vm2807, %v2810, %v2813
    %v2815 = vsel %vm2804, nan, %v2814
    %v2816 = vand.u32 2147483647, %v400
    %vm2817 = vcmp.le.f32.partialorder %v2816, 0.7853982
    %vm2818 = vcmp.lt.s32.totalorder %v400, 0
    %v2819 = vand.u32 %v400, 2139095040
    %v2820 = vshrl.u32 %v2819, 23
    %v2821 = vsub.s32 %v2820, 127
    %v2822 = vand.u32 2147483647, %v400
    %v2823 = vand.u32 %v2822, 8388607
    %v2824 = vor.u32 %v2823, 8388608
    %v2825 = vsub.s32 0, %v2824
    %v2826 = vadd.s32 %v2821, 1
    %vm2827 = vcmp.gt.s32.totalorder %v2826, 0
    %v2828 = vsel %vm2827, %v2826, 0
    %v2829 = vshrl.u32 %v2828, 5
    %v2830 = vand.u32 %v2828, 31
    %v2831 = vsub.s32 32, %v2830
    %v2832 = vshrl.u32 683565275, %v2831
    %v2833 = vshll.u32 683565275, %v2830
    %v2834 = vshrl.u32 2475754826, %v2831
    %v2835 = vor.u32 %v2833, %v2834
    %v2836 = vshll.u32 2475754826, %v2830
    %v2837 = vshrl.u32 2131351028, %v2831
    %v2838 = vor.u32 %v2836, %v2837
    %v2839 = vshll.u32 2131351028, %v2830
    %v2840 = vshrl.u32 2102212464, %v2831
    %v2841 = vor.u32 %v2839, %v2840
    %v2842 = vshll.u32 2102212464, %v2830
    %v2843 = vshrl.u32 920167782, %v2831
    %v2844 = vor.u32 %v2842, %v2843
    %v2845 = vshll.u32 920167782, %v2830
    %v2846 = vshrl.u32 1326507024, %v2831
    %v2847 = vor.u32 %v2845, %v2846
    %vm2848 = vcmp.lt.s32.totalorder %v2829, 1
    %vm2849 = vcmp.lt.s32.totalorder %v2829, 2
    %vm2850 = vcmp.lt.s32.totalorder %v2829, 3
    %vm2851 = vcmp.lt.s32.totalorder %v2829, 4
    %v2852 = vsel %vm2848, %v2832, %v2835
    %v2853 = vsel %vm2851, %v2841, 2102212464
    %v2854 = vsel %vm2850, %v2838, %v2853
    %v2855 = vsel %vm2849, %v2852, %v2854
    %v2856 = vsel %vm2848, %v2835, %v2838
    %v2857 = vsel %vm2851, %v2844, 920167782
    %v2858 = vsel %vm2850, %v2841, %v2857
    %v2859 = vsel %vm2849, %v2856, %v2858
    %v2860 = vsel %vm2848, %v2838, %v2841
    %v2861 = vsel %vm2851, %v2847, 1326507024
    %v2862 = vsel %vm2850, %v2844, %v2861
    %v2863 = vsel %vm2849, %v2860, %v2862
    %v2864 = vshll.u32 %v2824, 8
    %v2865 = vmul.u32.u64.compose %v2864, %v2863
    %v2866 = vextract.low.u32 %v2865
    %v2867 = vextract.high.u32 %v2865
    %v2868 = vmul.u32.u64.compose %v2864, %v2859
    %v2869 = vextract.low.u32 %v2868
    %v2870 = vextract.high.u32 %v2868
    %v2871 = vmul.u32 %v2864, %v2855
    %v2872 = vadd.s32 %v2867, %v2869
    %vm2873 = vc.u32 %v2867, %v2869
    %v2874 = vadd.s32 %v2870, 1
    %v2875 = vsel %vm2873, %v2874, %v2870
    %v2876 = vadd.s32 %v2871, %v2875
    %v2877 = vadd.s32 %v2876, 536870912
    %v2878 = vshrl.u32 %v2877, 30
    %v2879 = vshll.u32 %v2878, 30
    %v2880 = vsub.s32 %v2876, %v2879
    %vm2881 = vcmp.lt.s32.totalorder %v2880, 0
    %v2882 = vsub.s32 0, %v2880
    %v2883 = vsel %vm2881, %v2882, %v2880
    %v2884 = vclz %v2883
    %v2885 = vsub.s32 %v2884, 2
    %vm2886 = vcmp.gt.s32.totalorder 0, %v2885
    %v2887 = vsel %vm2886, 0, %v2885
    %v2888 = vsub.s32 32, %v2887
    %v2889 = vshll.u32 %v2880, %v2887
    %v2890 = vshrl.u32 %v2872, %v2888
    %v2891 = vor.u32 %v2889, %v2890
    %v2892 = vsub.s32 4294967266, %v2887
    %v2893 = vadd.s32 %v2892, 127
    %v2894 = vshll.u32 %v2893, 23
    %v2895 = vor.u32 4788187, %v2894
    %v2896 = vand.u32 2147483647, %v2895
    %v2898 = vcvt.s32.f32 %v2891
    %v2899 = vmul.f32 %v2898, %v2896
    %v2900 = vxor.u32 %v2899, 2147483648
    %v2901 = vsel %vm2818, %v2900, %v2899
    %v2902 = vsub.s32 4, %v2878
    %v2903 = vsel %vm2818, %v2902, %v2878
    %v2904 = vsel %vm2817, %v400, %v2901
    %v2905 = vsel %vm2817, 0, %v2903
    %v2906 = vcosq.f32.pop %v2904
    %v2907 = vsinq.f32.pop %v2904
    %vm2908 = vweird.f32 %v400
    %v2909 = vadd.s32 %v2905, 3
    %v2910 = vand.u32 %v2909, 3
    %vm2911 = vcmp.lt.s32.totalorder %v2910, 2
    %vm2912 = vcmp.eq.s32.totalorder %v2910, 0
    %v2913 = vxor.u32 %v2907, 2147483648
    %v2914 = vsel %vm2912, %v2906, %v2913
    %vm2915 = vcmp.eq.s32.totalorder %v2910, 2
    %v2916 = vxor.u32 %v2906, 2147483648
    %v2917 = vsel %vm2915, %v2916, %v2907
    %v2918 = vsel %vm2911, %v2914, %v2917
    %v2919 = vsel %vm2908, nan, %v2918
    %v2920 = vand.u32 2147483647, %v405
    %vm2921 = vcmp.le.f32.partialorder %v2920, 0.7853982
    %vm2922 = vcmp.lt.s32.totalorder %v405, 0
    %v2923 = vand.u32 %v405, 2139095040
    %v2924 = vshrl.u32 %v2923, 23
    %v2925 = vsub.s32 %v2924, 127
    %v2926 = vand.u32 2147483647, %v405
    %v2927 = vand.u32 %v2926, 8388607
    %v2928 = vor.u32 %v2927, 8388608
    %v2929 = vsub.s32 0, %v2928
    %v2930 = vadd.s32 %v2925, 1
    %vm2931 = vcmp.gt.s32.totalorder %v2930, 0
    %v2932 = vsel %vm2931, %v2930, 0
    %v2933 = vshrl.u32 %v2932, 5
    %v2934 = vand.u32 %v2932, 31
    %v2935 = vsub.s32 32, %v2934
    %v2936 = vshrl.u32 683565275, %v2935
    %v2937 = vshll.u32 683565275, %v2934
    %v2938 = vshrl.u32 2475754826, %v2935
    %v2939 = vor.u32 %v2937, %v2938
    %v2940 = vshll.u32 2475754826, %v2934
    %v2941 = vshrl.u32 2131351028, %v2935
    %v2942 = vor.u32 %v2940, %v2941
    %v2943 = vshll.u32 2131351028, %v2934
    %v2944 = vshrl.u32 2102212464, %v2935
    %v2945 = vor.u32 %v2943, %v2944
    %v2946 = vshll.u32 2102212464, %v2934
    %v2947 = vshrl.u32 920167782, %v2935
    %v2948 = vor.u32 %v2946, %v2947
    %v2949 = vshll.u32 920167782, %v2934
    %v2950 = vshrl.u32 1326507024, %v2935
    %v2951 = vor.u32 %v2949, %v2950
    %vm2952 = vcmp.lt.s32.totalorder %v2933, 1
    %vm2953 = vcmp.lt.s32.totalorder %v2933, 2
    %vm2954 = vcmp.lt.s32.totalorder %v2933, 3
    %vm2955 = vcmp.lt.s32.totalorder %v2933, 4
    %v2956 = vsel %vm2952, %v2936, %v2939
    %v2957 = vsel %vm2955, %v2945, 2102212464
    %v2958 = vsel %vm2954, %v2942, %v2957
    %v2959 = vsel %vm2953, %v2956, %v2958
    %v2960 = vsel %vm2952, %v2939, %v2942
    %v2961 = vsel %vm2955, %v2948, 920167782
    %v2962 = vsel %vm2954, %v2945, %v2961
    %v2963 = vsel %vm2953, %v2960, %v2962
    %v2964 = vsel %vm2952, %v2942, %v2945
    %v2965 = vsel %vm2955, %v2951, 1326507024
    %v2966 = vsel %vm2954, %v2948, %v2965
    %v2967 = vsel %vm2953, %v2964, %v2966
    %v2968 = vshll.u32 %v2928, 8
    %v2969 = vmul.u32.u64.compose %v2968, %v2967
    %v2970 = vextract.low.u32 %v2969
    %v2971 = vextract.high.u32 %v2969
    %v2972 = vmul.u32.u64.compose %v2968, %v2963
    %v2973 = vextract.low.u32 %v2972
    %v2974 = vextract.high.u32 %v2972
    %v2975 = vmul.u32 %v2968, %v2959
    %v2976 = vadd.s32 %v2971, %v2973
    %vm2977 = vc.u32 %v2971, %v2973
    %v2978 = vadd.s32 %v2974, 1
    %v2979 = vsel %vm2977, %v2978, %v2974
    %v2980 = vadd.s32 %v2975, %v2979
    %v2981 = vadd.s32 %v2980, 536870912
    %v2982 = vshrl.u32 %v2981, 30
    %v2983 = vshll.u32 %v2982, 30
    %v2984 = vsub.s32 %v2980, %v2983
    %vm2985 = vcmp.lt.s32.totalorder %v2984, 0
    %v2986 = vsub.s32 0, %v2984
    %v2987 = vsel %vm2985, %v2986, %v2984
    %v2988 = vclz %v2987
    %v2989 = vsub.s32 %v2988, 2
    %vm2990 = vcmp.gt.s32.totalorder 0, %v2989
    %v2991 = vsel %vm2990, 0, %v2989
    %v2992 = vsub.s32 32, %v2991
    %v2993 = vshll.u32 %v2984, %v2991
    %v2994 = vshrl.u32 %v2976, %v2992
    %v2995 = vor.u32 %v2993, %v2994
    %v2996 = vsub.s32 4294967266, %v2991
    %v2997 = vadd.s32 %v2996, 127
    %v2998 = vshll.u32 %v2997, 23
    %v2999 = vor.u32 4788187, %v2998
    %v3000 = vand.u32 2147483647, %v2999
    %v3002 = vcvt.s32.f32 %v2995
    %v3003 = vmul.f32 %v3002, %v3000
    %v3004 = vxor.u32 %v3003, 2147483648
    %v3005 = vsel %vm2922, %v3004, %v3003
    %v3006 = vsub.s32 4, %v2982
    %v3007 = vsel %vm2922, %v3006, %v2982
    %v3008 = vsel %vm2921, %v405, %v3005
    %v3009 = vsel %vm2921, 0, %v3007
    %v3010 = vcosq.f32.pop %v3008
    %v3011 = vsinq.f32.pop %v3008
    %vm3012 = vweird.f32 %v405
    %v3013 = vadd.s32 %v3009, 3
    %v3014 = vand.u32 %v3013, 3
    %vm3015 = vcmp.lt.s32.totalorder %v3014, 2
    %vm3016 = vcmp.eq.s32.totalorder %v3014, 0
    %v3017 = vxor.u32 %v3011, 2147483648
    %v3018 = vsel %vm3016, %v3010, %v3017
    %vm3019 = vcmp.eq.s32.totalorder %v3014, 2
    %v3020 = vxor.u32 %v3010, 2147483648
    %v3021 = vsel %vm3019, %v3020, %v3011
    %v3022 = vsel %vm3015, %v3018, %v3021
    %v3023 = vsel %vm3012, nan, %v3022
    %v3024 = vand.u32 2147483647, %v410
    %vm3025 = vcmp.le.f32.partialorder %v3024, 0.7853982
    %vm3026 = vcmp.lt.s32.totalorder %v410, 0
    %v3027 = vand.u32 %v410, 2139095040
    %v3028 = vshrl.u32 %v3027, 23
    %v3029 = vsub.s32 %v3028, 127
    %v3030 = vand.u32 2147483647, %v410
    %v3031 = vand.u32 %v3030, 8388607
    %v3032 = vor.u32 %v3031, 8388608
    %v3033 = vsub.s32 0, %v3032
    %v3034 = vadd.s32 %v3029, 1
    %vm3035 = vcmp.gt.s32.totalorder %v3034, 0
    %v3036 = vsel %vm3035, %v3034, 0
    %v3037 = vshrl.u32 %v3036, 5
    %v3038 = vand.u32 %v3036, 31
    %v3039 = vsub.s32 32, %v3038
    %v3040 = vshrl.u32 683565275, %v3039
    %v3041 = vshll.u32 683565275, %v3038
    %v3042 = vshrl.u32 2475754826, %v3039
    %v3043 = vor.u32 %v3041, %v3042
    %v3044 = vshll.u32 2475754826, %v3038
    %v3045 = vshrl.u32 2131351028, %v3039
    %v3046 = vor.u32 %v3044, %v3045
    %v3047 = vshll.u32 2131351028, %v3038
    %v3048 = vshrl.u32 2102212464, %v3039
    %v3049 = vor.u32 %v3047, %v3048
    %v3050 = vshll.u32 2102212464, %v3038
    %v3051 = vshrl.u32 920167782, %v3039
    %v3052 = vor.u32 %v3050, %v3051
    %v3053 = vshll.u32 920167782, %v3038
    %v3054 = vshrl.u32 1326507024, %v3039
    %v3055 = vor.u32 %v3053, %v3054
    %vm3056 = vcmp.lt.s32.totalorder %v3037, 1
    %vm3057 = vcmp.lt.s32.totalorder %v3037, 2
    %vm3058 = vcmp.lt.s32.totalorder %v3037, 3
    %vm3059 = vcmp.lt.s32.totalorder %v3037, 4
    %v3060 = vsel %vm3056, %v3040, %v3043
    %v3061 = vsel %vm3059, %v3049, 2102212464
    %v3062 = vsel %vm3058, %v3046, %v3061
    %v3063 = vsel %vm3057, %v3060, %v3062
    %v3064 = vsel %vm3056, %v3043, %v3046
    %v3065 = vsel %vm3059, %v3052, 920167782
    %v3066 = vsel %vm3058, %v3049, %v3065
    %v3067 = vsel %vm3057, %v3064, %v3066
    %v3068 = vsel %vm3056, %v3046, %v3049
    %v3069 = vsel %vm3059, %v3055, 1326507024
    %v3070 = vsel %vm3058, %v3052, %v3069
    %v3071 = vsel %vm3057, %v3068, %v3070
    %v3072 = vshll.u32 %v3032, 8
    %v3073 = vmul.u32.u64.compose %v3072, %v3071
    %v3074 = vextract.low.u32 %v3073
    %v3075 = vextract.high.u32 %v3073
    %v3076 = vmul.u32.u64.compose %v3072, %v3067
    %v3077 = vextract.low.u32 %v3076
    %v3078 = vextract.high.u32 %v3076
    %v3079 = vmul.u32 %v3072, %v3063
    %v3080 = vadd.s32 %v3075, %v3077
    %vm3081 = vc.u32 %v3075, %v3077
    %v3082 = vadd.s32 %v3078, 1
    %v3083 = vsel %vm3081, %v3082, %v3078
    %v3084 = vadd.s32 %v3079, %v3083
    %v3085 = vadd.s32 %v3084, 536870912
    %v3086 = vshrl.u32 %v3085, 30
    %v3087 = vshll.u32 %v3086, 30
    %v3088 = vsub.s32 %v3084, %v3087
    %vm3089 = vcmp.lt.s32.totalorder %v3088, 0
    %v3090 = vsub.s32 0, %v3088
    %v3091 = vsel %vm3089, %v3090, %v3088
    %v3092 = vclz %v3091
    %v3093 = vsub.s32 %v3092, 2
    %vm3094 = vcmp.gt.s32.totalorder 0, %v3093
    %v3095 = vsel %vm3094, 0, %v3093
    %v3096 = vsub.s32 32, %v3095
    %v3097 = vshll.u32 %v3088, %v3095
    %v3098 = vshrl.u32 %v3080, %v3096
    %v3099 = vor.u32 %v3097, %v3098
    %v3100 = vsub.s32 4294967266, %v3095
    %v3101 = vadd.s32 %v3100, 127
    %v3102 = vshll.u32 %v3101, 23
    %v3103 = vor.u32 4788187, %v3102
    %v3104 = vand.u32 2147483647, %v3103
    %v3106 = vcvt.s32.f32 %v3099
    %v3107 = vmul.f32 %v3106, %v3104
    %v3108 = vxor.u32 %v3107, 2147483648
    %v3109 = vsel %vm3026, %v3108, %v3107
    %v3110 = vsub.s32 4, %v3086
    %v3111 = vsel %vm3026, %v3110, %v3086
    %v3112 = vsel %vm3025, %v410, %v3109
    %v3113 = vsel %vm3025, 0, %v3111
    %v3114 = vcosq.f32.pop %v3112
    %v3115 = vsinq.f32.pop %v3112
    %vm3116 = vweird.f32 %v410
    %v3117 = vadd.s32 %v3113, 3
    %v3118 = vand.u32 %v3117, 3
    %vm3119 = vcmp.lt.s32.totalorder %v3118, 2
    %vm3120 = vcmp.eq.s32.totalorder %v3118, 0
    %v3121 = vxor.u32 %v3115, 2147483648
    %v3122 = vsel %vm3120, %v3114, %v3121
    %vm3123 = vcmp.eq.s32.totalorder %v3118, 2
    %v3124 = vxor.u32 %v3114, 2147483648
    %v3125 = vsel %vm3123, %v3124, %v3115
    %v3126 = vsel %vm3119, %v3122, %v3125
    %v3127 = vsel %vm3116, nan, %v3126
    %v3128 = vand.u32 2147483647, %v415
    %vm3129 = vcmp.le.f32.partialorder %v3128, 0.7853982
    %vm3130 = vcmp.lt.s32.totalorder %v415, 0
    %v3131 = vand.u32 %v415, 2139095040
    %v3132 = vshrl.u32 %v3131, 23
    %v3133 = vsub.s32 %v3132, 127
    %v3134 = vand.u32 2147483647, %v415
    %v3135 = vand.u32 %v3134, 8388607
    %v3136 = vor.u32 %v3135, 8388608
    %v3137 = vsub.s32 0, %v3136
    %v3138 = vadd.s32 %v3133, 1
    %vm3139 = vcmp.gt.s32.totalorder %v3138, 0
    %v3140 = vsel %vm3139, %v3138, 0
    %v3141 = vshrl.u32 %v3140, 5
    %v3142 = vand.u32 %v3140, 31
    %v3143 = vsub.s32 32, %v3142
    %v3144 = vshrl.u32 683565275, %v3143
    %v3145 = vshll.u32 683565275, %v3142
    %v3146 = vshrl.u32 2475754826, %v3143
    %v3147 = vor.u32 %v3145, %v3146
    %v3148 = vshll.u32 2475754826, %v3142
    %v3149 = vshrl.u32 2131351028, %v3143
    %v3150 = vor.u32 %v3148, %v3149
    %v3151 = vshll.u32 2131351028, %v3142
    %v3152 = vshrl.u32 2102212464, %v3143
    %v3153 = vor.u32 %v3151, %v3152
    %v3154 = vshll.u32 2102212464, %v3142
    %v3155 = vshrl.u32 920167782, %v3143
    %v3156 = vor.u32 %v3154, %v3155
    %v3157 = vshll.u32 920167782, %v3142
    %v3158 = vshrl.u32 1326507024, %v3143
    %v3159 = vor.u32 %v3157, %v3158
    %vm3160 = vcmp.lt.s32.totalorder %v3141, 1
    %vm3161 = vcmp.lt.s32.totalorder %v3141, 2
    %vm3162 = vcmp.lt.s32.totalorder %v3141, 3
    %vm3163 = vcmp.lt.s32.totalorder %v3141, 4
    %v3164 = vsel %vm3160, %v3144, %v3147
    %v3165 = vsel %vm3163, %v3153, 2102212464
    %v3166 = vsel %vm3162, %v3150, %v3165
    %v3167 = vsel %vm3161, %v3164, %v3166
    %v3168 = vsel %vm3160, %v3147, %v3150
    %v3169 = vsel %vm3163, %v3156, 920167782
    %v3170 = vsel %vm3162, %v3153, %v3169
    %v3171 = vsel %vm3161, %v3168, %v3170
    %v3172 = vsel %vm3160, %v3150, %v3153
    %v3173 = vsel %vm3163, %v3159, 1326507024
    %v3174 = vsel %vm3162, %v3156, %v3173
    %v3175 = vsel %vm3161, %v3172, %v3174
    %v3176 = vshll.u32 %v3136, 8
    %v3177 = vmul.u32.u64.compose %v3176, %v3175
    %v3178 = vextract.low.u32 %v3177
    %v3179 = vextract.high.u32 %v3177
    %v3180 = vmul.u32.u64.compose %v3176, %v3171
    %v3181 = vextract.low.u32 %v3180
    %v3182 = vextract.high.u32 %v3180
    %v3183 = vmul.u32 %v3176, %v3167
    %v3184 = vadd.s32 %v3179, %v3181
    %vm3185 = vc.u32 %v3179, %v3181
    %v3186 = vadd.s32 %v3182, 1
    %v3187 = vsel %vm3185, %v3186, %v3182
    %v3188 = vadd.s32 %v3183, %v3187
    %v3189 = vadd.s32 %v3188, 536870912
    %v3190 = vshrl.u32 %v3189, 30
    %v3191 = vshll.u32 %v3190, 30
    %v3192 = vsub.s32 %v3188, %v3191
    %vm3193 = vcmp.lt.s32.totalorder %v3192, 0
    %v3194 = vsub.s32 0, %v3192
    %v3195 = vsel %vm3193, %v3194, %v3192
    %v3196 = vclz %v3195
    %v3197 = vsub.s32 %v3196, 2
    %vm3198 = vcmp.gt.s32.totalorder 0, %v3197
    %v3199 = vsel %vm3198, 0, %v3197
    %v3200 = vsub.s32 32, %v3199
    %v3201 = vshll.u32 %v3192, %v3199
    %v3202 = vshrl.u32 %v3184, %v3200
    %v3203 = vor.u32 %v3201, %v3202
    %v3204 = vsub.s32 4294967266, %v3199
    %v3205 = vadd.s32 %v3204, 127
    %v3206 = vshll.u32 %v3205, 23
    %v3207 = vor.u32 4788187, %v3206
    %v3208 = vand.u32 2147483647, %v3207
    %v3210 = vcvt.s32.f32 %v3203
    %v3211 = vmul.f32 %v3210, %v3208
    %v3212 = vxor.u32 %v3211, 2147483648
    %v3213 = vsel %vm3130, %v3212, %v3211
    %v3214 = vsub.s32 4, %v3190
    %v3215 = vsel %vm3130, %v3214, %v3190
    %v3216 = vsel %vm3129, %v415, %v3213
    %v3217 = vsel %vm3129, 0, %v3215
    %v3218 = vcosq.f32.pop %v3216
    %v3219 = vsinq.f32.pop %v3216
    %vm3220 = vweird.f32 %v415
    %v3221 = vadd.s32 %v3217, 3
    %v3222 = vand.u32 %v3221, 3
    %vm3223 = vcmp.lt.s32.totalorder %v3222, 2
    %vm3224 = vcmp.eq.s32.totalorder %v3222, 0
    %v3225 = vxor.u32 %v3219, 2147483648
    %v3226 = vsel %vm3224, %v3218, %v3225
    %vm3227 = vcmp.eq.s32.totalorder %v3222, 2
    %v3228 = vxor.u32 %v3218, 2147483648
    %v3229 = vsel %vm3227, %v3228, %v3219
    %v3230 = vsel %vm3223, %v3226, %v3229
    %v3231 = vsel %vm3220, nan, %v3230
    %v3232 = vand.u32 2147483647, %v420
    %vm3233 = vcmp.le.f32.partialorder %v3232, 0.7853982
    %vm3234 = vcmp.lt.s32.totalorder %v420, 0
    %v3235 = vand.u32 %v420, 2139095040
    %v3236 = vshrl.u32 %v3235, 23
    %v3237 = vsub.s32 %v3236, 127
    %v3238 = vand.u32 2147483647, %v420
    %v3239 = vand.u32 %v3238, 8388607
    %v3240 = vor.u32 %v3239, 8388608
    %v3241 = vsub.s32 0, %v3240
    %v3242 = vadd.s32 %v3237, 1
    %vm3243 = vcmp.gt.s32.totalorder %v3242, 0
    %v3244 = vsel %vm3243, %v3242, 0
    %v3245 = vshrl.u32 %v3244, 5
    %v3246 = vand.u32 %v3244, 31
    %v3247 = vsub.s32 32, %v3246
    %v3248 = vshrl.u32 683565275, %v3247
    %v3249 = vshll.u32 683565275, %v3246
    %v3250 = vshrl.u32 2475754826, %v3247
    %v3251 = vor.u32 %v3249, %v3250
    %v3252 = vshll.u32 2475754826, %v3246
    %v3253 = vshrl.u32 2131351028, %v3247
    %v3254 = vor.u32 %v3252, %v3253
    %v3255 = vshll.u32 2131351028, %v3246
    %v3256 = vshrl.u32 2102212464, %v3247
    %v3257 = vor.u32 %v3255, %v3256
    %v3258 = vshll.u32 2102212464, %v3246
    %v3259 = vshrl.u32 920167782, %v3247
    %v3260 = vor.u32 %v3258, %v3259
    %v3261 = vshll.u32 920167782, %v3246
    %v3262 = vshrl.u32 1326507024, %v3247
    %v3263 = vor.u32 %v3261, %v3262
    %vm3264 = vcmp.lt.s32.totalorder %v3245, 1
    %vm3265 = vcmp.lt.s32.totalorder %v3245, 2
    %vm3266 = vcmp.lt.s32.totalorder %v3245, 3
    %vm3267 = vcmp.lt.s32.totalorder %v3245, 4
    %v3268 = vsel %vm3264, %v3248, %v3251
    %v3269 = vsel %vm3267, %v3257, 2102212464
    %v3270 = vsel %vm3266, %v3254, %v3269
    %v3271 = vsel %vm3265, %v3268, %v3270
    %v3272 = vsel %vm3264, %v3251, %v3254
    %v3273 = vsel %vm3267, %v3260, 920167782
    %v3274 = vsel %vm3266, %v3257, %v3273
    %v3275 = vsel %vm3265, %v3272, %v3274
    %v3276 = vsel %vm3264, %v3254, %v3257
    %v3277 = vsel %vm3267, %v3263, 1326507024
    %v3278 = vsel %vm3266, %v3260, %v3277
    %v3279 = vsel %vm3265, %v3276, %v3278
    %v3280 = vshll.u32 %v3240, 8
    %v3281 = vmul.u32.u64.compose %v3280, %v3279
    %v3282 = vextract.low.u32 %v3281
    %v3283 = vextract.high.u32 %v3281
    %v3284 = vmul.u32.u64.compose %v3280, %v3275
    %v3285 = vextract.low.u32 %v3284
    %v3286 = vextract.high.u32 %v3284
    %v3287 = vmul.u32 %v3280, %v3271
    %v3288 = vadd.s32 %v3283, %v3285
    %vm3289 = vc.u32 %v3283, %v3285
    %v3290 = vadd.s32 %v3286, 1
    %v3291 = vsel %vm3289, %v3290, %v3286
    %v3292 = vadd.s32 %v3287, %v3291
    %v3293 = vadd.s32 %v3292, 536870912
    %v3294 = vshrl.u32 %v3293, 30
    %v3295 = vshll.u32 %v3294, 30
    %v3296 = vsub.s32 %v3292, %v3295
    %vm3297 = vcmp.lt.s32.totalorder %v3296, 0
    %v3298 = vsub.s32 0, %v3296
    %v3299 = vsel %vm3297, %v3298, %v3296
    %v3300 = vclz %v3299
    %v3301 = vsub.s32 %v3300, 2
    %vm3302 = vcmp.gt.s32.totalorder 0, %v3301
    %v3303 = vsel %vm3302, 0, %v3301
    %v3304 = vsub.s32 32, %v3303
    %v3305 = vshll.u32 %v3296, %v3303
    %v3306 = vshrl.u32 %v3288, %v3304
    %v3307 = vor.u32 %v3305, %v3306
    %v3308 = vsub.s32 4294967266, %v3303
    %v3309 = vadd.s32 %v3308, 127
    %v3310 = vshll.u32 %v3309, 23
    %v3311 = vor.u32 4788187, %v3310
    %v3312 = vand.u32 2147483647, %v3311
    %v3314 = vcvt.s32.f32 %v3307
    %v3315 = vmul.f32 %v3314, %v3312
    %v3316 = vxor.u32 %v3315, 2147483648
    %v3317 = vsel %vm3234, %v3316, %v3315
    %v3318 = vsub.s32 4, %v3294
    %v3319 = vsel %vm3234, %v3318, %v3294
    %v3320 = vsel %vm3233, %v420, %v3317
    %v3321 = vsel %vm3233, 0, %v3319
    %v3322 = vcosq.f32.pop %v3320
    %v3323 = vsinq.f32.pop %v3320
    %vm3324 = vweird.f32 %v420
    %v3325 = vadd.s32 %v3321, 3
    %v3326 = vand.u32 %v3325, 3
    %vm3327 = vcmp.lt.s32.totalorder %v3326, 2
    %vm3328 = vcmp.eq.s32.totalorder %v3326, 0
    %v3329 = vxor.u32 %v3323, 2147483648
    %v3330 = vsel %vm3328, %v3322, %v3329
    %vm3331 = vcmp.eq.s32.totalorder %v3326, 2
    %v3332 = vxor.u32 %v3322, 2147483648
    %v3333 = vsel %vm3331, %v3332, %v3323
    %v3334 = vsel %vm3327, %v3330, %v3333
    %v3335 = vsel %vm3324, nan, %v3334
    %v3336 = vand.u32 2147483647, %v425
    %vm3337 = vcmp.le.f32.partialorder %v3336, 0.7853982
    %vm3338 = vcmp.lt.s32.totalorder %v425, 0
    %v3339 = vand.u32 %v425, 2139095040
    %v3340 = vshrl.u32 %v3339, 23
    %v3341 = vsub.s32 %v3340, 127
    %v3342 = vand.u32 2147483647, %v425
    %v3343 = vand.u32 %v3342, 8388607
    %v3344 = vor.u32 %v3343, 8388608
    %v3345 = vsub.s32 0, %v3344
    %v3346 = vadd.s32 %v3341, 1
    %vm3347 = vcmp.gt.s32.totalorder %v3346, 0
    %v3348 = vsel %vm3347, %v3346, 0
    %v3349 = vshrl.u32 %v3348, 5
    %v3350 = vand.u32 %v3348, 31
    %v3351 = vsub.s32 32, %v3350
    %v3352 = vshrl.u32 683565275, %v3351
    %v3353 = vshll.u32 683565275, %v3350
    %v3354 = vshrl.u32 2475754826, %v3351
    %v3355 = vor.u32 %v3353, %v3354
    %v3356 = vshll.u32 2475754826, %v3350
    %v3357 = vshrl.u32 2131351028, %v3351
    %v3358 = vor.u32 %v3356, %v3357
    %v3359 = vshll.u32 2131351028, %v3350
    %v3360 = vshrl.u32 2102212464, %v3351
    %v3361 = vor.u32 %v3359, %v3360
    %v3362 = vshll.u32 2102212464, %v3350
    %v3363 = vshrl.u32 920167782, %v3351
    %v3364 = vor.u32 %v3362, %v3363
    %v3365 = vshll.u32 920167782, %v3350
    %v3366 = vshrl.u32 1326507024, %v3351
    %v3367 = vor.u32 %v3365, %v3366
    %vm3368 = vcmp.lt.s32.totalorder %v3349, 1
    %vm3369 = vcmp.lt.s32.totalorder %v3349, 2
    %vm3370 = vcmp.lt.s32.totalorder %v3349, 3
    %vm3371 = vcmp.lt.s32.totalorder %v3349, 4
    %v3372 = vsel %vm3368, %v3352, %v3355
    %v3373 = vsel %vm3371, %v3361, 2102212464
    %v3374 = vsel %vm3370, %v3358, %v3373
    %v3375 = vsel %vm3369, %v3372, %v3374
    %v3376 = vsel %vm3368, %v3355, %v3358
    %v3377 = vsel %vm3371, %v3364, 920167782
    %v3378 = vsel %vm3370, %v3361, %v3377
    %v3379 = vsel %vm3369, %v3376, %v3378
    %v3380 = vsel %vm3368, %v3358, %v3361
    %v3381 = vsel %vm3371, %v3367, 1326507024
    %v3382 = vsel %vm3370, %v3364, %v3381
    %v3383 = vsel %vm3369, %v3380, %v3382
    %v3384 = vshll.u32 %v3344, 8
    %v3385 = vmul.u32.u64.compose %v3384, %v3383
    %v3386 = vextract.low.u32 %v3385
    %v3387 = vextract.high.u32 %v3385
    %v3388 = vmul.u32.u64.compose %v3384, %v3379
    %v3389 = vextract.low.u32 %v3388
    %v3390 = vextract.high.u32 %v3388
    %v3391 = vmul.u32 %v3384, %v3375
    %v3392 = vadd.s32 %v3387, %v3389
    %vm3393 = vc.u32 %v3387, %v3389
    %v3394 = vadd.s32 %v3390, 1
    %v3395 = vsel %vm3393, %v3394, %v3390
    %v3396 = vadd.s32 %v3391, %v3395
    %v3397 = vadd.s32 %v3396, 536870912
    %v3398 = vshrl.u32 %v3397, 30
    %v3399 = vshll.u32 %v3398, 30
    %v3400 = vsub.s32 %v3396, %v3399
    %vm3401 = vcmp.lt.s32.totalorder %v3400, 0
    %v3402 = vsub.s32 0, %v3400
    %v3403 = vsel %vm3401, %v3402, %v3400
    %v3404 = vclz %v3403
    %v3405 = vsub.s32 %v3404, 2
    %vm3406 = vcmp.gt.s32.totalorder 0, %v3405
    %v3407 = vsel %vm3406, 0, %v3405
    %v3408 = vsub.s32 32, %v3407
    %v3409 = vshll.u32 %v3400, %v3407
    %v3410 = vshrl.u32 %v3392, %v3408
    %v3411 = vor.u32 %v3409, %v3410
    %v3412 = vsub.s32 4294967266, %v3407
    %v3413 = vadd.s32 %v3412, 127
    %v3414 = vshll.u32 %v3413, 23
    %v3415 = vor.u32 4788187, %v3414
    %v3416 = vand.u32 2147483647, %v3415
    %v3418 = vcvt.s32.f32 %v3411
    %v3419 = vmul.f32 %v3418, %v3416
    %v3420 = vxor.u32 %v3419, 2147483648
    %v3421 = vsel %vm3338, %v3420, %v3419
    %v3422 = vsub.s32 4, %v3398
    %v3423 = vsel %vm3338, %v3422, %v3398
    %v3424 = vsel %vm3337, %v425, %v3421
    %v3425 = vsel %vm3337, 0, %v3423
    %v3426 = vcosq.f32.pop %v3424
    %v3427 = vsinq.f32.pop %v3424
    %vm3428 = vweird.f32 %v425
    %v3429 = vadd.s32 %v3425, 3
    %v3430 = vand.u32 %v3429, 3
    %vm3431 = vcmp.lt.s32.totalorder %v3430, 2
    %vm3432 = vcmp.eq.s32.totalorder %v3430, 0
    %v3433 = vxor.u32 %v3427, 2147483648
    %v3434 = vsel %vm3432, %v3426, %v3433
    %vm3435 = vcmp.eq.s32.totalorder %v3430, 2
    %v3436 = vxor.u32 %v3426, 2147483648
    %v3437 = vsel %vm3435, %v3436, %v3427
    %v3438 = vsel %vm3431, %v3434, %v3437
    %v3439 = vsel %vm3428, nan, %v3438
    %v3440 = vand.u32 2147483647, %v430
    %vm3441 = vcmp.le.f32.partialorder %v3440, 0.7853982
    %vm3442 = vcmp.lt.s32.totalorder %v430, 0
    %v3443 = vand.u32 %v430, 2139095040
    %v3444 = vshrl.u32 %v3443, 23
    %v3445 = vsub.s32 %v3444, 127
    %v3446 = vand.u32 2147483647, %v430
    %v3447 = vand.u32 %v3446, 8388607
    %v3448 = vor.u32 %v3447, 8388608
    %v3449 = vsub.s32 0, %v3448
    %v3450 = vadd.s32 %v3445, 1
    %vm3451 = vcmp.gt.s32.totalorder %v3450, 0
    %v3452 = vsel %vm3451, %v3450, 0
    %v3453 = vshrl.u32 %v3452, 5
    %v3454 = vand.u32 %v3452, 31
    %v3455 = vsub.s32 32, %v3454
    %v3456 = vshrl.u32 683565275, %v3455
    %v3457 = vshll.u32 683565275, %v3454
    %v3458 = vshrl.u32 2475754826, %v3455
    %v3459 = vor.u32 %v3457, %v3458
    %v3460 = vshll.u32 2475754826, %v3454
    %v3461 = vshrl.u32 2131351028, %v3455
    %v3462 = vor.u32 %v3460, %v3461
    %v3463 = vshll.u32 2131351028, %v3454
    %v3464 = vshrl.u32 2102212464, %v3455
    %v3465 = vor.u32 %v3463, %v3464
    %v3466 = vshll.u32 2102212464, %v3454
    %v3467 = vshrl.u32 920167782, %v3455
    %v3468 = vor.u32 %v3466, %v3467
    %v3469 = vshll.u32 920167782, %v3454
    %v3470 = vshrl.u32 1326507024, %v3455
    %v3471 = vor.u32 %v3469, %v3470
    %vm3472 = vcmp.lt.s32.totalorder %v3453, 1
    %vm3473 = vcmp.lt.s32.totalorder %v3453, 2
    %vm3474 = vcmp.lt.s32.totalorder %v3453, 3
    %vm3475 = vcmp.lt.s32.totalorder %v3453, 4
    %v3476 = vsel %vm3472, %v3456, %v3459
    %v3477 = vsel %vm3475, %v3465, 2102212464
    %v3478 = vsel %vm3474, %v3462, %v3477
    %v3479 = vsel %vm3473, %v3476, %v3478
    %v3480 = vsel %vm3472, %v3459, %v3462
    %v3481 = vsel %vm3475, %v3468, 920167782
    %v3482 = vsel %vm3474, %v3465, %v3481
    %v3483 = vsel %vm3473, %v3480, %v3482
    %v3484 = vsel %vm3472, %v3462, %v3465
    %v3485 = vsel %vm3475, %v3471, 1326507024
    %v3486 = vsel %vm3474, %v3468, %v3485
    %v3487 = vsel %vm3473, %v3484, %v3486
    %v3488 = vshll.u32 %v3448, 8
    %v3489 = vmul.u32.u64.compose %v3488, %v3487
    %v3490 = vextract.low.u32 %v3489
    %v3491 = vextract.high.u32 %v3489
    %v3492 = vmul.u32.u64.compose %v3488, %v3483
    %v3493 = vextract.low.u32 %v3492
    %v3494 = vextract.high.u32 %v3492
    %v3495 = vmul.u32 %v3488, %v3479
    %v3496 = vadd.s32 %v3491, %v3493
    %vm3497 = vc.u32 %v3491, %v3493
    %v3498 = vadd.s32 %v3494, 1
    %v3499 = vsel %vm3497, %v3498, %v3494
    %v3500 = vadd.s32 %v3495, %v3499
    %v3501 = vadd.s32 %v3500, 536870912
    %v3502 = vshrl.u32 %v3501, 30
    %v3503 = vshll.u32 %v3502, 30
    %v3504 = vsub.s32 %v3500, %v3503
    %vm3505 = vcmp.lt.s32.totalorder %v3504, 0
    %v3506 = vsub.s32 0, %v3504
    %v3507 = vsel %vm3505, %v3506, %v3504
    %v3508 = vclz %v3507
    %v3509 = vsub.s32 %v3508, 2
    %vm3510 = vcmp.gt.s32.totalorder 0, %v3509
    %v3511 = vsel %vm3510, 0, %v3509
    %v3512 = vsub.s32 32, %v3511
    %v3513 = vshll.u32 %v3504, %v3511
    %v3514 = vshrl.u32 %v3496, %v3512
    %v3515 = vor.u32 %v3513, %v3514
    %v3516 = vsub.s32 4294967266, %v3511
    %v3517 = vadd.s32 %v3516, 127
    %v3518 = vshll.u32 %v3517, 23
    %v3519 = vor.u32 4788187, %v3518
    %v3520 = vand.u32 2147483647, %v3519
    %v3522 = vcvt.s32.f32 %v3515
    %v3523 = vmul.f32 %v3522, %v3520
    %v3524 = vxor.u32 %v3523, 2147483648
    %v3525 = vsel %vm3442, %v3524, %v3523
    %v3526 = vsub.s32 4, %v3502
    %v3527 = vsel %vm3442, %v3526, %v3502
    %v3528 = vsel %vm3441, %v430, %v3525
    %v3529 = vsel %vm3441, 0, %v3527
    %v3530 = vcosq.f32.pop %v3528
    %v3531 = vsinq.f32.pop %v3528
    %vm3532 = vweird.f32 %v430
    %v3533 = vadd.s32 %v3529, 3
    %v3534 = vand.u32 %v3533, 3
    %vm3535 = vcmp.lt.s32.totalorder %v3534, 2
    %vm3536 = vcmp.eq.s32.totalorder %v3534, 0
    %v3537 = vxor.u32 %v3531, 2147483648
    %v3538 = vsel %vm3536, %v3530, %v3537
    %vm3539 = vcmp.eq.s32.totalorder %v3534, 2
    %v3540 = vxor.u32 %v3530, 2147483648
    %v3541 = vsel %vm3539, %v3540, %v3531
    %v3542 = vsel %vm3535, %v3538, %v3541
    %v3543 = vsel %vm3532, nan, %v3542
    %v3544 = vand.u32 2147483647, %v435
    %vm3545 = vcmp.le.f32.partialorder %v3544, 0.7853982
    %vm3546 = vcmp.lt.s32.totalorder %v435, 0
    %v3547 = vand.u32 %v435, 2139095040
    %v3548 = vshrl.u32 %v3547, 23
    %v3549 = vsub.s32 %v3548, 127
    %v3550 = vand.u32 2147483647, %v435
    %v3551 = vand.u32 %v3550, 8388607
    %v3552 = vor.u32 %v3551, 8388608
    %v3553 = vsub.s32 0, %v3552
    %v3554 = vadd.s32 %v3549, 1
    %vm3555 = vcmp.gt.s32.totalorder %v3554, 0
    %v3556 = vsel %vm3555, %v3554, 0
    %v3557 = vshrl.u32 %v3556, 5
    %v3558 = vand.u32 %v3556, 31
    %v3559 = vsub.s32 32, %v3558
    %v3560 = vshrl.u32 683565275, %v3559
    %v3561 = vshll.u32 683565275, %v3558
    %v3562 = vshrl.u32 2475754826, %v3559
    %v3563 = vor.u32 %v3561, %v3562
    %v3564 = vshll.u32 2475754826, %v3558
    %v3565 = vshrl.u32 2131351028, %v3559
    %v3566 = vor.u32 %v3564, %v3565
    %v3567 = vshll.u32 2131351028, %v3558
    %v3568 = vshrl.u32 2102212464, %v3559
    %v3569 = vor.u32 %v3567, %v3568
    %v3570 = vshll.u32 2102212464, %v3558
    %v3571 = vshrl.u32 920167782, %v3559
    %v3572 = vor.u32 %v3570, %v3571
    %v3573 = vshll.u32 920167782, %v3558
    %v3574 = vshrl.u32 1326507024, %v3559
    %v3575 = vor.u32 %v3573, %v3574
    %vm3576 = vcmp.lt.s32.totalorder %v3557, 1
    %vm3577 = vcmp.lt.s32.totalorder %v3557, 2
    %vm3578 = vcmp.lt.s32.totalorder %v3557, 3
    %vm3579 = vcmp.lt.s32.totalorder %v3557, 4
    %v3580 = vsel %vm3576, %v3560, %v3563
    %v3581 = vsel %vm3579, %v3569, 2102212464
    %v3582 = vsel %vm3578, %v3566, %v3581
    %v3583 = vsel %vm3577, %v3580, %v3582
    %v3584 = vsel %vm3576, %v3563, %v3566
    %v3585 = vsel %vm3579, %v3572, 920167782
    %v3586 = vsel %vm3578, %v3569, %v3585
    %v3587 = vsel %vm3577, %v3584, %v3586
    %v3588 = vsel %vm3576, %v3566, %v3569
    %v3589 = vsel %vm3579, %v3575, 1326507024
    %v3590 = vsel %vm3578, %v3572, %v3589
    %v3591 = vsel %vm3577, %v3588, %v3590
    %v3592 = vshll.u32 %v3552, 8
    %v3593 = vmul.u32.u64.compose %v3592, %v3591
    %v3594 = vextract.low.u32 %v3593
    %v3595 = vextract.high.u32 %v3593
    %v3596 = vmul.u32.u64.compose %v3592, %v3587
    %v3597 = vextract.low.u32 %v3596
    %v3598 = vextract.high.u32 %v3596
    %v3599 = vmul.u32 %v3592, %v3583
    %v3600 = vadd.s32 %v3595, %v3597
    %vm3601 = vc.u32 %v3595, %v3597
    %v3602 = vadd.s32 %v3598, 1
    %v3603 = vsel %vm3601, %v3602, %v3598
    %v3604 = vadd.s32 %v3599, %v3603
    %v3605 = vadd.s32 %v3604, 536870912
    %v3606 = vshrl.u32 %v3605, 30
    %v3607 = vshll.u32 %v3606, 30
    %v3608 = vsub.s32 %v3604, %v3607
    %vm3609 = vcmp.lt.s32.totalorder %v3608, 0
    %v3610 = vsub.s32 0, %v3608
    %v3611 = vsel %vm3609, %v3610, %v3608
    %v3612 = vclz %v3611
    %v3613 = vsub.s32 %v3612, 2
    %vm3614 = vcmp.gt.s32.totalorder 0, %v3613
    %v3615 = vsel %vm3614, 0, %v3613
    %v3616 = vsub.s32 32, %v3615
    %v3617 = vshll.u32 %v3608, %v3615
    %v3618 = vshrl.u32 %v3600, %v3616
    %v3619 = vor.u32 %v3617, %v3618
    %v3620 = vsub.s32 4294967266, %v3615
    %v3621 = vadd.s32 %v3620, 127
    %v3622 = vshll.u32 %v3621, 23
    %v3623 = vor.u32 4788187, %v3622
    %v3624 = vand.u32 2147483647, %v3623
    %v3626 = vcvt.s32.f32 %v3619
    %v3627 = vmul.f32 %v3626, %v3624
    %v3628 = vxor.u32 %v3627, 2147483648
    %v3629 = vsel %vm3546, %v3628, %v3627
    %v3630 = vsub.s32 4, %v3606
    %v3631 = vsel %vm3546, %v3630, %v3606
    %v3632 = vsel %vm3545, %v435, %v3629
    %v3633 = vsel %vm3545, 0, %v3631
    %v3634 = vcosq.f32.pop %v3632
    %v3635 = vsinq.f32.pop %v3632
    %vm3636 = vweird.f32 %v435
    %v3637 = vadd.s32 %v3633, 3
    %v3638 = vand.u32 %v3637, 3
    %vm3639 = vcmp.lt.s32.totalorder %v3638, 2
    %vm3640 = vcmp.eq.s32.totalorder %v3638, 0
    %v3641 = vxor.u32 %v3635, 2147483648
    %v3642 = vsel %vm3640, %v3634, %v3641
    %vm3643 = vcmp.eq.s32.totalorder %v3638, 2
    %v3644 = vxor.u32 %v3634, 2147483648
    %v3645 = vsel %vm3643, %v3644, %v3635
    %v3646 = vsel %vm3639, %v3642, %v3645
    %v3647 = vsel %vm3636, nan, %v3646
    %v3648 = vand.u32 2147483647, %v440
    %vm3649 = vcmp.le.f32.partialorder %v3648, 0.7853982
    %vm3650 = vcmp.lt.s32.totalorder %v440, 0
    %v3651 = vand.u32 %v440, 2139095040
    %v3652 = vshrl.u32 %v3651, 23
    %v3653 = vsub.s32 %v3652, 127
    %v3654 = vand.u32 2147483647, %v440
    %v3655 = vand.u32 %v3654, 8388607
    %v3656 = vor.u32 %v3655, 8388608
    %v3657 = vsub.s32 0, %v3656
    %v3658 = vadd.s32 %v3653, 1
    %vm3659 = vcmp.gt.s32.totalorder %v3658, 0
    %v3660 = vsel %vm3659, %v3658, 0
    %v3661 = vshrl.u32 %v3660, 5
    %v3662 = vand.u32 %v3660, 31
    %v3663 = vsub.s32 32, %v3662
    %v3664 = vshrl.u32 683565275, %v3663
    %v3665 = vshll.u32 683565275, %v3662
    %v3666 = vshrl.u32 2475754826, %v3663
    %v3667 = vor.u32 %v3665, %v3666
    %v3668 = vshll.u32 2475754826, %v3662
    %v3669 = vshrl.u32 2131351028, %v3663
    %v3670 = vor.u32 %v3668, %v3669
    %v3671 = vshll.u32 2131351028, %v3662
    %v3672 = vshrl.u32 2102212464, %v3663
    %v3673 = vor.u32 %v3671, %v3672
    %v3674 = vshll.u32 2102212464, %v3662
    %v3675 = vshrl.u32 920167782, %v3663
    %v3676 = vor.u32 %v3674, %v3675
    %v3677 = vshll.u32 920167782, %v3662
    %v3678 = vshrl.u32 1326507024, %v3663
    %v3679 = vor.u32 %v3677, %v3678
    %vm3680 = vcmp.lt.s32.totalorder %v3661, 1
    %vm3681 = vcmp.lt.s32.totalorder %v3661, 2
    %vm3682 = vcmp.lt.s32.totalorder %v3661, 3
    %vm3683 = vcmp.lt.s32.totalorder %v3661, 4
    %v3684 = vsel %vm3680, %v3664, %v3667
    %v3685 = vsel %vm3683, %v3673, 2102212464
    %v3686 = vsel %vm3682, %v3670, %v3685
    %v3687 = vsel %vm3681, %v3684, %v3686
    %v3688 = vsel %vm3680, %v3667, %v3670
    %v3689 = vsel %vm3683, %v3676, 920167782
    %v3690 = vsel %vm3682, %v3673, %v3689
    %v3691 = vsel %vm3681, %v3688, %v3690
    %v3692 = vsel %vm3680, %v3670, %v3673
    %v3693 = vsel %vm3683, %v3679, 1326507024
    %v3694 = vsel %vm3682, %v3676, %v3693
    %v3695 = vsel %vm3681, %v3692, %v3694
    %v3696 = vshll.u32 %v3656, 8
    %v3697 = vmul.u32.u64.compose %v3696, %v3695
    %v3698 = vextract.low.u32 %v3697
    %v3699 = vextract.high.u32 %v3697
    %v3700 = vmul.u32.u64.compose %v3696, %v3691
    %v3701 = vextract.low.u32 %v3700
    %v3702 = vextract.high.u32 %v3700
    %v3703 = vmul.u32 %v3696, %v3687
    %v3704 = vadd.s32 %v3699, %v3701
    %vm3705 = vc.u32 %v3699, %v3701
    %v3706 = vadd.s32 %v3702, 1
    %v3707 = vsel %vm3705, %v3706, %v3702
    %v3708 = vadd.s32 %v3703, %v3707
    %v3709 = vadd.s32 %v3708, 536870912
    %v3710 = vshrl.u32 %v3709, 30
    %v3711 = vshll.u32 %v3710, 30
    %v3712 = vsub.s32 %v3708, %v3711
    %vm3713 = vcmp.lt.s32.totalorder %v3712, 0
    %v3714 = vsub.s32 0, %v3712
    %v3715 = vsel %vm3713, %v3714, %v3712
    %v3716 = vclz %v3715
    %v3717 = vsub.s32 %v3716, 2
    %vm3718 = vcmp.gt.s32.totalorder 0, %v3717
    %v3719 = vsel %vm3718, 0, %v3717
    %v3720 = vsub.s32 32, %v3719
    %v3721 = vshll.u32 %v3712, %v3719
    %v3722 = vshrl.u32 %v3704, %v3720
    %v3723 = vor.u32 %v3721, %v3722
    %v3724 = vsub.s32 4294967266, %v3719
    %v3725 = vadd.s32 %v3724, 127
    %v3726 = vshll.u32 %v3725, 23
    %v3727 = vor.u32 4788187, %v3726
    %v3728 = vand.u32 2147483647, %v3727
    %v3730 = vcvt.s32.f32 %v3723
    %v3731 = vmul.f32 %v3730, %v3728
    %v3732 = vxor.u32 %v3731, 2147483648
    %v3733 = vsel %vm3650, %v3732, %v3731
    %v3734 = vsub.s32 4, %v3710
    %v3735 = vsel %vm3650, %v3734, %v3710
    %v3736 = vsel %vm3649, %v440, %v3733
    %v3737 = vsel %vm3649, 0, %v3735
    %v3738 = vcosq.f32.pop %v3736
    %v3739 = vsinq.f32.pop %v3736
    %vm3740 = vweird.f32 %v440
    %v3741 = vadd.s32 %v3737, 3
    %v3742 = vand.u32 %v3741, 3
    %vm3743 = vcmp.lt.s32.totalorder %v3742, 2
    %vm3744 = vcmp.eq.s32.totalorder %v3742, 0
    %v3745 = vxor.u32 %v3739, 2147483648
    %v3746 = vsel %vm3744, %v3738, %v3745
    %vm3747 = vcmp.eq.s32.totalorder %v3742, 2
    %v3748 = vxor.u32 %v3738, 2147483648
    %v3749 = vsel %vm3747, %v3748, %v3739
    %v3750 = vsel %vm3743, %v3746, %v3749
    %v3751 = vsel %vm3740, nan, %v3750
    %v3752 = vand.u32 2147483647, %v445
    %vm3753 = vcmp.le.f32.partialorder %v3752, 0.7853982
    %vm3754 = vcmp.lt.s32.totalorder %v445, 0
    %v3755 = vand.u32 %v445, 2139095040
    %v3756 = vshrl.u32 %v3755, 23
    %v3757 = vsub.s32 %v3756, 127
    %v3758 = vand.u32 2147483647, %v445
    %v3759 = vand.u32 %v3758, 8388607
    %v3760 = vor.u32 %v3759, 8388608
    %v3761 = vsub.s32 0, %v3760
    %v3762 = vadd.s32 %v3757, 1
    %vm3763 = vcmp.gt.s32.totalorder %v3762, 0
    %v3764 = vsel %vm3763, %v3762, 0
    %v3765 = vshrl.u32 %v3764, 5
    %v3766 = vand.u32 %v3764, 31
    %v3767 = vsub.s32 32, %v3766
    %v3768 = vshrl.u32 683565275, %v3767
    %v3769 = vshll.u32 683565275, %v3766
    %v3770 = vshrl.u32 2475754826, %v3767
    %v3771 = vor.u32 %v3769, %v3770
    %v3772 = vshll.u32 2475754826, %v3766
    %v3773 = vshrl.u32 2131351028, %v3767
    %v3774 = vor.u32 %v3772, %v3773
    %v3775 = vshll.u32 2131351028, %v3766
    %v3776 = vshrl.u32 2102212464, %v3767
    %v3777 = vor.u32 %v3775, %v3776
    %v3778 = vshll.u32 2102212464, %v3766
    %v3779 = vshrl.u32 920167782, %v3767
    %v3780 = vor.u32 %v3778, %v3779
    %v3781 = vshll.u32 920167782, %v3766
    %v3782 = vshrl.u32 1326507024, %v3767
    %v3783 = vor.u32 %v3781, %v3782
    %vm3784 = vcmp.lt.s32.totalorder %v3765, 1
    %vm3785 = vcmp.lt.s32.totalorder %v3765, 2
    %vm3786 = vcmp.lt.s32.totalorder %v3765, 3
    %vm3787 = vcmp.lt.s32.totalorder %v3765, 4
    %v3788 = vsel %vm3784, %v3768, %v3771
    %v3789 = vsel %vm3787, %v3777, 2102212464
    %v3790 = vsel %vm3786, %v3774, %v3789
    %v3791 = vsel %vm3785, %v3788, %v3790
    %v3792 = vsel %vm3784, %v3771, %v3774
    %v3793 = vsel %vm3787, %v3780, 920167782
    %v3794 = vsel %vm3786, %v3777, %v3793
    %v3795 = vsel %vm3785, %v3792, %v3794
    %v3796 = vsel %vm3784, %v3774, %v3777
    %v3797 = vsel %vm3787, %v3783, 1326507024
    %v3798 = vsel %vm3786, %v3780, %v3797
    %v3799 = vsel %vm3785, %v3796, %v3798
    %v3800 = vshll.u32 %v3760, 8
    %v3801 = vmul.u32.u64.compose %v3800, %v3799
    %v3802 = vextract.low.u32 %v3801
    %v3803 = vextract.high.u32 %v3801
    %v3804 = vmul.u32.u64.compose %v3800, %v3795
    %v3805 = vextract.low.u32 %v3804
    %v3806 = vextract.high.u32 %v3804
    %v3807 = vmul.u32 %v3800, %v3791
    %v3808 = vadd.s32 %v3803, %v3805
    %vm3809 = vc.u32 %v3803, %v3805
    %v3810 = vadd.s32 %v3806, 1
    %v3811 = vsel %vm3809, %v3810, %v3806
    %v3812 = vadd.s32 %v3807, %v3811
    %v3813 = vadd.s32 %v3812, 536870912
    %v3814 = vshrl.u32 %v3813, 30
    %v3815 = vshll.u32 %v3814, 30
    %v3816 = vsub.s32 %v3812, %v3815
    %vm3817 = vcmp.lt.s32.totalorder %v3816, 0
    %v3818 = vsub.s32 0, %v3816
    %v3819 = vsel %vm3817, %v3818, %v3816
    %v3820 = vclz %v3819
    %v3821 = vsub.s32 %v3820, 2
    %vm3822 = vcmp.gt.s32.totalorder 0, %v3821
    %v3823 = vsel %vm3822, 0, %v3821
    %v3824 = vsub.s32 32, %v3823
    %v3825 = vshll.u32 %v3816, %v3823
    %v3826 = vshrl.u32 %v3808, %v3824
    %v3827 = vor.u32 %v3825, %v3826
    %v3828 = vsub.s32 4294967266, %v3823
    %v3829 = vadd.s32 %v3828, 127
    %v3830 = vshll.u32 %v3829, 23
    %v3831 = vor.u32 4788187, %v3830
    %v3832 = vand.u32 2147483647, %v3831
    %v3834 = vcvt.s32.f32 %v3827
    %v3835 = vmul.f32 %v3834, %v3832
    %v3836 = vxor.u32 %v3835, 2147483648
    %v3837 = vsel %vm3754, %v3836, %v3835
    %v3838 = vsub.s32 4, %v3814
    %v3839 = vsel %vm3754, %v3838, %v3814
    %v3840 = vsel %vm3753, %v445, %v3837
    %v3841 = vsel %vm3753, 0, %v3839
    %v3842 = vcosq.f32.pop %v3840
    %v3843 = vsinq.f32.pop %v3840
    %vm3844 = vweird.f32 %v445
    %v3845 = vadd.s32 %v3841, 3
    %v3846 = vand.u32 %v3845, 3
    %vm3847 = vcmp.lt.s32.totalorder %v3846, 2
    %vm3848 = vcmp.eq.s32.totalorder %v3846, 0
    %v3849 = vxor.u32 %v3843, 2147483648
    %v3850 = vsel %vm3848, %v3842, %v3849
    %vm3851 = vcmp.eq.s32.totalorder %v3846, 2
    %v3852 = vxor.u32 %v3842, 2147483648
    %v3853 = vsel %vm3851, %v3852, %v3843
    %v3854 = vsel %vm3847, %v3850, %v3853
    %v3855 = vsel %vm3844, nan, %v3854
    %v3856 = vand.u32 2147483647, %v450
    %vm3857 = vcmp.le.f32.partialorder %v3856, 0.7853982
    %vm3858 = vcmp.lt.s32.totalorder %v450, 0
    %v3859 = vand.u32 %v450, 2139095040
    %v3860 = vshrl.u32 %v3859, 23
    %v3861 = vsub.s32 %v3860, 127
    %v3862 = vand.u32 2147483647, %v450
    %v3863 = vand.u32 %v3862, 8388607
    %v3864 = vor.u32 %v3863, 8388608
    %v3865 = vsub.s32 0, %v3864
    %v3866 = vadd.s32 %v3861, 1
    %vm3867 = vcmp.gt.s32.totalorder %v3866, 0
    %v3868 = vsel %vm3867, %v3866, 0
    %v3869 = vshrl.u32 %v3868, 5
    %v3870 = vand.u32 %v3868, 31
    %v3871 = vsub.s32 32, %v3870
    %v3872 = vshrl.u32 683565275, %v3871
    %v3873 = vshll.u32 683565275, %v3870
    %v3874 = vshrl.u32 2475754826, %v3871
    %v3875 = vor.u32 %v3873, %v3874
    %v3876 = vshll.u32 2475754826, %v3870
    %v3877 = vshrl.u32 2131351028, %v3871
    %v3878 = vor.u32 %v3876, %v3877
    %v3879 = vshll.u32 2131351028, %v3870
    %v3880 = vshrl.u32 2102212464, %v3871
    %v3881 = vor.u32 %v3879, %v3880
    %v3882 = vshll.u32 2102212464, %v3870
    %v3883 = vshrl.u32 920167782, %v3871
    %v3884 = vor.u32 %v3882, %v3883
    %v3885 = vshll.u32 920167782, %v3870
    %v3886 = vshrl.u32 1326507024, %v3871
    %v3887 = vor.u32 %v3885, %v3886
    %vm3888 = vcmp.lt.s32.totalorder %v3869, 1
    %vm3889 = vcmp.lt.s32.totalorder %v3869, 2
    %vm3890 = vcmp.lt.s32.totalorder %v3869, 3
    %vm3891 = vcmp.lt.s32.totalorder %v3869, 4
    %v3892 = vsel %vm3888, %v3872, %v3875
    %v3893 = vsel %vm3891, %v3881, 2102212464
    %v3894 = vsel %vm3890, %v3878, %v3893
    %v3895 = vsel %vm3889, %v3892, %v3894
    %v3896 = vsel %vm3888, %v3875, %v3878
    %v3897 = vsel %vm3891, %v3884, 920167782
    %v3898 = vsel %vm3890, %v3881, %v3897
    %v3899 = vsel %vm3889, %v3896, %v3898
    %v3900 = vsel %vm3888, %v3878, %v3881
    %v3901 = vsel %vm3891, %v3887, 1326507024
    %v3902 = vsel %vm3890, %v3884, %v3901
    %v3903 = vsel %vm3889, %v3900, %v3902
    %v3904 = vshll.u32 %v3864, 8
    %v3905 = vmul.u32.u64.compose %v3904, %v3903
    %v3906 = vextract.low.u32 %v3905
    %v3907 = vextract.high.u32 %v3905
    %v3908 = vmul.u32.u64.compose %v3904, %v3899
    %v3909 = vextract.low.u32 %v3908
    %v3910 = vextract.high.u32 %v3908
    %v3911 = vmul.u32 %v3904, %v3895
    %v3912 = vadd.s32 %v3907, %v3909
    %vm3913 = vc.u32 %v3907, %v3909
    %v3914 = vadd.s32 %v3910, 1
    %v3915 = vsel %vm3913, %v3914, %v3910
    %v3916 = vadd.s32 %v3911, %v3915
    %v3917 = vadd.s32 %v3916, 536870912
    %v3918 = vshrl.u32 %v3917, 30
    %v3919 = vshll.u32 %v3918, 30
    %v3920 = vsub.s32 %v3916, %v3919
    %vm3921 = vcmp.lt.s32.totalorder %v3920, 0
    %v3922 = vsub.s32 0, %v3920
    %v3923 = vsel %vm3921, %v3922, %v3920
    %v3924 = vclz %v3923
    %v3925 = vsub.s32 %v3924, 2
    %vm3926 = vcmp.gt.s32.totalorder 0, %v3925
    %v3927 = vsel %vm3926, 0, %v3925
    %v3928 = vsub.s32 32, %v3927
    %v3929 = vshll.u32 %v3920, %v3927
    %v3930 = vshrl.u32 %v3912, %v3928
    %v3931 = vor.u32 %v3929, %v3930
    %v3932 = vsub.s32 4294967266, %v3927
    %v3933 = vadd.s32 %v3932, 127
    %v3934 = vshll.u32 %v3933, 23
    %v3935 = vor.u32 4788187, %v3934
    %v3936 = vand.u32 2147483647, %v3935
    %v3938 = vcvt.s32.f32 %v3931
    %v3939 = vmul.f32 %v3938, %v3936
    %v3940 = vxor.u32 %v3939, 2147483648
    %v3941 = vsel %vm3858, %v3940, %v3939
    %v3942 = vsub.s32 4, %v3918
    %v3943 = vsel %vm3858, %v3942, %v3918
    %v3944 = vsel %vm3857, %v450, %v3941
    %v3945 = vsel %vm3857, 0, %v3943
    %v3946 = vcosq.f32.pop %v3944
    %v3947 = vsinq.f32.pop %v3944
    %vm3948 = vweird.f32 %v450
    %v3949 = vadd.s32 %v3945, 3
    %v3950 = vand.u32 %v3949, 3
    %vm3951 = vcmp.lt.s32.totalorder %v3950, 2
    %vm3952 = vcmp.eq.s32.totalorder %v3950, 0
    %v3953 = vxor.u32 %v3947, 2147483648
    %v3954 = vsel %vm3952, %v3946, %v3953
    %vm3955 = vcmp.eq.s32.totalorder %v3950, 2
    %v3956 = vxor.u32 %v3946, 2147483648
    %v3957 = vsel %vm3955, %v3956, %v3947
    %v3958 = vsel %vm3951, %v3954, %v3957
    %v3959 = vsel %vm3948, nan, %v3958
    %v3960 = vand.u32 2147483647, %v455
    %vm3961 = vcmp.le.f32.partialorder %v3960, 0.7853982
    %vm3962 = vcmp.lt.s32.totalorder %v455, 0
    %v3963 = vand.u32 %v455, 2139095040
    %v3964 = vshrl.u32 %v3963, 23
    %v3965 = vsub.s32 %v3964, 127
    %v3966 = vand.u32 2147483647, %v455
    %v3967 = vand.u32 %v3966, 8388607
    %v3968 = vor.u32 %v3967, 8388608
    %v3969 = vsub.s32 0, %v3968
    %v3970 = vadd.s32 %v3965, 1
    %vm3971 = vcmp.gt.s32.totalorder %v3970, 0
    %v3972 = vsel %vm3971, %v3970, 0
    %v3973 = vshrl.u32 %v3972, 5
    %v3974 = vand.u32 %v3972, 31
    %v3975 = vsub.s32 32, %v3974
    %v3976 = vshrl.u32 683565275, %v3975
    %v3977 = vshll.u32 683565275, %v3974
    %v3978 = vshrl.u32 2475754826, %v3975
    %v3979 = vor.u32 %v3977, %v3978
    %v3980 = vshll.u32 2475754826, %v3974
    %v3981 = vshrl.u32 2131351028, %v3975
    %v3982 = vor.u32 %v3980, %v3981
    %v3983 = vshll.u32 2131351028, %v3974
    %v3984 = vshrl.u32 2102212464, %v3975
    %v3985 = vor.u32 %v3983, %v3984
    %v3986 = vshll.u32 2102212464, %v3974
    %v3987 = vshrl.u32 920167782, %v3975
    %v3988 = vor.u32 %v3986, %v3987
    %v3989 = vshll.u32 920167782, %v3974
    %v3990 = vshrl.u32 1326507024, %v3975
    %v3991 = vor.u32 %v3989, %v3990
    %vm3992 = vcmp.lt.s32.totalorder %v3973, 1
    %vm3993 = vcmp.lt.s32.totalorder %v3973, 2
    %vm3994 = vcmp.lt.s32.totalorder %v3973, 3
    %vm3995 = vcmp.lt.s32.totalorder %v3973, 4
    %v3996 = vsel %vm3992, %v3976, %v3979
    %v3997 = vsel %vm3995, %v3985, 2102212464
    %v3998 = vsel %vm3994, %v3982, %v3997
    %v3999 = vsel %vm3993, %v3996, %v3998
    %v4000 = vsel %vm3992, %v3979, %v3982
    %v4001 = vsel %vm3995, %v3988, 920167782
    %v4002 = vsel %vm3994, %v3985, %v4001
    %v4003 = vsel %vm3993, %v4000, %v4002
    %v4004 = vsel %vm3992, %v3982, %v3985
    %v4005 = vsel %vm3995, %v3991, 1326507024
    %v4006 = vsel %vm3994, %v3988, %v4005
    %v4007 = vsel %vm3993, %v4004, %v4006
    %v4008 = vshll.u32 %v3968, 8
    %v4009 = vmul.u32.u64.compose %v4008, %v4007
    %v4010 = vextract.low.u32 %v4009
    %v4011 = vextract.high.u32 %v4009
    %v4012 = vmul.u32.u64.compose %v4008, %v4003
    %v4013 = vextract.low.u32 %v4012
    %v4014 = vextract.high.u32 %v4012
    %v4015 = vmul.u32 %v4008, %v3999
    %v4016 = vadd.s32 %v4011, %v4013
    %vm4017 = vc.u32 %v4011, %v4013
    %v4018 = vadd.s32 %v4014, 1
    %v4019 = vsel %vm4017, %v4018, %v4014
    %v4020 = vadd.s32 %v4015, %v4019
    %v4021 = vadd.s32 %v4020, 536870912
    %v4022 = vshrl.u32 %v4021, 30
    %v4023 = vshll.u32 %v4022, 30
    %v4024 = vsub.s32 %v4020, %v4023
    %vm4025 = vcmp.lt.s32.totalorder %v4024, 0
    %v4026 = vsub.s32 0, %v4024
    %v4027 = vsel %vm4025, %v4026, %v4024
    %v4028 = vclz %v4027
    %v4029 = vsub.s32 %v4028, 2
    %vm4030 = vcmp.gt.s32.totalorder 0, %v4029
    %v4031 = vsel %vm4030, 0, %v4029
    %v4032 = vsub.s32 32, %v4031
    %v4033 = vshll.u32 %v4024, %v4031
    %v4034 = vshrl.u32 %v4016, %v4032
    %v4035 = vor.u32 %v4033, %v4034
    %v4036 = vsub.s32 4294967266, %v4031
    %v4037 = vadd.s32 %v4036, 127
    %v4038 = vshll.u32 %v4037, 23
    %v4039 = vor.u32 4788187, %v4038
    %v4040 = vand.u32 2147483647, %v4039
    %v4042 = vcvt.s32.f32 %v4035
    %v4043 = vmul.f32 %v4042, %v4040
    %v4044 = vxor.u32 %v4043, 2147483648
    %v4045 = vsel %vm3962, %v4044, %v4043
    %v4046 = vsub.s32 4, %v4022
    %v4047 = vsel %vm3962, %v4046, %v4022
    %v4048 = vsel %vm3961, %v455, %v4045
    %v4049 = vsel %vm3961, 0, %v4047
    %v4050 = vcosq.f32.pop %v4048
    %v4051 = vsinq.f32.pop %v4048
    %vm4052 = vweird.f32 %v455
    %v4053 = vadd.s32 %v4049, 3
    %v4054 = vand.u32 %v4053, 3
    %vm4055 = vcmp.lt.s32.totalorder %v4054, 2
    %vm4056 = vcmp.eq.s32.totalorder %v4054, 0
    %v4057 = vxor.u32 %v4051, 2147483648
    %v4058 = vsel %vm4056, %v4050, %v4057
    %vm4059 = vcmp.eq.s32.totalorder %v4054, 2
    %v4060 = vxor.u32 %v4050, 2147483648
    %v4061 = vsel %vm4059, %v4060, %v4051
    %v4062 = vsel %vm4055, %v4058, %v4061
    %v4063 = vsel %vm4052, nan, %v4062
    %v4064 = vand.u32 2147483647, %v460
    %vm4065 = vcmp.le.f32.partialorder %v4064, 0.7853982
    %vm4066 = vcmp.lt.s32.totalorder %v460, 0
    %v4067 = vand.u32 %v460, 2139095040
    %v4068 = vshrl.u32 %v4067, 23
    %v4069 = vsub.s32 %v4068, 127
    %v4070 = vand.u32 2147483647, %v460
    %v4071 = vand.u32 %v4070, 8388607
    %v4072 = vor.u32 %v4071, 8388608
    %v4073 = vsub.s32 0, %v4072
    %v4074 = vadd.s32 %v4069, 1
    %vm4075 = vcmp.gt.s32.totalorder %v4074, 0
    %v4076 = vsel %vm4075, %v4074, 0
    %v4077 = vshrl.u32 %v4076, 5
    %v4078 = vand.u32 %v4076, 31
    %v4079 = vsub.s32 32, %v4078
    %v4080 = vshrl.u32 683565275, %v4079
    %v4081 = vshll.u32 683565275, %v4078
    %v4082 = vshrl.u32 2475754826, %v4079
    %v4083 = vor.u32 %v4081, %v4082
    %v4084 = vshll.u32 2475754826, %v4078
    %v4085 = vshrl.u32 2131351028, %v4079
    %v4086 = vor.u32 %v4084, %v4085
    %v4087 = vshll.u32 2131351028, %v4078
    %v4088 = vshrl.u32 2102212464, %v4079
    %v4089 = vor.u32 %v4087, %v4088
    %v4090 = vshll.u32 2102212464, %v4078
    %v4091 = vshrl.u32 920167782, %v4079
    %v4092 = vor.u32 %v4090, %v4091
    %v4093 = vshll.u32 920167782, %v4078
    %v4094 = vshrl.u32 1326507024, %v4079
    %v4095 = vor.u32 %v4093, %v4094
    %vm4096 = vcmp.lt.s32.totalorder %v4077, 1
    %vm4097 = vcmp.lt.s32.totalorder %v4077, 2
    %vm4098 = vcmp.lt.s32.totalorder %v4077, 3
    %vm4099 = vcmp.lt.s32.totalorder %v4077, 4
    %v4100 = vsel %vm4096, %v4080, %v4083
    %v4101 = vsel %vm4099, %v4089, 2102212464
    %v4102 = vsel %vm4098, %v4086, %v4101
    %v4103 = vsel %vm4097, %v4100, %v4102
    %v4104 = vsel %vm4096, %v4083, %v4086
    %v4105 = vsel %vm4099, %v4092, 920167782
    %v4106 = vsel %vm4098, %v4089, %v4105
    %v4107 = vsel %vm4097, %v4104, %v4106
    %v4108 = vsel %vm4096, %v4086, %v4089
    %v4109 = vsel %vm4099, %v4095, 1326507024
    %v4110 = vsel %vm4098, %v4092, %v4109
    %v4111 = vsel %vm4097, %v4108, %v4110
    %v4112 = vshll.u32 %v4072, 8
    %v4113 = vmul.u32.u64.compose %v4112, %v4111
    %v4114 = vextract.low.u32 %v4113
    %v4115 = vextract.high.u32 %v4113
    %v4116 = vmul.u32.u64.compose %v4112, %v4107
    %v4117 = vextract.low.u32 %v4116
    %v4118 = vextract.high.u32 %v4116
    %v4119 = vmul.u32 %v4112, %v4103
    %v4120 = vadd.s32 %v4115, %v4117
    %vm4121 = vc.u32 %v4115, %v4117
    %v4122 = vadd.s32 %v4118, 1
    %v4123 = vsel %vm4121, %v4122, %v4118
    %v4124 = vadd.s32 %v4119, %v4123
    %v4125 = vadd.s32 %v4124, 536870912
    %v4126 = vshrl.u32 %v4125, 30
    %v4127 = vshll.u32 %v4126, 30
    %v4128 = vsub.s32 %v4124, %v4127
    %vm4129 = vcmp.lt.s32.totalorder %v4128, 0
    %v4130 = vsub.s32 0, %v4128
    %v4131 = vsel %vm4129, %v4130, %v4128
    %v4132 = vclz %v4131
    %v4133 = vsub.s32 %v4132, 2
    %vm4134 = vcmp.gt.s32.totalorder 0, %v4133
    %v4135 = vsel %vm4134, 0, %v4133
    %v4136 = vsub.s32 32, %v4135
    %v4137 = vshll.u32 %v4128, %v4135
    %v4138 = vshrl.u32 %v4120, %v4136
    %v4139 = vor.u32 %v4137, %v4138
    %v4140 = vsub.s32 4294967266, %v4135
    %v4141 = vadd.s32 %v4140, 127
    %v4142 = vshll.u32 %v4141, 23
    %v4143 = vor.u32 4788187, %v4142
    %v4144 = vand.u32 2147483647, %v4143
    %v4146 = vcvt.s32.f32 %v4139
    %v4147 = vmul.f32 %v4146, %v4144
    %v4148 = vxor.u32 %v4147, 2147483648
    %v4149 = vsel %vm4066, %v4148, %v4147
    %v4150 = vsub.s32 4, %v4126
    %v4151 = vsel %vm4066, %v4150, %v4126
    %v4152 = vsel %vm4065, %v460, %v4149
    %v4153 = vsel %vm4065, 0, %v4151
    %v4154 = vcosq.f32.pop %v4152
    %v4155 = vsinq.f32.pop %v4152
    %vm4156 = vweird.f32 %v460
    %v4157 = vadd.s32 %v4153, 3
    %v4158 = vand.u32 %v4157, 3
    %vm4159 = vcmp.lt.s32.totalorder %v4158, 2
    %vm4160 = vcmp.eq.s32.totalorder %v4158, 0
    %v4161 = vxor.u32 %v4155, 2147483648
    %v4162 = vsel %vm4160, %v4154, %v4161
    %vm4163 = vcmp.eq.s32.totalorder %v4158, 2
    %v4164 = vxor.u32 %v4154, 2147483648
    %v4165 = vsel %vm4163, %v4164, %v4155
    %v4166 = vsel %vm4159, %v4162, %v4165
    %v4167 = vsel %vm4156, nan, %v4166
    %v4168 = vand.u32 2147483647, %v465
    %vm4169 = vcmp.le.f32.partialorder %v4168, 0.7853982
    %vm4170 = vcmp.lt.s32.totalorder %v465, 0
    %v4171 = vand.u32 %v465, 2139095040
    %v4172 = vshrl.u32 %v4171, 23
    %v4173 = vsub.s32 %v4172, 127
    %v4174 = vand.u32 2147483647, %v465
    %v4175 = vand.u32 %v4174, 8388607
    %v4176 = vor.u32 %v4175, 8388608
    %v4177 = vsub.s32 0, %v4176
    %v4178 = vadd.s32 %v4173, 1
    %vm4179 = vcmp.gt.s32.totalorder %v4178, 0
    %v4180 = vsel %vm4179, %v4178, 0
    %v4181 = vshrl.u32 %v4180, 5
    %v4182 = vand.u32 %v4180, 31
    %v4183 = vsub.s32 32, %v4182
    %v4184 = vshrl.u32 683565275, %v4183
    %v4185 = vshll.u32 683565275, %v4182
    %v4186 = vshrl.u32 2475754826, %v4183
    %v4187 = vor.u32 %v4185, %v4186
    %v4188 = vshll.u32 2475754826, %v4182
    %v4189 = vshrl.u32 2131351028, %v4183
    %v4190 = vor.u32 %v4188, %v4189
    %v4191 = vshll.u32 2131351028, %v4182
    %v4192 = vshrl.u32 2102212464, %v4183
    %v4193 = vor.u32 %v4191, %v4192
    %v4194 = vshll.u32 2102212464, %v4182
    %v4195 = vshrl.u32 920167782, %v4183
    %v4196 = vor.u32 %v4194, %v4195
    %v4197 = vshll.u32 920167782, %v4182
    %v4198 = vshrl.u32 1326507024, %v4183
    %v4199 = vor.u32 %v4197, %v4198
    %vm4200 = vcmp.lt.s32.totalorder %v4181, 1
    %vm4201 = vcmp.lt.s32.totalorder %v4181, 2
    %vm4202 = vcmp.lt.s32.totalorder %v4181, 3
    %vm4203 = vcmp.lt.s32.totalorder %v4181, 4
    %v4204 = vsel %vm4200, %v4184, %v4187
    %v4205 = vsel %vm4203, %v4193, 2102212464
    %v4206 = vsel %vm4202, %v4190, %v4205
    %v4207 = vsel %vm4201, %v4204, %v4206
    %v4208 = vsel %vm4200, %v4187, %v4190
    %v4209 = vsel %vm4203, %v4196, 920167782
    %v4210 = vsel %vm4202, %v4193, %v4209
    %v4211 = vsel %vm4201, %v4208, %v4210
    %v4212 = vsel %vm4200, %v4190, %v4193
    %v4213 = vsel %vm4203, %v4199, 1326507024
    %v4214 = vsel %vm4202, %v4196, %v4213
    %v4215 = vsel %vm4201, %v4212, %v4214
    %v4216 = vshll.u32 %v4176, 8
    %v4217 = vmul.u32.u64.compose %v4216, %v4215
    %v4218 = vextract.low.u32 %v4217
    %v4219 = vextract.high.u32 %v4217
    %v4220 = vmul.u32.u64.compose %v4216, %v4211
    %v4221 = vextract.low.u32 %v4220
    %v4222 = vextract.high.u32 %v4220
    %v4223 = vmul.u32 %v4216, %v4207
    %v4224 = vadd.s32 %v4219, %v4221
    %vm4225 = vc.u32 %v4219, %v4221
    %v4226 = vadd.s32 %v4222, 1
    %v4227 = vsel %vm4225, %v4226, %v4222
    %v4228 = vadd.s32 %v4223, %v4227
    %v4229 = vadd.s32 %v4228, 536870912
    %v4230 = vshrl.u32 %v4229, 30
    %v4231 = vshll.u32 %v4230, 30
    %v4232 = vsub.s32 %v4228, %v4231
    %vm4233 = vcmp.lt.s32.totalorder %v4232, 0
    %v4234 = vsub.s32 0, %v4232
    %v4235 = vsel %vm4233, %v4234, %v4232
    %v4236 = vclz %v4235
    %v4237 = vsub.s32 %v4236, 2
    %vm4238 = vcmp.gt.s32.totalorder 0, %v4237
    %v4239 = vsel %vm4238, 0, %v4237
    %v4240 = vsub.s32 32, %v4239
    %v4241 = vshll.u32 %v4232, %v4239
    %v4242 = vshrl.u32 %v4224, %v4240
    %v4243 = vor.u32 %v4241, %v4242
    %v4244 = vsub.s32 4294967266, %v4239
    %v4245 = vadd.s32 %v4244, 127
    %v4246 = vshll.u32 %v4245, 23
    %v4247 = vor.u32 4788187, %v4246
    %v4248 = vand.u32 2147483647, %v4247
    %v4250 = vcvt.s32.f32 %v4243
    %v4251 = vmul.f32 %v4250, %v4248
    %v4252 = vxor.u32 %v4251, 2147483648
    %v4253 = vsel %vm4170, %v4252, %v4251
    %v4254 = vsub.s32 4, %v4230
    %v4255 = vsel %vm4170, %v4254, %v4230
    %v4256 = vsel %vm4169, %v465, %v4253
    %v4257 = vsel %vm4169, 0, %v4255
    %v4258 = vcosq.f32.pop %v4256
    %v4259 = vsinq.f32.pop %v4256
    %vm4260 = vweird.f32 %v465
    %v4261 = vadd.s32 %v4257, 3
    %v4262 = vand.u32 %v4261, 3
    %vm4263 = vcmp.lt.s32.totalorder %v4262, 2
    %vm4264 = vcmp.eq.s32.totalorder %v4262, 0
    %v4265 = vxor.u32 %v4259, 2147483648
    %v4266 = vsel %vm4264, %v4258, %v4265
    %vm4267 = vcmp.eq.s32.totalorder %v4262, 2
    %v4268 = vxor.u32 %v4258, 2147483648
    %v4269 = vsel %vm4267, %v4268, %v4259
    %v4270 = vsel %vm4263, %v4266, %v4269
    %v4271 = vsel %vm4260, nan, %v4270
    %v4272 = vand.u32 2147483647, %v470
    %vm4273 = vcmp.le.f32.partialorder %v4272, 0.7853982
    %vm4274 = vcmp.lt.s32.totalorder %v470, 0
    %v4275 = vand.u32 %v470, 2139095040
    %v4276 = vshrl.u32 %v4275, 23
    %v4277 = vsub.s32 %v4276, 127
    %v4278 = vand.u32 2147483647, %v470
    %v4279 = vand.u32 %v4278, 8388607
    %v4280 = vor.u32 %v4279, 8388608
    %v4281 = vsub.s32 0, %v4280
    %v4282 = vadd.s32 %v4277, 1
    %vm4283 = vcmp.gt.s32.totalorder %v4282, 0
    %v4284 = vsel %vm4283, %v4282, 0
    %v4285 = vshrl.u32 %v4284, 5
    %v4286 = vand.u32 %v4284, 31
    %v4287 = vsub.s32 32, %v4286
    %v4288 = vshrl.u32 683565275, %v4287
    %v4289 = vshll.u32 683565275, %v4286
    %v4290 = vshrl.u32 2475754826, %v4287
    %v4291 = vor.u32 %v4289, %v4290
    %v4292 = vshll.u32 2475754826, %v4286
    %v4293 = vshrl.u32 2131351028, %v4287
    %v4294 = vor.u32 %v4292, %v4293
    %v4295 = vshll.u32 2131351028, %v4286
    %v4296 = vshrl.u32 2102212464, %v4287
    %v4297 = vor.u32 %v4295, %v4296
    %v4298 = vshll.u32 2102212464, %v4286
    %v4299 = vshrl.u32 920167782, %v4287
    %v4300 = vor.u32 %v4298, %v4299
    %v4301 = vshll.u32 920167782, %v4286
    %v4302 = vshrl.u32 1326507024, %v4287
    %v4303 = vor.u32 %v4301, %v4302
    %vm4304 = vcmp.lt.s32.totalorder %v4285, 1
    %vm4305 = vcmp.lt.s32.totalorder %v4285, 2
    %vm4306 = vcmp.lt.s32.totalorder %v4285, 3
    %vm4307 = vcmp.lt.s32.totalorder %v4285, 4
    %v4308 = vsel %vm4304, %v4288, %v4291
    %v4309 = vsel %vm4307, %v4297, 2102212464
    %v4310 = vsel %vm4306, %v4294, %v4309
    %v4311 = vsel %vm4305, %v4308, %v4310
    %v4312 = vsel %vm4304, %v4291, %v4294
    %v4313 = vsel %vm4307, %v4300, 920167782
    %v4314 = vsel %vm4306, %v4297, %v4313
    %v4315 = vsel %vm4305, %v4312, %v4314
    %v4316 = vsel %vm4304, %v4294, %v4297
    %v4317 = vsel %vm4307, %v4303, 1326507024
    %v4318 = vsel %vm4306, %v4300, %v4317
    %v4319 = vsel %vm4305, %v4316, %v4318
    %v4320 = vshll.u32 %v4280, 8
    %v4321 = vmul.u32.u64.compose %v4320, %v4319
    %v4322 = vextract.low.u32 %v4321
    %v4323 = vextract.high.u32 %v4321
    %v4324 = vmul.u32.u64.compose %v4320, %v4315
    %v4325 = vextract.low.u32 %v4324
    %v4326 = vextract.high.u32 %v4324
    %v4327 = vmul.u32 %v4320, %v4311
    %v4328 = vadd.s32 %v4323, %v4325
    %vm4329 = vc.u32 %v4323, %v4325
    %v4330 = vadd.s32 %v4326, 1
    %v4331 = vsel %vm4329, %v4330, %v4326
    %v4332 = vadd.s32 %v4327, %v4331
    %v4333 = vadd.s32 %v4332, 536870912
    %v4334 = vshrl.u32 %v4333, 30
    %v4335 = vshll.u32 %v4334, 30
    %v4336 = vsub.s32 %v4332, %v4335
    %vm4337 = vcmp.lt.s32.totalorder %v4336, 0
    %v4338 = vsub.s32 0, %v4336
    %v4339 = vsel %vm4337, %v4338, %v4336
    %v4340 = vclz %v4339
    %v4341 = vsub.s32 %v4340, 2
    %vm4342 = vcmp.gt.s32.totalorder 0, %v4341
    %v4343 = vsel %vm4342, 0, %v4341
    %v4344 = vsub.s32 32, %v4343
    %v4345 = vshll.u32 %v4336, %v4343
    %v4346 = vshrl.u32 %v4328, %v4344
    %v4347 = vor.u32 %v4345, %v4346
    %v4348 = vsub.s32 4294967266, %v4343
    %v4349 = vadd.s32 %v4348, 127
    %v4350 = vshll.u32 %v4349, 23
    %v4351 = vor.u32 4788187, %v4350
    %v4352 = vand.u32 2147483647, %v4351
    %v4354 = vcvt.s32.f32 %v4347
    %v4355 = vmul.f32 %v4354, %v4352
    %v4356 = vxor.u32 %v4355, 2147483648
    %v4357 = vsel %vm4274, %v4356, %v4355
    %v4358 = vsub.s32 4, %v4334
    %v4359 = vsel %vm4274, %v4358, %v4334
    %v4360 = vsel %vm4273, %v470, %v4357
    %v4361 = vsel %vm4273, 0, %v4359
    %v4362 = vcosq.f32.pop %v4360
    %v4363 = vsinq.f32.pop %v4360
    %vm4364 = vweird.f32 %v470
    %v4365 = vadd.s32 %v4361, 3
    %v4366 = vand.u32 %v4365, 3
    %vm4367 = vcmp.lt.s32.totalorder %v4366, 2
    %vm4368 = vcmp.eq.s32.totalorder %v4366, 0
    %v4369 = vxor.u32 %v4363, 2147483648
    %v4370 = vsel %vm4368, %v4362, %v4369
    %vm4371 = vcmp.eq.s32.totalorder %v4366, 2
    %v4372 = vxor.u32 %v4362, 2147483648
    %v4373 = vsel %vm4371, %v4372, %v4363
    %v4374 = vsel %vm4367, %v4370, %v4373
    %v4375 = vsel %vm4364, nan, %v4374
    %v4376 = vand.u32 2147483647, %v475
    %vm4377 = vcmp.le.f32.partialorder %v4376, 0.7853982
    %vm4378 = vcmp.lt.s32.totalorder %v475, 0
    %v4379 = vand.u32 %v475, 2139095040
    %v4380 = vshrl.u32 %v4379, 23
    %v4381 = vsub.s32 %v4380, 127
    %v4382 = vand.u32 2147483647, %v475
    %v4383 = vand.u32 %v4382, 8388607
    %v4384 = vor.u32 %v4383, 8388608
    %v4385 = vsub.s32 0, %v4384
    %v4386 = vadd.s32 %v4381, 1
    %vm4387 = vcmp.gt.s32.totalorder %v4386, 0
    %v4388 = vsel %vm4387, %v4386, 0
    %v4389 = vshrl.u32 %v4388, 5
    %v4390 = vand.u32 %v4388, 31
    %v4391 = vsub.s32 32, %v4390
    %v4392 = vshrl.u32 683565275, %v4391
    %v4393 = vshll.u32 683565275, %v4390
    %v4394 = vshrl.u32 2475754826, %v4391
    %v4395 = vor.u32 %v4393, %v4394
    %v4396 = vshll.u32 2475754826, %v4390
    %v4397 = vshrl.u32 2131351028, %v4391
    %v4398 = vor.u32 %v4396, %v4397
    %v4399 = vshll.u32 2131351028, %v4390
    %v4400 = vshrl.u32 2102212464, %v4391
    %v4401 = vor.u32 %v4399, %v4400
    %v4402 = vshll.u32 2102212464, %v4390
    %v4403 = vshrl.u32 920167782, %v4391
    %v4404 = vor.u32 %v4402, %v4403
    %v4405 = vshll.u32 920167782, %v4390
    %v4406 = vshrl.u32 1326507024, %v4391
    %v4407 = vor.u32 %v4405, %v4406
    %vm4408 = vcmp.lt.s32.totalorder %v4389, 1
    %vm4409 = vcmp.lt.s32.totalorder %v4389, 2
    %vm4410 = vcmp.lt.s32.totalorder %v4389, 3
    %vm4411 = vcmp.lt.s32.totalorder %v4389, 4
    %v4412 = vsel %vm4408, %v4392, %v4395
    %v4413 = vsel %vm4411, %v4401, 2102212464
    %v4414 = vsel %vm4410, %v4398, %v4413
    %v4415 = vsel %vm4409, %v4412, %v4414
    %v4416 = vsel %vm4408, %v4395, %v4398
    %v4417 = vsel %vm4411, %v4404, 920167782
    %v4418 = vsel %vm4410, %v4401, %v4417
    %v4419 = vsel %vm4409, %v4416, %v4418
    %v4420 = vsel %vm4408, %v4398, %v4401
    %v4421 = vsel %vm4411, %v4407, 1326507024
    %v4422 = vsel %vm4410, %v4404, %v4421
    %v4423 = vsel %vm4409, %v4420, %v4422
    %v4424 = vshll.u32 %v4384, 8
    %v4425 = vmul.u32.u64.compose %v4424, %v4423
    %v4426 = vextract.low.u32 %v4425
    %v4427 = vextract.high.u32 %v4425
    %v4428 = vmul.u32.u64.compose %v4424, %v4419
    %v4429 = vextract.low.u32 %v4428
    %v4430 = vextract.high.u32 %v4428
    %v4431 = vmul.u32 %v4424, %v4415
    %v4432 = vadd.s32 %v4427, %v4429
    %vm4433 = vc.u32 %v4427, %v4429
    %v4434 = vadd.s32 %v4430, 1
    %v4435 = vsel %vm4433, %v4434, %v4430
    %v4436 = vadd.s32 %v4431, %v4435
    %v4437 = vadd.s32 %v4436, 536870912
    %v4438 = vshrl.u32 %v4437, 30
    %v4439 = vshll.u32 %v4438, 30
    %v4440 = vsub.s32 %v4436, %v4439
    %vm4441 = vcmp.lt.s32.totalorder %v4440, 0
    %v4442 = vsub.s32 0, %v4440
    %v4443 = vsel %vm4441, %v4442, %v4440
    %v4444 = vclz %v4443
    %v4445 = vsub.s32 %v4444, 2
    %vm4446 = vcmp.gt.s32.totalorder 0, %v4445
    %v4447 = vsel %vm4446, 0, %v4445
    %v4448 = vsub.s32 32, %v4447
    %v4449 = vshll.u32 %v4440, %v4447
    %v4450 = vshrl.u32 %v4432, %v4448
    %v4451 = vor.u32 %v4449, %v4450
    %v4452 = vsub.s32 4294967266, %v4447
    %v4453 = vadd.s32 %v4452, 127
    %v4454 = vshll.u32 %v4453, 23
    %v4455 = vor.u32 4788187, %v4454
    %v4456 = vand.u32 2147483647, %v4455
    %v4458 = vcvt.s32.f32 %v4451
    %v4459 = vmul.f32 %v4458, %v4456
    %v4460 = vxor.u32 %v4459, 2147483648
    %v4461 = vsel %vm4378, %v4460, %v4459
    %v4462 = vsub.s32 4, %v4438
    %v4463 = vsel %vm4378, %v4462, %v4438
    %v4464 = vsel %vm4377, %v475, %v4461
    %v4465 = vsel %vm4377, 0, %v4463
    %v4466 = vcosq.f32.pop %v4464
    %v4467 = vsinq.f32.pop %v4464
    %vm4468 = vweird.f32 %v475
    %v4469 = vadd.s32 %v4465, 3
    %v4470 = vand.u32 %v4469, 3
    %vm4471 = vcmp.lt.s32.totalorder %v4470, 2
    %vm4472 = vcmp.eq.s32.totalorder %v4470, 0
    %v4473 = vxor.u32 %v4467, 2147483648
    %v4474 = vsel %vm4472, %v4466, %v4473
    %vm4475 = vcmp.eq.s32.totalorder %v4470, 2
    %v4476 = vxor.u32 %v4466, 2147483648
    %v4477 = vsel %vm4475, %v4476, %v4467
    %v4478 = vsel %vm4471, %v4474, %v4477
    %v4479 = vsel %vm4468, nan, %v4478
    %v4480 = vand.u32 2147483647, %v480
    %vm4481 = vcmp.le.f32.partialorder %v4480, 0.7853982
    %vm4482 = vcmp.lt.s32.totalorder %v480, 0
    %v4483 = vand.u32 %v480, 2139095040
    %v4484 = vshrl.u32 %v4483, 23
    %v4485 = vsub.s32 %v4484, 127
    %v4486 = vand.u32 2147483647, %v480
    %v4487 = vand.u32 %v4486, 8388607
    %v4488 = vor.u32 %v4487, 8388608
    %v4489 = vsub.s32 0, %v4488
    %v4490 = vadd.s32 %v4485, 1
    %vm4491 = vcmp.gt.s32.totalorder %v4490, 0
    %v4492 = vsel %vm4491, %v4490, 0
    %v4493 = vshrl.u32 %v4492, 5
    %v4494 = vand.u32 %v4492, 31
    %v4495 = vsub.s32 32, %v4494
    %v4496 = vshrl.u32 683565275, %v4495
    %v4497 = vshll.u32 683565275, %v4494
    %v4498 = vshrl.u32 2475754826, %v4495
    %v4499 = vor.u32 %v4497, %v4498
    %v4500 = vshll.u32 2475754826, %v4494
    %v4501 = vshrl.u32 2131351028, %v4495
    %v4502 = vor.u32 %v4500, %v4501
    %v4503 = vshll.u32 2131351028, %v4494
    %v4504 = vshrl.u32 2102212464, %v4495
    %v4505 = vor.u32 %v4503, %v4504
    %v4506 = vshll.u32 2102212464, %v4494
    %v4507 = vshrl.u32 920167782, %v4495
    %v4508 = vor.u32 %v4506, %v4507
    %v4509 = vshll.u32 920167782, %v4494
    %v4510 = vshrl.u32 1326507024, %v4495
    %v4511 = vor.u32 %v4509, %v4510
    %vm4512 = vcmp.lt.s32.totalorder %v4493, 1
    %vm4513 = vcmp.lt.s32.totalorder %v4493, 2
    %vm4514 = vcmp.lt.s32.totalorder %v4493, 3
    %vm4515 = vcmp.lt.s32.totalorder %v4493, 4
    %v4516 = vsel %vm4512, %v4496, %v4499
    %v4517 = vsel %vm4515, %v4505, 2102212464
    %v4518 = vsel %vm4514, %v4502, %v4517
    %v4519 = vsel %vm4513, %v4516, %v4518
    %v4520 = vsel %vm4512, %v4499, %v4502
    %v4521 = vsel %vm4515, %v4508, 920167782
    %v4522 = vsel %vm4514, %v4505, %v4521
    %v4523 = vsel %vm4513, %v4520, %v4522
    %v4524 = vsel %vm4512, %v4502, %v4505
    %v4525 = vsel %vm4515, %v4511, 1326507024
    %v4526 = vsel %vm4514, %v4508, %v4525
    %v4527 = vsel %vm4513, %v4524, %v4526
    %v4528 = vshll.u32 %v4488, 8
    %v4529 = vmul.u32.u64.compose %v4528, %v4527
    %v4530 = vextract.low.u32 %v4529
    %v4531 = vextract.high.u32 %v4529
    %v4532 = vmul.u32.u64.compose %v4528, %v4523
    %v4533 = vextract.low.u32 %v4532
    %v4534 = vextract.high.u32 %v4532
    %v4535 = vmul.u32 %v4528, %v4519
    %v4536 = vadd.s32 %v4531, %v4533
    %vm4537 = vc.u32 %v4531, %v4533
    %v4538 = vadd.s32 %v4534, 1
    %v4539 = vsel %vm4537, %v4538, %v4534
    %v4540 = vadd.s32 %v4535, %v4539
    %v4541 = vadd.s32 %v4540, 536870912
    %v4542 = vshrl.u32 %v4541, 30
    %v4543 = vshll.u32 %v4542, 30
    %v4544 = vsub.s32 %v4540, %v4543
    %vm4545 = vcmp.lt.s32.totalorder %v4544, 0
    %v4546 = vsub.s32 0, %v4544
    %v4547 = vsel %vm4545, %v4546, %v4544
    %v4548 = vclz %v4547
    %v4549 = vsub.s32 %v4548, 2
    %vm4550 = vcmp.gt.s32.totalorder 0, %v4549
    %v4551 = vsel %vm4550, 0, %v4549
    %v4552 = vsub.s32 32, %v4551
    %v4553 = vshll.u32 %v4544, %v4551
    %v4554 = vshrl.u32 %v4536, %v4552
    %v4555 = vor.u32 %v4553, %v4554
    %v4556 = vsub.s32 4294967266, %v4551
    %v4557 = vadd.s32 %v4556, 127
    %v4558 = vshll.u32 %v4557, 23
    %v4559 = vor.u32 4788187, %v4558
    %v4560 = vand.u32 2147483647, %v4559
    %v4562 = vcvt.s32.f32 %v4555
    %v4563 = vmul.f32 %v4562, %v4560
    %v4564 = vxor.u32 %v4563, 2147483648
    %v4565 = vsel %vm4482, %v4564, %v4563
    %v4566 = vsub.s32 4, %v4542
    %v4567 = vsel %vm4482, %v4566, %v4542
    %v4568 = vsel %vm4481, %v480, %v4565
    %v4569 = vsel %vm4481, 0, %v4567
    %v4570 = vcosq.f32.pop %v4568
    %v4571 = vsinq.f32.pop %v4568
    %vm4572 = vweird.f32 %v480
    %v4573 = vadd.s32 %v4569, 3
    %v4574 = vand.u32 %v4573, 3
    %vm4575 = vcmp.lt.s32.totalorder %v4574, 2
    %vm4576 = vcmp.eq.s32.totalorder %v4574, 0
    %v4577 = vxor.u32 %v4571, 2147483648
    %v4578 = vsel %vm4576, %v4570, %v4577
    %vm4579 = vcmp.eq.s32.totalorder %v4574, 2
    %v4580 = vxor.u32 %v4570, 2147483648
    %v4581 = vsel %vm4579, %v4580, %v4571
    %v4582 = vsel %vm4575, %v4578, %v4581
    %v4583 = vsel %vm4572, nan, %v4582
    %v4584 = vand.u32 2147483647, %v485
    %vm4585 = vcmp.le.f32.partialorder %v4584, 0.7853982
    %vm4586 = vcmp.lt.s32.totalorder %v485, 0
    %v4587 = vand.u32 %v485, 2139095040
    %v4588 = vshrl.u32 %v4587, 23
    %v4589 = vsub.s32 %v4588, 127
    %v4590 = vand.u32 2147483647, %v485
    %v4591 = vand.u32 %v4590, 8388607
    %v4592 = vor.u32 %v4591, 8388608
    %v4593 = vsub.s32 0, %v4592
    %v4594 = vadd.s32 %v4589, 1
    %vm4595 = vcmp.gt.s32.totalorder %v4594, 0
    %v4596 = vsel %vm4595, %v4594, 0
    %v4597 = vshrl.u32 %v4596, 5
    %v4598 = vand.u32 %v4596, 31
    %v4599 = vsub.s32 32, %v4598
    %v4600 = vshrl.u32 683565275, %v4599
    %v4601 = vshll.u32 683565275, %v4598
    %v4602 = vshrl.u32 2475754826, %v4599
    %v4603 = vor.u32 %v4601, %v4602
    %v4604 = vshll.u32 2475754826, %v4598
    %v4605 = vshrl.u32 2131351028, %v4599
    %v4606 = vor.u32 %v4604, %v4605
    %v4607 = vshll.u32 2131351028, %v4598
    %v4608 = vshrl.u32 2102212464, %v4599
    %v4609 = vor.u32 %v4607, %v4608
    %v4610 = vshll.u32 2102212464, %v4598
    %v4611 = vshrl.u32 920167782, %v4599
    %v4612 = vor.u32 %v4610, %v4611
    %v4613 = vshll.u32 920167782, %v4598
    %v4614 = vshrl.u32 1326507024, %v4599
    %v4615 = vor.u32 %v4613, %v4614
    %vm4616 = vcmp.lt.s32.totalorder %v4597, 1
    %vm4617 = vcmp.lt.s32.totalorder %v4597, 2
    %vm4618 = vcmp.lt.s32.totalorder %v4597, 3
    %vm4619 = vcmp.lt.s32.totalorder %v4597, 4
    %v4620 = vsel %vm4616, %v4600, %v4603
    %v4621 = vsel %vm4619, %v4609, 2102212464
    %v4622 = vsel %vm4618, %v4606, %v4621
    %v4623 = vsel %vm4617, %v4620, %v4622
    %v4624 = vsel %vm4616, %v4603, %v4606
    %v4625 = vsel %vm4619, %v4612, 920167782
    %v4626 = vsel %vm4618, %v4609, %v4625
    %v4627 = vsel %vm4617, %v4624, %v4626
    %v4628 = vsel %vm4616, %v4606, %v4609
    %v4629 = vsel %vm4619, %v4615, 1326507024
    %v4630 = vsel %vm4618, %v4612, %v4629
    %v4631 = vsel %vm4617, %v4628, %v4630
    %v4632 = vshll.u32 %v4592, 8
    %v4633 = vmul.u32.u64.compose %v4632, %v4631
    %v4634 = vextract.low.u32 %v4633
    %v4635 = vextract.high.u32 %v4633
    %v4636 = vmul.u32.u64.compose %v4632, %v4627
    %v4637 = vextract.low.u32 %v4636
    %v4638 = vextract.high.u32 %v4636
    %v4639 = vmul.u32 %v4632, %v4623
    %v4640 = vadd.s32 %v4635, %v4637
    %vm4641 = vc.u32 %v4635, %v4637
    %v4642 = vadd.s32 %v4638, 1
    %v4643 = vsel %vm4641, %v4642, %v4638
    %v4644 = vadd.s32 %v4639, %v4643
    %v4645 = vadd.s32 %v4644, 536870912
    %v4646 = vshrl.u32 %v4645, 30
    %v4647 = vshll.u32 %v4646, 30
    %v4648 = vsub.s32 %v4644, %v4647
    %vm4649 = vcmp.lt.s32.totalorder %v4648, 0
    %v4650 = vsub.s32 0, %v4648
    %v4651 = vsel %vm4649, %v4650, %v4648
    %v4652 = vclz %v4651
    %v4653 = vsub.s32 %v4652, 2
    %vm4654 = vcmp.gt.s32.totalorder 0, %v4653
    %v4655 = vsel %vm4654, 0, %v4653
    %v4656 = vsub.s32 32, %v4655
    %v4657 = vshll.u32 %v4648, %v4655
    %v4658 = vshrl.u32 %v4640, %v4656
    %v4659 = vor.u32 %v4657, %v4658
    %v4660 = vsub.s32 4294967266, %v4655
    %v4661 = vadd.s32 %v4660, 127
    %v4662 = vshll.u32 %v4661, 23
    %v4663 = vor.u32 4788187, %v4662
    %v4664 = vand.u32 2147483647, %v4663
    %v4666 = vcvt.s32.f32 %v4659
    %v4667 = vmul.f32 %v4666, %v4664
    %v4668 = vxor.u32 %v4667, 2147483648
    %v4669 = vsel %vm4586, %v4668, %v4667
    %v4670 = vsub.s32 4, %v4646
    %v4671 = vsel %vm4586, %v4670, %v4646
    %v4672 = vsel %vm4585, %v485, %v4669
    %v4673 = vsel %vm4585, 0, %v4671
    %v4674 = vcosq.f32.pop %v4672
    %v4675 = vsinq.f32.pop %v4672
    %vm4676 = vweird.f32 %v485
    %v4677 = vadd.s32 %v4673, 3
    %v4678 = vand.u32 %v4677, 3
    %vm4679 = vcmp.lt.s32.totalorder %v4678, 2
    %vm4680 = vcmp.eq.s32.totalorder %v4678, 0
    %v4681 = vxor.u32 %v4675, 2147483648
    %v4682 = vsel %vm4680, %v4674, %v4681
    %vm4683 = vcmp.eq.s32.totalorder %v4678, 2
    %v4684 = vxor.u32 %v4674, 2147483648
    %v4685 = vsel %vm4683, %v4684, %v4675
    %v4686 = vsel %vm4679, %v4682, %v4685
    %v4687 = vsel %vm4676, nan, %v4686
    %v4688 = vand.u32 2147483647, %v490
    %vm4689 = vcmp.le.f32.partialorder %v4688, 0.7853982
    %vm4690 = vcmp.lt.s32.totalorder %v490, 0
    %v4691 = vand.u32 %v490, 2139095040
    %v4692 = vshrl.u32 %v4691, 23
    %v4693 = vsub.s32 %v4692, 127
    %v4694 = vand.u32 2147483647, %v490
    %v4695 = vand.u32 %v4694, 8388607
    %v4696 = vor.u32 %v4695, 8388608
    %v4697 = vsub.s32 0, %v4696
    %v4698 = vadd.s32 %v4693, 1
    %vm4699 = vcmp.gt.s32.totalorder %v4698, 0
    %v4700 = vsel %vm4699, %v4698, 0
    %v4701 = vshrl.u32 %v4700, 5
    %v4702 = vand.u32 %v4700, 31
    %v4703 = vsub.s32 32, %v4702
    %v4704 = vshrl.u32 683565275, %v4703
    %v4705 = vshll.u32 683565275, %v4702
    %v4706 = vshrl.u32 2475754826, %v4703
    %v4707 = vor.u32 %v4705, %v4706
    %v4708 = vshll.u32 2475754826, %v4702
    %v4709 = vshrl.u32 2131351028, %v4703
    %v4710 = vor.u32 %v4708, %v4709
    %v4711 = vshll.u32 2131351028, %v4702
    %v4712 = vshrl.u32 2102212464, %v4703
    %v4713 = vor.u32 %v4711, %v4712
    %v4714 = vshll.u32 2102212464, %v4702
    %v4715 = vshrl.u32 920167782, %v4703
    %v4716 = vor.u32 %v4714, %v4715
    %v4717 = vshll.u32 920167782, %v4702
    %v4718 = vshrl.u32 1326507024, %v4703
    %v4719 = vor.u32 %v4717, %v4718
    %vm4720 = vcmp.lt.s32.totalorder %v4701, 1
    %vm4721 = vcmp.lt.s32.totalorder %v4701, 2
    %vm4722 = vcmp.lt.s32.totalorder %v4701, 3
    %vm4723 = vcmp.lt.s32.totalorder %v4701, 4
    %v4724 = vsel %vm4720, %v4704, %v4707
    %v4725 = vsel %vm4723, %v4713, 2102212464
    %v4726 = vsel %vm4722, %v4710, %v4725
    %v4727 = vsel %vm4721, %v4724, %v4726
    %v4728 = vsel %vm4720, %v4707, %v4710
    %v4729 = vsel %vm4723, %v4716, 920167782
    %v4730 = vsel %vm4722, %v4713, %v4729
    %v4731 = vsel %vm4721, %v4728, %v4730
    %v4732 = vsel %vm4720, %v4710, %v4713
    %v4733 = vsel %vm4723, %v4719, 1326507024
    %v4734 = vsel %vm4722, %v4716, %v4733
    %v4735 = vsel %vm4721, %v4732, %v4734
    %v4736 = vshll.u32 %v4696, 8
    %v4737 = vmul.u32.u64.compose %v4736, %v4735
    %v4738 = vextract.low.u32 %v4737
    %v4739 = vextract.high.u32 %v4737
    %v4740 = vmul.u32.u64.compose %v4736, %v4731
    %v4741 = vextract.low.u32 %v4740
    %v4742 = vextract.high.u32 %v4740
    %v4743 = vmul.u32 %v4736, %v4727
    %v4744 = vadd.s32 %v4739, %v4741
    %vm4745 = vc.u32 %v4739, %v4741
    %v4746 = vadd.s32 %v4742, 1
    %v4747 = vsel %vm4745, %v4746, %v4742
    %v4748 = vadd.s32 %v4743, %v4747
    %v4749 = vadd.s32 %v4748, 536870912
    %v4750 = vshrl.u32 %v4749, 30
    %v4751 = vshll.u32 %v4750, 30
    %v4752 = vsub.s32 %v4748, %v4751
    %vm4753 = vcmp.lt.s32.totalorder %v4752, 0
    %v4754 = vsub.s32 0, %v4752
    %v4755 = vsel %vm4753, %v4754, %v4752
    %v4756 = vclz %v4755
    %v4757 = vsub.s32 %v4756, 2
    %vm4758 = vcmp.gt.s32.totalorder 0, %v4757
    %v4759 = vsel %vm4758, 0, %v4757
    %v4760 = vsub.s32 32, %v4759
    %v4761 = vshll.u32 %v4752, %v4759
    %v4762 = vshrl.u32 %v4744, %v4760
    %v4763 = vor.u32 %v4761, %v4762
    %v4764 = vsub.s32 4294967266, %v4759
    %v4765 = vadd.s32 %v4764, 127
    %v4766 = vshll.u32 %v4765, 23
    %v4767 = vor.u32 4788187, %v4766
    %v4768 = vand.u32 2147483647, %v4767
    %v4770 = vcvt.s32.f32 %v4763
    %v4771 = vmul.f32 %v4770, %v4768
    %v4772 = vxor.u32 %v4771, 2147483648
    %v4773 = vsel %vm4690, %v4772, %v4771
    %v4774 = vsub.s32 4, %v4750
    %v4775 = vsel %vm4690, %v4774, %v4750
    %v4776 = vsel %vm4689, %v490, %v4773
    %v4777 = vsel %vm4689, 0, %v4775
    %v4778 = vcosq.f32.pop %v4776
    %v4779 = vsinq.f32.pop %v4776
    %vm4780 = vweird.f32 %v490
    %v4781 = vadd.s32 %v4777, 3
    %v4782 = vand.u32 %v4781, 3
    %vm4783 = vcmp.lt.s32.totalorder %v4782, 2
    %vm4784 = vcmp.eq.s32.totalorder %v4782, 0
    %v4785 = vxor.u32 %v4779, 2147483648
    %v4786 = vsel %vm4784, %v4778, %v4785
    %vm4787 = vcmp.eq.s32.totalorder %v4782, 2
    %v4788 = vxor.u32 %v4778, 2147483648
    %v4789 = vsel %vm4787, %v4788, %v4779
    %v4790 = vsel %vm4783, %v4786, %v4789
    %v4791 = vsel %vm4780, nan, %v4790
    %v4792 = vand.u32 2147483647, %v495
    %vm4793 = vcmp.le.f32.partialorder %v4792, 0.7853982
    %vm4794 = vcmp.lt.s32.totalorder %v495, 0
    %v4795 = vand.u32 %v495, 2139095040
    %v4796 = vshrl.u32 %v4795, 23
    %v4797 = vsub.s32 %v4796, 127
    %v4798 = vand.u32 2147483647, %v495
    %v4799 = vand.u32 %v4798, 8388607
    %v4800 = vor.u32 %v4799, 8388608
    %v4801 = vsub.s32 0, %v4800
    %v4802 = vadd.s32 %v4797, 1
    %vm4803 = vcmp.gt.s32.totalorder %v4802, 0
    %v4804 = vsel %vm4803, %v4802, 0
    %v4805 = vshrl.u32 %v4804, 5
    %v4806 = vand.u32 %v4804, 31
    %v4807 = vsub.s32 32, %v4806
    %v4808 = vshrl.u32 683565275, %v4807
    %v4809 = vshll.u32 683565275, %v4806
    %v4810 = vshrl.u32 2475754826, %v4807
    %v4811 = vor.u32 %v4809, %v4810
    %v4812 = vshll.u32 2475754826, %v4806
    %v4813 = vshrl.u32 2131351028, %v4807
    %v4814 = vor.u32 %v4812, %v4813
    %v4815 = vshll.u32 2131351028, %v4806
    %v4816 = vshrl.u32 2102212464, %v4807
    %v4817 = vor.u32 %v4815, %v4816
    %v4818 = vshll.u32 2102212464, %v4806
    %v4819 = vshrl.u32 920167782, %v4807
    %v4820 = vor.u32 %v4818, %v4819
    %v4821 = vshll.u32 920167782, %v4806
    %v4822 = vshrl.u32 1326507024, %v4807
    %v4823 = vor.u32 %v4821, %v4822
    %vm4824 = vcmp.lt.s32.totalorder %v4805, 1
    %vm4825 = vcmp.lt.s32.totalorder %v4805, 2
    %vm4826 = vcmp.lt.s32.totalorder %v4805, 3
    %vm4827 = vcmp.lt.s32.totalorder %v4805, 4
    %v4828 = vsel %vm4824, %v4808, %v4811
    %v4829 = vsel %vm4827, %v4817, 2102212464
    %v4830 = vsel %vm4826, %v4814, %v4829
    %v4831 = vsel %vm4825, %v4828, %v4830
    %v4832 = vsel %vm4824, %v4811, %v4814
    %v4833 = vsel %vm4827, %v4820, 920167782
    %v4834 = vsel %vm4826, %v4817, %v4833
    %v4835 = vsel %vm4825, %v4832, %v4834
    %v4836 = vsel %vm4824, %v4814, %v4817
    %v4837 = vsel %vm4827, %v4823, 1326507024
    %v4838 = vsel %vm4826, %v4820, %v4837
    %v4839 = vsel %vm4825, %v4836, %v4838
    %v4840 = vshll.u32 %v4800, 8
    %v4841 = vmul.u32.u64.compose %v4840, %v4839
    %v4842 = vextract.low.u32 %v4841
    %v4843 = vextract.high.u32 %v4841
    %v4844 = vmul.u32.u64.compose %v4840, %v4835
    %v4845 = vextract.low.u32 %v4844
    %v4846 = vextract.high.u32 %v4844
    %v4847 = vmul.u32 %v4840, %v4831
    %v4848 = vadd.s32 %v4843, %v4845
    %vm4849 = vc.u32 %v4843, %v4845
    %v4850 = vadd.s32 %v4846, 1
    %v4851 = vsel %vm4849, %v4850, %v4846
    %v4852 = vadd.s32 %v4847, %v4851
    %v4853 = vadd.s32 %v4852, 536870912
    %v4854 = vshrl.u32 %v4853, 30
    %v4855 = vshll.u32 %v4854, 30
    %v4856 = vsub.s32 %v4852, %v4855
    %vm4857 = vcmp.lt.s32.totalorder %v4856, 0
    %v4858 = vsub.s32 0, %v4856
    %v4859 = vsel %vm4857, %v4858, %v4856
    %v4860 = vclz %v4859
    %v4861 = vsub.s32 %v4860, 2
    %vm4862 = vcmp.gt.s32.totalorder 0, %v4861
    %v4863 = vsel %vm4862, 0, %v4861
    %v4864 = vsub.s32 32, %v4863
    %v4865 = vshll.u32 %v4856, %v4863
    %v4866 = vshrl.u32 %v4848, %v4864
    %v4867 = vor.u32 %v4865, %v4866
    %v4868 = vsub.s32 4294967266, %v4863
    %v4869 = vadd.s32 %v4868, 127
    %v4870 = vshll.u32 %v4869, 23
    %v4871 = vor.u32 4788187, %v4870
    %v4872 = vand.u32 2147483647, %v4871
    %v4874 = vcvt.s32.f32 %v4867
    %v4875 = vmul.f32 %v4874, %v4872
    %v4876 = vxor.u32 %v4875, 2147483648
    %v4877 = vsel %vm4794, %v4876, %v4875
    %v4878 = vsub.s32 4, %v4854
    %v4879 = vsel %vm4794, %v4878, %v4854
    %v4880 = vsel %vm4793, %v495, %v4877
    %v4881 = vsel %vm4793, 0, %v4879
    %v4882 = vcosq.f32.pop %v4880
    %v4883 = vsinq.f32.pop %v4880
    %vm4884 = vweird.f32 %v495
    %v4885 = vadd.s32 %v4881, 3
    %v4886 = vand.u32 %v4885, 3
    %vm4887 = vcmp.lt.s32.totalorder %v4886, 2
    %vm4888 = vcmp.eq.s32.totalorder %v4886, 0
    %v4889 = vxor.u32 %v4883, 2147483648
    %v4890 = vsel %vm4888, %v4882, %v4889
    %vm4891 = vcmp.eq.s32.totalorder %v4886, 2
    %v4892 = vxor.u32 %v4882, 2147483648
    %v4893 = vsel %vm4891, %v4892, %v4883
    %v4894 = vsel %vm4887, %v4890, %v4893
    %v4895 = vsel %vm4884, nan, %v4894
    %v4896 = vand.u32 2147483647, %v500
    %vm4897 = vcmp.le.f32.partialorder %v4896, 0.7853982
    %vm4898 = vcmp.lt.s32.totalorder %v500, 0
    %v4899 = vand.u32 %v500, 2139095040
    %v4900 = vshrl.u32 %v4899, 23
    %v4901 = vsub.s32 %v4900, 127
    %v4902 = vand.u32 2147483647, %v500
    %v4903 = vand.u32 %v4902, 8388607
    %v4904 = vor.u32 %v4903, 8388608
    %v4905 = vsub.s32 0, %v4904
    %v4906 = vadd.s32 %v4901, 1
    %vm4907 = vcmp.gt.s32.totalorder %v4906, 0
    %v4908 = vsel %vm4907, %v4906, 0
    %v4909 = vshrl.u32 %v4908, 5
    %v4910 = vand.u32 %v4908, 31
    %v4911 = vsub.s32 32, %v4910
    %v4912 = vshrl.u32 683565275, %v4911
    %v4913 = vshll.u32 683565275, %v4910
    %v4914 = vshrl.u32 2475754826, %v4911
    %v4915 = vor.u32 %v4913, %v4914
    %v4916 = vshll.u32 2475754826, %v4910
    %v4917 = vshrl.u32 2131351028, %v4911
    %v4918 = vor.u32 %v4916, %v4917
    %v4919 = vshll.u32 2131351028, %v4910
    %v4920 = vshrl.u32 2102212464, %v4911
    %v4921 = vor.u32 %v4919, %v4920
    %v4922 = vshll.u32 2102212464, %v4910
    %v4923 = vshrl.u32 920167782, %v4911
    %v4924 = vor.u32 %v4922, %v4923
    %v4925 = vshll.u32 920167782, %v4910
    %v4926 = vshrl.u32 1326507024, %v4911
    %v4927 = vor.u32 %v4925, %v4926
    %vm4928 = vcmp.lt.s32.totalorder %v4909, 1
    %vm4929 = vcmp.lt.s32.totalorder %v4909, 2
    %vm4930 = vcmp.lt.s32.totalorder %v4909, 3
    %vm4931 = vcmp.lt.s32.totalorder %v4909, 4
    %v4932 = vsel %vm4928, %v4912, %v4915
    %v4933 = vsel %vm4931, %v4921, 2102212464
    %v4934 = vsel %vm4930, %v4918, %v4933
    %v4935 = vsel %vm4929, %v4932, %v4934
    %v4936 = vsel %vm4928, %v4915, %v4918
    %v4937 = vsel %vm4931, %v4924, 920167782
    %v4938 = vsel %vm4930, %v4921, %v4937
    %v4939 = vsel %vm4929, %v4936, %v4938
    %v4940 = vsel %vm4928, %v4918, %v4921
    %v4941 = vsel %vm4931, %v4927, 1326507024
    %v4942 = vsel %vm4930, %v4924, %v4941
    %v4943 = vsel %vm4929, %v4940, %v4942
    %v4944 = vshll.u32 %v4904, 8
    %v4945 = vmul.u32.u64.compose %v4944, %v4943
    %v4946 = vextract.low.u32 %v4945
    %v4947 = vextract.high.u32 %v4945
    %v4948 = vmul.u32.u64.compose %v4944, %v4939
    %v4949 = vextract.low.u32 %v4948
    %v4950 = vextract.high.u32 %v4948
    %v4951 = vmul.u32 %v4944, %v4935
    %v4952 = vadd.s32 %v4947, %v4949
    %vm4953 = vc.u32 %v4947, %v4949
    %v4954 = vadd.s32 %v4950, 1
    %v4955 = vsel %vm4953, %v4954, %v4950
    %v4956 = vadd.s32 %v4951, %v4955
    %v4957 = vadd.s32 %v4956, 536870912
    %v4958 = vshrl.u32 %v4957, 30
    %v4959 = vshll.u32 %v4958, 30
    %v4960 = vsub.s32 %v4956, %v4959
    %vm4961 = vcmp.lt.s32.totalorder %v4960, 0
    %v4962 = vsub.s32 0, %v4960
    %v4963 = vsel %vm4961, %v4962, %v4960
    %v4964 = vclz %v4963
    %v4965 = vsub.s32 %v4964, 2
    %vm4966 = vcmp.gt.s32.totalorder 0, %v4965
    %v4967 = vsel %vm4966, 0, %v4965
    %v4968 = vsub.s32 32, %v4967
    %v4969 = vshll.u32 %v4960, %v4967
    %v4970 = vshrl.u32 %v4952, %v4968
    %v4971 = vor.u32 %v4969, %v4970
    %v4972 = vsub.s32 4294967266, %v4967
    %v4973 = vadd.s32 %v4972, 127
    %v4974 = vshll.u32 %v4973, 23
    %v4975 = vor.u32 4788187, %v4974
    %v4976 = vand.u32 2147483647, %v4975
    %v4978 = vcvt.s32.f32 %v4971
    %v4979 = vmul.f32 %v4978, %v4976
    %v4980 = vxor.u32 %v4979, 2147483648
    %v4981 = vsel %vm4898, %v4980, %v4979
    %v4982 = vsub.s32 4, %v4958
    %v4983 = vsel %vm4898, %v4982, %v4958
    %v4984 = vsel %vm4897, %v500, %v4981
    %v4985 = vsel %vm4897, 0, %v4983
    %v4986 = vcosq.f32.pop %v4984
    %v4987 = vsinq.f32.pop %v4984
    %vm4988 = vweird.f32 %v500
    %v4989 = vadd.s32 %v4985, 3
    %v4990 = vand.u32 %v4989, 3
    %vm4991 = vcmp.lt.s32.totalorder %v4990, 2
    %vm4992 = vcmp.eq.s32.totalorder %v4990, 0
    %v4993 = vxor.u32 %v4987, 2147483648
    %v4994 = vsel %vm4992, %v4986, %v4993
    %vm4995 = vcmp.eq.s32.totalorder %v4990, 2
    %v4996 = vxor.u32 %v4986, 2147483648
    %v4997 = vsel %vm4995, %v4996, %v4987
    %v4998 = vsel %vm4991, %v4994, %v4997
    %v4999 = vsel %vm4988, nan, %v4998
    %v5000 = vand.u32 2147483647, %v505
    %vm5001 = vcmp.le.f32.partialorder %v5000, 0.7853982
    %vm5002 = vcmp.lt.s32.totalorder %v505, 0
    %v5003 = vand.u32 %v505, 2139095040
    %v5004 = vshrl.u32 %v5003, 23
    %v5005 = vsub.s32 %v5004, 127
    %v5006 = vand.u32 2147483647, %v505
    %v5007 = vand.u32 %v5006, 8388607
    %v5008 = vor.u32 %v5007, 8388608
    %v5009 = vsub.s32 0, %v5008
    %v5010 = vadd.s32 %v5005, 1
    %vm5011 = vcmp.gt.s32.totalorder %v5010, 0
    %v5012 = vsel %vm5011, %v5010, 0
    %v5013 = vshrl.u32 %v5012, 5
    %v5014 = vand.u32 %v5012, 31
    %v5015 = vsub.s32 32, %v5014
    %v5016 = vshrl.u32 683565275, %v5015
    %v5017 = vshll.u32 683565275, %v5014
    %v5018 = vshrl.u32 2475754826, %v5015
    %v5019 = vor.u32 %v5017, %v5018
    %v5020 = vshll.u32 2475754826, %v5014
    %v5021 = vshrl.u32 2131351028, %v5015
    %v5022 = vor.u32 %v5020, %v5021
    %v5023 = vshll.u32 2131351028, %v5014
    %v5024 = vshrl.u32 2102212464, %v5015
    %v5025 = vor.u32 %v5023, %v5024
    %v5026 = vshll.u32 2102212464, %v5014
    %v5027 = vshrl.u32 920167782, %v5015
    %v5028 = vor.u32 %v5026, %v5027
    %v5029 = vshll.u32 920167782, %v5014
    %v5030 = vshrl.u32 1326507024, %v5015
    %v5031 = vor.u32 %v5029, %v5030
    %vm5032 = vcmp.lt.s32.totalorder %v5013, 1
    %vm5033 = vcmp.lt.s32.totalorder %v5013, 2
    %vm5034 = vcmp.lt.s32.totalorder %v5013, 3
    %vm5035 = vcmp.lt.s32.totalorder %v5013, 4
    %v5036 = vsel %vm5032, %v5016, %v5019
    %v5037 = vsel %vm5035, %v5025, 2102212464
    %v5038 = vsel %vm5034, %v5022, %v5037
    %v5039 = vsel %vm5033, %v5036, %v5038
    %v5040 = vsel %vm5032, %v5019, %v5022
    %v5041 = vsel %vm5035, %v5028, 920167782
    %v5042 = vsel %vm5034, %v5025, %v5041
    %v5043 = vsel %vm5033, %v5040, %v5042
    %v5044 = vsel %vm5032, %v5022, %v5025
    %v5045 = vsel %vm5035, %v5031, 1326507024
    %v5046 = vsel %vm5034, %v5028, %v5045
    %v5047 = vsel %vm5033, %v5044, %v5046
    %v5048 = vshll.u32 %v5008, 8
    %v5049 = vmul.u32.u64.compose %v5048, %v5047
    %v5050 = vextract.low.u32 %v5049
    %v5051 = vextract.high.u32 %v5049
    %v5052 = vmul.u32.u64.compose %v5048, %v5043
    %v5053 = vextract.low.u32 %v5052
    %v5054 = vextract.high.u32 %v5052
    %v5055 = vmul.u32 %v5048, %v5039
    %v5056 = vadd.s32 %v5051, %v5053
    %vm5057 = vc.u32 %v5051, %v5053
    %v5058 = vadd.s32 %v5054, 1
    %v5059 = vsel %vm5057, %v5058, %v5054
    %v5060 = vadd.s32 %v5055, %v5059
    %v5061 = vadd.s32 %v5060, 536870912
    %v5062 = vshrl.u32 %v5061, 30
    %v5063 = vshll.u32 %v5062, 30
    %v5064 = vsub.s32 %v5060, %v5063
    %vm5065 = vcmp.lt.s32.totalorder %v5064, 0
    %v5066 = vsub.s32 0, %v5064
    %v5067 = vsel %vm5065, %v5066, %v5064
    %v5068 = vclz %v5067
    %v5069 = vsub.s32 %v5068, 2
    %vm5070 = vcmp.gt.s32.totalorder 0, %v5069
    %v5071 = vsel %vm5070, 0, %v5069
    %v5072 = vsub.s32 32, %v5071
    %v5073 = vshll.u32 %v5064, %v5071
    %v5074 = vshrl.u32 %v5056, %v5072
    %v5075 = vor.u32 %v5073, %v5074
    %v5076 = vsub.s32 4294967266, %v5071
    %v5077 = vadd.s32 %v5076, 127
    %v5078 = vshll.u32 %v5077, 23
    %v5079 = vor.u32 4788187, %v5078
    %v5080 = vand.u32 2147483647, %v5079
    %v5082 = vcvt.s32.f32 %v5075
    %v5083 = vmul.f32 %v5082, %v5080
    %v5084 = vxor.u32 %v5083, 2147483648
    %v5085 = vsel %vm5002, %v5084, %v5083
    %v5086 = vsub.s32 4, %v5062
    %v5087 = vsel %vm5002, %v5086, %v5062
    %v5088 = vsel %vm5001, %v505, %v5085
    %v5089 = vsel %vm5001, 0, %v5087
    %v5090 = vcosq.f32.pop %v5088
    %v5091 = vsinq.f32.pop %v5088
    %vm5092 = vweird.f32 %v505
    %v5093 = vadd.s32 %v5089, 3
    %v5094 = vand.u32 %v5093, 3
    %vm5095 = vcmp.lt.s32.totalorder %v5094, 2
    %vm5096 = vcmp.eq.s32.totalorder %v5094, 0
    %v5097 = vxor.u32 %v5091, 2147483648
    %v5098 = vsel %vm5096, %v5090, %v5097
    %vm5099 = vcmp.eq.s32.totalorder %v5094, 2
    %v5100 = vxor.u32 %v5090, 2147483648
    %v5101 = vsel %vm5099, %v5100, %v5091
    %v5102 = vsel %vm5095, %v5098, %v5101
    %v5103 = vsel %vm5092, nan, %v5102
    %v5104 = vand.u32 2147483647, %v510
    %vm5105 = vcmp.le.f32.partialorder %v5104, 0.7853982
    %vm5106 = vcmp.lt.s32.totalorder %v510, 0
    %v5107 = vand.u32 %v510, 2139095040
    %v5108 = vshrl.u32 %v5107, 23
    %v5109 = vsub.s32 %v5108, 127
    %v5110 = vand.u32 2147483647, %v510
    %v5111 = vand.u32 %v5110, 8388607
    %v5112 = vor.u32 %v5111, 8388608
    %v5113 = vsub.s32 0, %v5112
    %v5114 = vadd.s32 %v5109, 1
    %vm5115 = vcmp.gt.s32.totalorder %v5114, 0
    %v5116 = vsel %vm5115, %v5114, 0
    %v5117 = vshrl.u32 %v5116, 5
    %v5118 = vand.u32 %v5116, 31
    %v5119 = vsub.s32 32, %v5118
    %v5120 = vshrl.u32 683565275, %v5119
    %v5121 = vshll.u32 683565275, %v5118
    %v5122 = vshrl.u32 2475754826, %v5119
    %v5123 = vor.u32 %v5121, %v5122
    %v5124 = vshll.u32 2475754826, %v5118
    %v5125 = vshrl.u32 2131351028, %v5119
    %v5126 = vor.u32 %v5124, %v5125
    %v5127 = vshll.u32 2131351028, %v5118
    %v5128 = vshrl.u32 2102212464, %v5119
    %v5129 = vor.u32 %v5127, %v5128
    %v5130 = vshll.u32 2102212464, %v5118
    %v5131 = vshrl.u32 920167782, %v5119
    %v5132 = vor.u32 %v5130, %v5131
    %v5133 = vshll.u32 920167782, %v5118
    %v5134 = vshrl.u32 1326507024, %v5119
    %v5135 = vor.u32 %v5133, %v5134
    %vm5136 = vcmp.lt.s32.totalorder %v5117, 1
    %vm5137 = vcmp.lt.s32.totalorder %v5117, 2
    %vm5138 = vcmp.lt.s32.totalorder %v5117, 3
    %vm5139 = vcmp.lt.s32.totalorder %v5117, 4
    %v5140 = vsel %vm5136, %v5120, %v5123
    %v5141 = vsel %vm5139, %v5129, 2102212464
    %v5142 = vsel %vm5138, %v5126, %v5141
    %v5143 = vsel %vm5137, %v5140, %v5142
    %v5144 = vsel %vm5136, %v5123, %v5126
    %v5145 = vsel %vm5139, %v5132, 920167782
    %v5146 = vsel %vm5138, %v5129, %v5145
    %v5147 = vsel %vm5137, %v5144, %v5146
    %v5148 = vsel %vm5136, %v5126, %v5129
    %v5149 = vsel %vm5139, %v5135, 1326507024
    %v5150 = vsel %vm5138, %v5132, %v5149
    %v5151 = vsel %vm5137, %v5148, %v5150
    %v5152 = vshll.u32 %v5112, 8
    %v5153 = vmul.u32.u64.compose %v5152, %v5151
    %v5154 = vextract.low.u32 %v5153
    %v5155 = vextract.high.u32 %v5153
    %v5156 = vmul.u32.u64.compose %v5152, %v5147
    %v5157 = vextract.low.u32 %v5156
    %v5158 = vextract.high.u32 %v5156
    %v5159 = vmul.u32 %v5152, %v5143
    %v5160 = vadd.s32 %v5155, %v5157
    %vm5161 = vc.u32 %v5155, %v5157
    %v5162 = vadd.s32 %v5158, 1
    %v5163 = vsel %vm5161, %v5162, %v5158
    %v5164 = vadd.s32 %v5159, %v5163
    %v5165 = vadd.s32 %v5164, 536870912
    %v5166 = vshrl.u32 %v5165, 30
    %v5167 = vshll.u32 %v5166, 30
    %v5168 = vsub.s32 %v5164, %v5167
    %vm5169 = vcmp.lt.s32.totalorder %v5168, 0
    %v5170 = vsub.s32 0, %v5168
    %v5171 = vsel %vm5169, %v5170, %v5168
    %v5172 = vclz %v5171
    %v5173 = vsub.s32 %v5172, 2
    %vm5174 = vcmp.gt.s32.totalorder 0, %v5173
    %v5175 = vsel %vm5174, 0, %v5173
    %v5176 = vsub.s32 32, %v5175
    %v5177 = vshll.u32 %v5168, %v5175
    %v5178 = vshrl.u32 %v5160, %v5176
    %v5179 = vor.u32 %v5177, %v5178
    %v5180 = vsub.s32 4294967266, %v5175
    %v5181 = vadd.s32 %v5180, 127
    %v5182 = vshll.u32 %v5181, 23
    %v5183 = vor.u32 4788187, %v5182
    %v5184 = vand.u32 2147483647, %v5183
    %v5186 = vcvt.s32.f32 %v5179
    %v5187 = vmul.f32 %v5186, %v5184
    %v5188 = vxor.u32 %v5187, 2147483648
    %v5189 = vsel %vm5106, %v5188, %v5187
    %v5190 = vsub.s32 4, %v5166
    %v5191 = vsel %vm5106, %v5190, %v5166
    %v5192 = vsel %vm5105, %v510, %v5189
    %v5193 = vsel %vm5105, 0, %v5191
    %v5194 = vcosq.f32.pop %v5192
    %v5195 = vsinq.f32.pop %v5192
    %vm5196 = vweird.f32 %v510
    %v5197 = vadd.s32 %v5193, 3
    %v5198 = vand.u32 %v5197, 3
    %vm5199 = vcmp.lt.s32.totalorder %v5198, 2
    %vm5200 = vcmp.eq.s32.totalorder %v5198, 0
    %v5201 = vxor.u32 %v5195, 2147483648
    %v5202 = vsel %vm5200, %v5194, %v5201
    %vm5203 = vcmp.eq.s32.totalorder %v5198, 2
    %v5204 = vxor.u32 %v5194, 2147483648
    %v5205 = vsel %vm5203, %v5204, %v5195
    %v5206 = vsel %vm5199, %v5202, %v5205
    %v5207 = vsel %vm5196, nan, %v5206
    %v5208 = vand.u32 2147483647, %v515
    %vm5209 = vcmp.le.f32.partialorder %v5208, 0.7853982
    %vm5210 = vcmp.lt.s32.totalorder %v515, 0
    %v5211 = vand.u32 %v515, 2139095040
    %v5212 = vshrl.u32 %v5211, 23
    %v5213 = vsub.s32 %v5212, 127
    %v5214 = vand.u32 2147483647, %v515
    %v5215 = vand.u32 %v5214, 8388607
    %v5216 = vor.u32 %v5215, 8388608
    %v5217 = vsub.s32 0, %v5216
    %v5218 = vadd.s32 %v5213, 1
    %vm5219 = vcmp.gt.s32.totalorder %v5218, 0
    %v5220 = vsel %vm5219, %v5218, 0
    %v5221 = vshrl.u32 %v5220, 5
    %v5222 = vand.u32 %v5220, 31
    %v5223 = vsub.s32 32, %v5222
    %v5224 = vshrl.u32 683565275, %v5223
    %v5225 = vshll.u32 683565275, %v5222
    %v5226 = vshrl.u32 2475754826, %v5223
    %v5227 = vor.u32 %v5225, %v5226
    %v5228 = vshll.u32 2475754826, %v5222
    %v5229 = vshrl.u32 2131351028, %v5223
    %v5230 = vor.u32 %v5228, %v5229
    %v5231 = vshll.u32 2131351028, %v5222
    %v5232 = vshrl.u32 2102212464, %v5223
    %v5233 = vor.u32 %v5231, %v5232
    %v5234 = vshll.u32 2102212464, %v5222
    %v5235 = vshrl.u32 920167782, %v5223
    %v5236 = vor.u32 %v5234, %v5235
    %v5237 = vshll.u32 920167782, %v5222
    %v5238 = vshrl.u32 1326507024, %v5223
    %v5239 = vor.u32 %v5237, %v5238
    %vm5240 = vcmp.lt.s32.totalorder %v5221, 1
    %vm5241 = vcmp.lt.s32.totalorder %v5221, 2
    %vm5242 = vcmp.lt.s32.totalorder %v5221, 3
    %vm5243 = vcmp.lt.s32.totalorder %v5221, 4
    %v5244 = vsel %vm5240, %v5224, %v5227
    %v5245 = vsel %vm5243, %v5233, 2102212464
    %v5246 = vsel %vm5242, %v5230, %v5245
    %v5247 = vsel %vm5241, %v5244, %v5246
    %v5248 = vsel %vm5240, %v5227, %v5230
    %v5249 = vsel %vm5243, %v5236, 920167782
    %v5250 = vsel %vm5242, %v5233, %v5249
    %v5251 = vsel %vm5241, %v5248, %v5250
    %v5252 = vsel %vm5240, %v5230, %v5233
    %v5253 = vsel %vm5243, %v5239, 1326507024
    %v5254 = vsel %vm5242, %v5236, %v5253
    %v5255 = vsel %vm5241, %v5252, %v5254
    %v5256 = vshll.u32 %v5216, 8
    %v5257 = vmul.u32.u64.compose %v5256, %v5255
    %v5258 = vextract.low.u32 %v5257
    %v5259 = vextract.high.u32 %v5257
    %v5260 = vmul.u32.u64.compose %v5256, %v5251
    %v5261 = vextract.low.u32 %v5260
    %v5262 = vextract.high.u32 %v5260
    %v5263 = vmul.u32 %v5256, %v5247
    %v5264 = vadd.s32 %v5259, %v5261
    %vm5265 = vc.u32 %v5259, %v5261
    %v5266 = vadd.s32 %v5262, 1
    %v5267 = vsel %vm5265, %v5266, %v5262
    %v5268 = vadd.s32 %v5263, %v5267
    %v5269 = vadd.s32 %v5268, 536870912
    %v5270 = vshrl.u32 %v5269, 30
    %v5271 = vshll.u32 %v5270, 30
    %v5272 = vsub.s32 %v5268, %v5271
    %vm5273 = vcmp.lt.s32.totalorder %v5272, 0
    %v5274 = vsub.s32 0, %v5272
    %v5275 = vsel %vm5273, %v5274, %v5272
    %v5276 = vclz %v5275
    %v5277 = vsub.s32 %v5276, 2
    %vm5278 = vcmp.gt.s32.totalorder 0, %v5277
    %v5279 = vsel %vm5278, 0, %v5277
    %v5280 = vsub.s32 32, %v5279
    %v5281 = vshll.u32 %v5272, %v5279
    %v5282 = vshrl.u32 %v5264, %v5280
    %v5283 = vor.u32 %v5281, %v5282
    %v5284 = vsub.s32 4294967266, %v5279
    %v5285 = vadd.s32 %v5284, 127
    %v5286 = vshll.u32 %v5285, 23
    %v5287 = vor.u32 4788187, %v5286
    %v5288 = vand.u32 2147483647, %v5287
    %v5290 = vcvt.s32.f32 %v5283
    %v5291 = vmul.f32 %v5290, %v5288
    %v5292 = vxor.u32 %v5291, 2147483648
    %v5293 = vsel %vm5210, %v5292, %v5291
    %v5294 = vsub.s32 4, %v5270
    %v5295 = vsel %vm5210, %v5294, %v5270
    %v5296 = vsel %vm5209, %v515, %v5293
    %v5297 = vsel %vm5209, 0, %v5295
    %v5298 = vcosq.f32.pop %v5296
    %v5299 = vsinq.f32.pop %v5296
    %vm5300 = vweird.f32 %v515
    %v5301 = vadd.s32 %v5297, 3
    %v5302 = vand.u32 %v5301, 3
    %vm5303 = vcmp.lt.s32.totalorder %v5302, 2
    %vm5304 = vcmp.eq.s32.totalorder %v5302, 0
    %v5305 = vxor.u32 %v5299, 2147483648
    %v5306 = vsel %vm5304, %v5298, %v5305
    %vm5307 = vcmp.eq.s32.totalorder %v5302, 2
    %v5308 = vxor.u32 %v5298, 2147483648
    %v5309 = vsel %vm5307, %v5308, %v5299
    %v5310 = vsel %vm5303, %v5306, %v5309
    %v5311 = vsel %vm5300, nan, %v5310
    %v5312 = vand.u32 2147483647, %v520
    %vm5313 = vcmp.le.f32.partialorder %v5312, 0.7853982
    %vm5314 = vcmp.lt.s32.totalorder %v520, 0
    %v5315 = vand.u32 %v520, 2139095040
    %v5316 = vshrl.u32 %v5315, 23
    %v5317 = vsub.s32 %v5316, 127
    %v5318 = vand.u32 2147483647, %v520
    %v5319 = vand.u32 %v5318, 8388607
    %v5320 = vor.u32 %v5319, 8388608
    %v5321 = vsub.s32 0, %v5320
    %v5322 = vadd.s32 %v5317, 1
    %vm5323 = vcmp.gt.s32.totalorder %v5322, 0
    %v5324 = vsel %vm5323, %v5322, 0
    %v5325 = vshrl.u32 %v5324, 5
    %v5326 = vand.u32 %v5324, 31
    %v5327 = vsub.s32 32, %v5326
    %v5328 = vshrl.u32 683565275, %v5327
    %v5329 = vshll.u32 683565275, %v5326
    %v5330 = vshrl.u32 2475754826, %v5327
    %v5331 = vor.u32 %v5329, %v5330
    %v5332 = vshll.u32 2475754826, %v5326
    %v5333 = vshrl.u32 2131351028, %v5327
    %v5334 = vor.u32 %v5332, %v5333
    %v5335 = vshll.u32 2131351028, %v5326
    %v5336 = vshrl.u32 2102212464, %v5327
    %v5337 = vor.u32 %v5335, %v5336
    %v5338 = vshll.u32 2102212464, %v5326
    %v5339 = vshrl.u32 920167782, %v5327
    %v5340 = vor.u32 %v5338, %v5339
    %v5341 = vshll.u32 920167782, %v5326
    %v5342 = vshrl.u32 1326507024, %v5327
    %v5343 = vor.u32 %v5341, %v5342
    %vm5344 = vcmp.lt.s32.totalorder %v5325, 1
    %vm5345 = vcmp.lt.s32.totalorder %v5325, 2
    %vm5346 = vcmp.lt.s32.totalorder %v5325, 3
    %vm5347 = vcmp.lt.s32.totalorder %v5325, 4
    %v5348 = vsel %vm5344, %v5328, %v5331
    %v5349 = vsel %vm5347, %v5337, 2102212464
    %v5350 = vsel %vm5346, %v5334, %v5349
    %v5351 = vsel %vm5345, %v5348, %v5350
    %v5352 = vsel %vm5344, %v5331, %v5334
    %v5353 = vsel %vm5347, %v5340, 920167782
    %v5354 = vsel %vm5346, %v5337, %v5353
    %v5355 = vsel %vm5345, %v5352, %v5354
    %v5356 = vsel %vm5344, %v5334, %v5337
    %v5357 = vsel %vm5347, %v5343, 1326507024
    %v5358 = vsel %vm5346, %v5340, %v5357
    %v5359 = vsel %vm5345, %v5356, %v5358
    %v5360 = vshll.u32 %v5320, 8
    %v5361 = vmul.u32.u64.compose %v5360, %v5359
    %v5362 = vextract.low.u32 %v5361
    %v5363 = vextract.high.u32 %v5361
    %v5364 = vmul.u32.u64.compose %v5360, %v5355
    %v5365 = vextract.low.u32 %v5364
    %v5366 = vextract.high.u32 %v5364
    %v5367 = vmul.u32 %v5360, %v5351
    %v5368 = vadd.s32 %v5363, %v5365
    %vm5369 = vc.u32 %v5363, %v5365
    %v5370 = vadd.s32 %v5366, 1
    %v5371 = vsel %vm5369, %v5370, %v5366
    %v5372 = vadd.s32 %v5367, %v5371
    %v5373 = vadd.s32 %v5372, 536870912
    %v5374 = vshrl.u32 %v5373, 30
    %v5375 = vshll.u32 %v5374, 30
    %v5376 = vsub.s32 %v5372, %v5375
    %vm5377 = vcmp.lt.s32.totalorder %v5376, 0
    %v5378 = vsub.s32 0, %v5376
    %v5379 = vsel %vm5377, %v5378, %v5376
    %v5380 = vclz %v5379
    %v5381 = vsub.s32 %v5380, 2
    %vm5382 = vcmp.gt.s32.totalorder 0, %v5381
    %v5383 = vsel %vm5382, 0, %v5381
    %v5384 = vsub.s32 32, %v5383
    %v5385 = vshll.u32 %v5376, %v5383
    %v5386 = vshrl.u32 %v5368, %v5384
    %v5387 = vor.u32 %v5385, %v5386
    %v5388 = vsub.s32 4294967266, %v5383
    %v5389 = vadd.s32 %v5388, 127
    %v5390 = vshll.u32 %v5389, 23
    %v5391 = vor.u32 4788187, %v5390
    %v5392 = vand.u32 2147483647, %v5391
    %v5394 = vcvt.s32.f32 %v5387
    %v5395 = vmul.f32 %v5394, %v5392
    %v5396 = vxor.u32 %v5395, 2147483648
    %v5397 = vsel %vm5314, %v5396, %v5395
    %v5398 = vsub.s32 4, %v5374
    %v5399 = vsel %vm5314, %v5398, %v5374
    %v5400 = vsel %vm5313, %v520, %v5397
    %v5401 = vsel %vm5313, 0, %v5399
    %v5402 = vcosq.f32.pop %v5400
    %v5403 = vsinq.f32.pop %v5400
    %vm5404 = vweird.f32 %v520
    %v5405 = vadd.s32 %v5401, 3
    %v5406 = vand.u32 %v5405, 3
    %vm5407 = vcmp.lt.s32.totalorder %v5406, 2
    %vm5408 = vcmp.eq.s32.totalorder %v5406, 0
    %v5409 = vxor.u32 %v5403, 2147483648
    %v5410 = vsel %vm5408, %v5402, %v5409
    %vm5411 = vcmp.eq.s32.totalorder %v5406, 2
    %v5412 = vxor.u32 %v5402, 2147483648
    %v5413 = vsel %vm5411, %v5412, %v5403
    %v5414 = vsel %vm5407, %v5410, %v5413
    %v5415 = vsel %vm5404, nan, %v5414
    %v5416 = vand.u32 2147483647, %v525
    %vm5417 = vcmp.le.f32.partialorder %v5416, 0.7853982
    %vm5418 = vcmp.lt.s32.totalorder %v525, 0
    %v5419 = vand.u32 %v525, 2139095040
    %v5420 = vshrl.u32 %v5419, 23
    %v5421 = vsub.s32 %v5420, 127
    %v5422 = vand.u32 2147483647, %v525
    %v5423 = vand.u32 %v5422, 8388607
    %v5424 = vor.u32 %v5423, 8388608
    %v5425 = vsub.s32 0, %v5424
    %v5426 = vadd.s32 %v5421, 1
    %vm5427 = vcmp.gt.s32.totalorder %v5426, 0
    %v5428 = vsel %vm5427, %v5426, 0
    %v5429 = vshrl.u32 %v5428, 5
    %v5430 = vand.u32 %v5428, 31
    %v5431 = vsub.s32 32, %v5430
    %v5432 = vshrl.u32 683565275, %v5431
    %v5433 = vshll.u32 683565275, %v5430
    %v5434 = vshrl.u32 2475754826, %v5431
    %v5435 = vor.u32 %v5433, %v5434
    %v5436 = vshll.u32 2475754826, %v5430
    %v5437 = vshrl.u32 2131351028, %v5431
    %v5438 = vor.u32 %v5436, %v5437
    %v5439 = vshll.u32 2131351028, %v5430
    %v5440 = vshrl.u32 2102212464, %v5431
    %v5441 = vor.u32 %v5439, %v5440
    %v5442 = vshll.u32 2102212464, %v5430
    %v5443 = vshrl.u32 920167782, %v5431
    %v5444 = vor.u32 %v5442, %v5443
    %v5445 = vshll.u32 920167782, %v5430
    %v5446 = vshrl.u32 1326507024, %v5431
    %v5447 = vor.u32 %v5445, %v5446
    %vm5448 = vcmp.lt.s32.totalorder %v5429, 1
    %vm5449 = vcmp.lt.s32.totalorder %v5429, 2
    %vm5450 = vcmp.lt.s32.totalorder %v5429, 3
    %vm5451 = vcmp.lt.s32.totalorder %v5429, 4
    %v5452 = vsel %vm5448, %v5432, %v5435
    %v5453 = vsel %vm5451, %v5441, 2102212464
    %v5454 = vsel %vm5450, %v5438, %v5453
    %v5455 = vsel %vm5449, %v5452, %v5454
    %v5456 = vsel %vm5448, %v5435, %v5438
    %v5457 = vsel %vm5451, %v5444, 920167782
    %v5458 = vsel %vm5450, %v5441, %v5457
    %v5459 = vsel %vm5449, %v5456, %v5458
    %v5460 = vsel %vm5448, %v5438, %v5441
    %v5461 = vsel %vm5451, %v5447, 1326507024
    %v5462 = vsel %vm5450, %v5444, %v5461
    %v5463 = vsel %vm5449, %v5460, %v5462
    %v5464 = vshll.u32 %v5424, 8
    %v5465 = vmul.u32.u64.compose %v5464, %v5463
    %v5466 = vextract.low.u32 %v5465
    %v5467 = vextract.high.u32 %v5465
    %v5468 = vmul.u32.u64.compose %v5464, %v5459
    %v5469 = vextract.low.u32 %v5468
    %v5470 = vextract.high.u32 %v5468
    %v5471 = vmul.u32 %v5464, %v5455
    %v5472 = vadd.s32 %v5467, %v5469
    %vm5473 = vc.u32 %v5467, %v5469
    %v5474 = vadd.s32 %v5470, 1
    %v5475 = vsel %vm5473, %v5474, %v5470
    %v5476 = vadd.s32 %v5471, %v5475
    %v5477 = vadd.s32 %v5476, 536870912
    %v5478 = vshrl.u32 %v5477, 30
    %v5479 = vshll.u32 %v5478, 30
    %v5480 = vsub.s32 %v5476, %v5479
    %vm5481 = vcmp.lt.s32.totalorder %v5480, 0
    %v5482 = vsub.s32 0, %v5480
    %v5483 = vsel %vm5481, %v5482, %v5480
    %v5484 = vclz %v5483
    %v5485 = vsub.s32 %v5484, 2
    %vm5486 = vcmp.gt.s32.totalorder 0, %v5485
    %v5487 = vsel %vm5486, 0, %v5485
    %v5488 = vsub.s32 32, %v5487
    %v5489 = vshll.u32 %v5480, %v5487
    %v5490 = vshrl.u32 %v5472, %v5488
    %v5491 = vor.u32 %v5489, %v5490
    %v5492 = vsub.s32 4294967266, %v5487
    %v5493 = vadd.s32 %v5492, 127
    %v5494 = vshll.u32 %v5493, 23
    %v5495 = vor.u32 4788187, %v5494
    %v5496 = vand.u32 2147483647, %v5495
    %v5498 = vcvt.s32.f32 %v5491
    %v5499 = vmul.f32 %v5498, %v5496
    %v5500 = vxor.u32 %v5499, 2147483648
    %v5501 = vsel %vm5418, %v5500, %v5499
    %v5502 = vsub.s32 4, %v5478
    %v5503 = vsel %vm5418, %v5502, %v5478
    %v5504 = vsel %vm5417, %v525, %v5501
    %v5505 = vsel %vm5417, 0, %v5503
    %v5506 = vcosq.f32.pop %v5504
    %v5507 = vsinq.f32.pop %v5504
    %vm5508 = vweird.f32 %v525
    %v5509 = vadd.s32 %v5505, 3
    %v5510 = vand.u32 %v5509, 3
    %vm5511 = vcmp.lt.s32.totalorder %v5510, 2
    %vm5512 = vcmp.eq.s32.totalorder %v5510, 0
    %v5513 = vxor.u32 %v5507, 2147483648
    %v5514 = vsel %vm5512, %v5506, %v5513
    %vm5515 = vcmp.eq.s32.totalorder %v5510, 2
    %v5516 = vxor.u32 %v5506, 2147483648
    %v5517 = vsel %vm5515, %v5516, %v5507
    %v5518 = vsel %vm5511, %v5514, %v5517
    %v5519 = vsel %vm5508, nan, %v5518
    %5520 = vst [vmem:[#allocation2] sm:$0xff] %v631
    %5521 = vst [vmem:[#allocation2 + $0x8] sm:$0xff] %v735
    %5522 = vst [vmem:[#allocation2 + $0x10] sm:$0xff] %v839
    %5523 = vst [vmem:[#allocation2 + $0x18] sm:$0xff] %v943
    %5524 = vst [vmem:[#allocation2 + $0x20] sm:$0xff] %v1047
    %5525 = vst [vmem:[#allocation2 + $0x28] sm:$0xff] %v1151
    %5526 = vst [vmem:[#allocation2 + $0x30] sm:$0xff] %v1255
    %5527 = vst [vmem:[#allocation2 + $0x38] sm:$0xff] %v1359
    %5528 = vst [vmem:[#allocation2 + $0x40] sm:$0xff] %v1463
    %5529 = vst [vmem:[#allocation2 + $0x48] sm:$0xff] %v1567
    %5530 = vst [vmem:[#allocation2 + $0x50] sm:$0xff] %v1671
    %5531 = vst [vmem:[#allocation2 + $0x58] sm:$0xff] %v1775
    %5532 = vst [vmem:[#allocation2 + $0x60] sm:$0xff] %v1879
    %5533 = vst [vmem:[#allocation2 + $0x68] sm:$0xff] %v1983
    %5534 = vst [vmem:[#allocation2 + $0x70] sm:$0xff] %v2087
    %5535 = vst [vmem:[#allocation2 + $0x78] sm:$0xff] %v2191
    %5536 = vst [vmem:[#allocation2 + $0x80] sm:$0xff] %v2295
    %5537 = vst [vmem:[#allocation2 + $0x88] sm:$0xff] %v2399
    %5538 = vst [vmem:[#allocation2 + $0x90] sm:$0xff] %v2503
    %5539 = vst [vmem:[#allocation2 + $0x98] sm:$0xff] %v2607
    %5540 = vst [vmem:[#allocation2 + $0xa0] sm:$0xff] %v2711
    %5541 = vst [vmem:[#allocation2 + $0xa8] sm:$0xff] %v2815
    %5542 = vst [vmem:[#allocation2 + $0xb0] sm:$0xff] %v2919
    %5543 = vst [vmem:[#allocation2 + $0xb8] sm:$0xff] %v3023
    %5544 = vst [vmem:[#allocation2 + $0xc0] sm:$0xff] %v3127
    %5545 = vst [vmem:[#allocation2 + $0xc8] sm:$0xff] %v3231
    %5546 = vst [vmem:[#allocation2 + $0xd0] sm:$0xff] %v3335
    %5547 = vst [vmem:[#allocation2 + $0xd8] sm:$0xff] %v3439
    %5548 = vst [vmem:[#allocation2 + $0xe0] sm:$0xff] %v3543
    %5549 = vst [vmem:[#allocation2 + $0xe8] sm:$0xff] %v3647
    %5550 = vst [vmem:[#allocation2 + $0xf0] sm:$0xff] %v3751
    %5551 = vst [vmem:[#allocation2 + $0xf8] sm:$0xff] %v3855
    %5552 = vst [vmem:[#allocation2 + $0x100] sm:$0xff] %v3959
    %5553 = vst [vmem:[#allocation2 + $0x108] sm:$0xff] %v4063
    %5554 = vst [vmem:[#allocation2 + $0x110] sm:$0xff] %v4167
    %5555 = vst [vmem:[#allocation2 + $0x118] sm:$0xff] %v4271
    %5556 = vst [vmem:[#allocation2 + $0x120] sm:$0xff] %v4375
    %5557 = vst [vmem:[#allocation2 + $0x128] sm:$0xff] %v4479
    %5558 = vst [vmem:[#allocation2 + $0x130] sm:$0xff] %v4583
    %5559 = vst [vmem:[#allocation2 + $0x138] sm:$0xff] %v4687
    %5560 = vst [vmem:[#allocation2 + $0x140] sm:$0xff] %v4791
    %5561 = vst [vmem:[#allocation2 + $0x148] sm:$0xff] %v4895
    %5562 = vst [vmem:[#allocation2 + $0x150] sm:$0xff] %v4999
    %5563 = vst [vmem:[#allocation2 + $0x158] sm:$0xff] %v5103
    %5564 = vst [vmem:[#allocation2 + $0x160] sm:$0xff] %v5207
    %5565 = vst [vmem:[#allocation2 + $0x168] sm:$0xff] %v5311
    %5566 = vst [vmem:[#allocation2 + $0x170] sm:$0xff] %v5415
    %5567 = vst [vmem:[#allocation2 + $0x178] sm:$0xff] %v5519
    // Predicated region
    $region14: #{tpu_custom_call.1} parent=1 // pred_check
      _
    $region15: #{tpu_custom_call.1} parent=1 // pred_check_branch
      %5569 = sbr.rel (0) target = $region17
    $region16: #{tpu_custom_call.1} parent=1 // pred_region
      %s5571 = ssub.s32 6144, 4864
      %5572 = vsyncadd [#allocation3], %s5571
      %s5573 = sshll.u32 [#allocation2], 4
      %s5574 = int_to_ptr.vmem [resolvable:$true] %s5573
      %5579 = dma.vmem_to_hbm [thread:$0]  %s5574, 4864, %s3, [#allocation3], 128, 128, 8
    $region17: #{tpu_custom_call.1} parent=1 // pred_fallthru
      _
    // Predicated region
    $region18: #{tpu_custom_call.1} parent=1 // pred_check
      _
    $region19: #{tpu_custom_call.1} parent=1 // pred_check_branch
      %5581 = sbr.rel (0) target = $region21
    $region20: #{tpu_custom_call.1} parent=1 // pred_region
      %5582 = dma.done [#allocation3], 6144
    $region21: #{tpu_custom_call.1} parent=1 // pred_fallthru
      _
    %5583 = vsyncpa [#allocation3], 1

</llo_original>
